<compile_context>
chip_gen: v7x
topology: tpu7x:2x2x1
jax: 0.10.0
libtpu: 0.0.40
codegen_flags: <defaults>
</compile_context>

<pallas_src>
import math

import jax
import jax.numpy as jnp
from jax.experimental import pallas as pl
from jax.experimental.pallas import tpu as pltpu

# ---------------- small synthetic BERT config ----------------
VOCAB = 100
TYPE_VOCAB = 2
HIDDEN = 32
N_HEADS = 2
HEAD_DIM = HIDDEN // N_HEADS
INTERMEDIATE = 64
N_LAYERS = 2
MAX_POS = 32
NUM_LABELS = 15
LN_EPS = 1e-12
B = 2
S = 8
NEG_INF = -1e9


# ---------------- fully fused kernel: embeddings -> encoder -> head -> CRF ----------------
def _fused_kernel(ids_ref, tt_ref, mask_ref,
                  wemb_ref, pemb_ref, temb_ref, eg_ref, eb_ref,
                  wqkv_ref, bqkv_ref, wo_ref, bo_ref, g1_ref, b1_ref,
                  wi_ref, bi_ref, wf_ref, bf_ref, g2_ref, b2_ref,
                  cw_ref, cb_ref,
                  cs_ref, ce_ref, ctT_ref,
                  tags_ref):
    scale = 1.0 / math.sqrt(HEAD_DIM)
    M = B * S
    L = NUM_LABELS

    def ln(h, g, b):
        mu = jnp.mean(h, axis=-1, keepdims=True)
        var = jnp.mean(jnp.square(h - mu), axis=-1, keepdims=True)
        return (h - mu) * jax.lax.rsqrt(var + LN_EPS) * g + b

    def gelu(v):
        # TODO(synk): HF BERT uses exact erf-GELU; tanh approximation kept for
        # portable Mosaic lowering (erf support varies by target).
        return 0.5 * v * (1.0 + jnp.tanh(0.7978845608028654 *
                                         (v + 0.044715 * v * v * v)))

    # -------- embeddings (gather fused in-kernel) --------
    ids = ids_ref[...]                                            # (M, 1) int32
    tt = tt_ref[...]                                              # (M, 1) int32
    onehot_w = (ids == jax.lax.broadcasted_iota(jnp.int32, (M, VOCAB), 1)
                ).astype(jnp.float32)                             # (M, VOCAB)
    emb = jnp.dot(onehot_w, wemb_ref[...],
                  preferred_element_type=jnp.float32)             # (M, H)
    pos = pemb_ref[0:S, :]                                        # (S, H)
    emb = emb + jnp.concatenate([pos] * B, axis=0)                # (M, H)
    emb = emb + jnp.where(tt == 0, temb_ref[0:1, :], temb_ref[1:2, :])
    x = ln(emb, eg_ref[...], eb_ref[...])

    # additive attention bias from the (B, S) mask, pre-broadcast per (b, head)
    mask_i = mask_ref[...]                                        # (B, S) int32
    maskf = mask_i.astype(jnp.float32)
    bias = (1.0 - maskf) * NEG_INF                                # (B, S)
    bias_n = jnp.stack([bias[b:b + 1, :]
                        for b in range(B) for _ in range(N_HEADS)],
                       axis=0)                                    # (B*nH, 1, S)

    # -------- transformer layers (weights resident in VMEM) --------
    for l in range(N_LAYERS):
        qkv = jnp.dot(x, wqkv_ref[l],
                      preferred_element_type=jnp.float32) + bqkv_ref[l]
        q = qkv[:, 0:HIDDEN]
        k = qkv[:, HIDDEN:2 * HIDDEN]
        v = qkv[:, 2 * HIDDEN:3 * HIDDEN]

        def to_heads(a):  # (M, H) -> (B*nH, S, HD) with static slices only
            return jnp.stack(
                [a[b * S:(b + 1) * S, h * HEAD_DIM:(h + 1) * HEAD_DIM]
                 for b in range(B) for h in range(N_HEADS)], axis=0)

        q_n, k_n, v_n = to_heads(q), to_heads(k), to_heads(v)
        s = jnp.einsum('nqd,nkd->nqk', q_n, k_n,
                       preferred_element_type=jnp.float32) * scale + bias_n
        m = jnp.max(s, axis=-1, keepdims=True)
        p = jnp.exp(s - m)
        p = p / jnp.sum(p, axis=-1, keepdims=True)
        ctx_n = jnp.einsum('nqk,nkd->nqd', p, v_n,
                           preferred_element_type=jnp.float32)    # (B*nH, S, HD)
        # merge heads back to (M, H) in registers (no VMEM scratch)
        ctx = jnp.concatenate(
            [jnp.concatenate([ctx_n[b * N_HEADS + h] for h in range(N_HEADS)],
                             axis=1) for b in range(B)], axis=0)

        attn_out = jnp.dot(ctx, wo_ref[l],
                           preferred_element_type=jnp.float32) + bo_ref[l]
        x = ln(attn_out + x, g1_ref[l], b1_ref[l])

        inter = gelu(jnp.dot(x, wi_ref[l],
                             preferred_element_type=jnp.float32) + bi_ref[l])
        ffn = jnp.dot(inter, wf_ref[l],
                      preferred_element_type=jnp.float32) + bf_ref[l]
        x = ln(ffn + x, g2_ref[l], b2_ref[l])

    # -------- token-classification head (dropout = identity in eval) --------
    logits = jnp.dot(x, cw_ref[...],
                     preferred_element_type=jnp.float32) + cb_ref[...]  # (M, L)

    # -------- CRF Viterbi decode (torchcrf semantics, batch_first) --------
    transT = ctT_ref[...]                      # (L, L), transT[j, i] = trans[i, j]
    iota_from = jax.lax.broadcasted_iota(jnp.int32, (B, L, L), 2).astype(jnp.float32)
    iota_l = jax.lax.broadcasted_iota(jnp.int32, (B, L), 1).astype(jnp.float32)

    def emit(t):  # emissions at timestep t, rows gathered with static slices
        return jnp.concatenate([logits[b * S + t:b * S + t + 1, :]
                                for b in range(B)], axis=0)       # (B, L)

    # forward max-sum pass, fully unrolled; score + backpointers live in vregs
    score = cs_ref[...] + emit(0)                                 # (B, L)
    history = []
    for t in range(1, S):
        # ns[b, j, i] = score[b, i] + trans[i, j]; reduce over i (lane axis)
        ns = score[:, None, :] + transT[None, :, :]               # (B, L, L)
        best = jnp.max(ns, axis=-1)                               # (B, L)
        # TODO(synk): first-occurrence argmax via lane-iota min; a fused
        # max/argmax reduce (jnp.argmax) would halve this once Mosaic supports it.
        idx = jnp.min(jnp.where(ns == best[:, :, None], iota_from, float(L)),
                      axis=-1)                                    # (B, L) f32
        history.append(idx)
        valid = mask_i[:, t:t + 1] > 0                            # (B, 1)
        score = jnp.where(valid, best + emit(t), score)

    final = score + ce_ref[...]                                   # (B, L)
    fmax = jnp.max(final, axis=-1, keepdims=True)
    cur = jnp.min(jnp.where(final == fmax, iota_l, float(L)),
                  axis=-1, keepdims=True)                         # (B, 1) last tag

    # backward trace, fully unrolled; padded (masked) positions get tag 0
    tags_cols = [None] * S
    for t in range(S - 1, 0, -1):
        valid = mask_i[:, t:t + 1] > 0
        tags_cols[t] = jnp.where(valid, cur, 0.0)
        hist_t = history[t - 1]                                   # (B, L)
        prev = jnp.sum(jnp.where(iota_l == cur, hist_t, 0.0),
                       axis=-1, keepdims=True)                    # (B, 1)
        cur = jnp.where(valid, prev, cur)
    tags_cols[0] = jnp.where(mask_i[:, 0:1] > 0, cur, 0.0)

    tags_ref[...] = jnp.concatenate(tags_cols, axis=1).astype(jnp.int32)  # (B, S)


def bert_crf_fused(ids2, tt2, mask_i, p):
    vmem = pl.BlockSpec(memory_space=pltpu.MemorySpace.VMEM)
    # NOTE: all-weights-resident / gridless design is fine at these synthetic
    # shapes; for real matscibert shapes add a streamed layer axis ('arbitrary')
    # plus a 'parallel' token-tile axis (v7x has only 64 MiB VMEM + 2 TCs).
    return pl.pallas_call(
        _fused_kernel,
        out_shape=jax.ShapeDtypeStruct((B, S), jnp.int32),
        in_specs=[vmem] * 25,
        out_specs=vmem,
    )(ids2, tt2, mask_i,
      p["word_emb"], p["pos_emb"], p["type_emb"], p["emb_ln_g"], p["emb_ln_b"],
      p["wqkv"], p["bqkv"], p["wo"], p["bo"], p["ln1_g"], p["ln1_b"],
      p["wi"], p["bi"], p["wf"], p["bf"], p["ln2_g"], p["ln2_b"],
      p["cls_w"], p["cls_b"],
      p["crf_start"], p["crf_end"], p["crf_trans_t"])


# ---------------- parameters (stacked per-layer, QKV pre-fused) ----------------
def init_params(key):
    keys = iter(jax.random.split(key, 256))

    def nrm(shape, scale=0.02):
        return scale * jax.random.normal(next(keys), shape, dtype=jnp.float32)

    layers = {k: [] for k in ("wqkv", "bqkv", "wo", "bo", "ln1_g", "ln1_b",
                              "wi", "bi", "wf", "bf", "ln2_g", "ln2_b")}
    for _ in range(N_LAYERS):
        wq, wk, wv = nrm((HIDDEN, HIDDEN)), nrm((HIDDEN, HIDDEN)), nrm((HIDDEN, HIDDEN))
        layers["wqkv"].append(jnp.concatenate([wq, wk, wv], axis=1))   # (H, 3H)
        layers["bqkv"].append(jnp.zeros((1, 3 * HIDDEN), jnp.float32))
        layers["wo"].append(nrm((HIDDEN, HIDDEN)))
        layers["bo"].append(jnp.zeros((1, HIDDEN), jnp.float32))
        layers["ln1_g"].append(jnp.ones((1, HIDDEN), jnp.float32))
        layers["ln1_b"].append(jnp.zeros((1, HIDDEN), jnp.float32))
        layers["wi"].append(nrm((HIDDEN, INTERMEDIATE)))
        layers["bi"].append(jnp.zeros((1, INTERMEDIATE), jnp.float32))
        layers["wf"].append(nrm((INTERMEDIATE, HIDDEN)))
        layers["bf"].append(jnp.zeros((1, HIDDEN), jnp.float32))
        layers["ln2_g"].append(jnp.ones((1, HIDDEN), jnp.float32))
        layers["ln2_b"].append(jnp.zeros((1, HIDDEN), jnp.float32))

    p = {k: jnp.stack(v) for k, v in layers.items()}
    crf_trans = nrm((NUM_LABELS, NUM_LABELS), 0.1)   # [from, to], torchcrf layout
    p.update({
        "word_emb": nrm((VOCAB, HIDDEN)),
        "pos_emb": nrm((MAX_POS, HIDDEN)),
        "type_emb": nrm((TYPE_VOCAB, HIDDEN)),
        "emb_ln_g": jnp.ones((1, HIDDEN), jnp.float32),
        "emb_ln_b": jnp.zeros((1, HIDDEN), jnp.float32),
        "cls_w": nrm((HIDDEN, NUM_LABELS)),
        "cls_b": jnp.zeros((1, NUM_LABELS), jnp.float32),
        "crf_start": nrm((1, NUM_LABELS), 0.1),
        "crf_end": nrm((1, NUM_LABELS), 0.1),
        "crf_trans": crf_trans,
        "crf_trans_t": crf_trans.T,                  # pre-transposed for the kernel
    })
    return p


# ---------------- BERT_CRF forward ----------------
def bert_crf_forward(params, input_ids, token_type_ids, attention_mask):
    assert input_ids.shape == (B, S), "kernel is specialized to (B, S)"
    ids2 = input_ids.reshape(B * S, 1).astype(jnp.int32)
    tt2 = token_type_ids.reshape(B * S, 1).astype(jnp.int32)
    mask_i = attention_mask.astype(jnp.int32)
    # (B, S) Viterbi tags; positions past each sequence end are padded with 0
    # (torchcrf returns variable-length Python lists; use the mask for lengths).
    return bert_crf_fused(ids2, tt2, mask_i, params)


if __name__ == "__main__":
    key = jax.random.PRNGKey(0)
    pkey, ikey = jax.random.split(key)
    params = init_params(pkey)

    input_ids = jax.random.randint(ikey, (B, S), 0, VOCAB, dtype=jnp.int32)
    token_type_ids = jnp.zeros((B, S), jnp.int32)
    lengths = jnp.array([S, 5], jnp.int32)
    attention_mask = (jnp.arange(S)[None, :] < lengths[:, None]).astype(jnp.int32)

    fwd = jax.jit(bert_crf_forward)
    tags = fwd(params, input_ids, token_type_ids, attention_mask)
    jax.block_until_ready(tags)
    print("KERNEL_OK")
</pallas_src>

<mosaic_0001>
module attributes {stable_mosaic.version = 11 : i64} {
  func.func @_fused_kernel(%arg0: memref<16x1xi32, #tpu.memory_space<vmem>>, %arg1: memref<16x1xi32, #tpu.memory_space<vmem>>, %arg2: memref<2x8xi32, #tpu.memory_space<vmem>>, %arg3: memref<100x32xf32, #tpu.memory_space<vmem>>, %arg4: memref<32x32xf32, #tpu.memory_space<vmem>>, %arg5: memref<2x32xf32, #tpu.memory_space<vmem>>, %arg6: memref<1x32xf32, #tpu.memory_space<vmem>>, %arg7: memref<1x32xf32, #tpu.memory_space<vmem>>, %arg8: memref<2x32x96xf32, #tpu.memory_space<vmem>>, %arg9: memref<2x1x96xf32, #tpu.memory_space<vmem>>, %arg10: memref<2x32x32xf32, #tpu.memory_space<vmem>>, %arg11: memref<2x1x32xf32, #tpu.memory_space<vmem>>, %arg12: memref<2x1x32xf32, #tpu.memory_space<vmem>>, %arg13: memref<2x1x32xf32, #tpu.memory_space<vmem>>, %arg14: memref<2x32x64xf32, #tpu.memory_space<vmem>>, %arg15: memref<2x1x64xf32, #tpu.memory_space<vmem>>, %arg16: memref<2x64x32xf32, #tpu.memory_space<vmem>>, %arg17: memref<2x1x32xf32, #tpu.memory_space<vmem>>, %arg18: memref<2x1x32xf32, #tpu.memory_space<vmem>>, %arg19: memref<2x1x32xf32, #tpu.memory_space<vmem>>, %arg20: memref<32x15xf32, #tpu.memory_space<vmem>>, %arg21: memref<1x15xf32, #tpu.memory_space<vmem>>, %arg22: memref<1x15xf32, #tpu.memory_space<vmem>>, %arg23: memref<1x15xf32, #tpu.memory_space<vmem>>, %arg24: memref<15x15xf32, #tpu.memory_space<vmem>>, %arg25: memref<2x8xi32, #tpu.memory_space<vmem>>) attributes {dimension_semantics = [], scalar_prefetch = 0 : i64, scratch_operands = 0 : i64, tpu.core_type = #tpu.core_type<tc>} {
    %c0 = arith.constant 0 : index
    %c0_0 = arith.constant 0 : index
    %0 = vector.load %arg0[%c0, %c0_0] : memref<16x1xi32, #tpu.memory_space<vmem>>, vector<16x1xi32>
    %c0_1 = arith.constant 0 : index
    %c0_2 = arith.constant 0 : index
    %1 = vector.load %arg1[%c0_1, %c0_2] : memref<16x1xi32, #tpu.memory_space<vmem>>, vector<16x1xi32>
    %2 = tpu.iota {dimensions = array<i32: 1>} : vector<16x100xi32>
    %3 = vector.broadcast %0 : vector<16x1xi32> to vector<16x100xi32>
    %4 = arith.cmpi eq, %3, %2 : vector<16x100xi32>
    %5 = arith.extui %4 : vector<16x100xi1> to vector<16x100xi32>
    %6 = arith.sitofp %5 : vector<16x100xi32> to vector<16x100xf32>
    %c0_3 = arith.constant 0 : index
    %c0_4 = arith.constant 0 : index
    %7 = vector.load %arg3[%c0_3, %c0_4] : memref<100x32xf32, #tpu.memory_space<vmem>>, vector<100x32xf32>
    %cst = arith.constant dense<0.000000e+00> : vector<16x32xf32>
    %8 = tpu.matmul %6, %7, %cst {dimension_numbers = #tpu.dot_dimension_numbers<[1], [0], [0], [1], [0, 0, 1, 1], [], []>} : vector<16x100xf32>, vector<100x32xf32>, vector<16x32xf32> -> vector<16x32xf32>
    %c0_5 = arith.constant 0 : index
    %c0_6 = arith.constant 0 : index
    %9 = vector.load %arg4[%c0_5, %c0_6] : memref<32x32xf32, #tpu.memory_space<vmem>>, vector<8x32xf32>
    %10 = tpu.concatenate %9, %9 in 0 : vector<8x32xf32>, vector<8x32xf32> -> vector<16x32xf32>
    %11 = arith.addf %8, %10 : vector<16x32xf32>
    %c0_i32 = arith.constant 0 : i32
    %12 = vector.broadcast %c0_i32 : i32 to vector<16x1xi32>
    %13 = arith.cmpi eq, %1, %12 : vector<16x1xi32>
    %c0_7 = arith.constant 0 : index
    %c0_8 = arith.constant 0 : index
    %14 = vector.load %arg5[%c0_7, %c0_8] : memref<2x32xf32, #tpu.memory_space<vmem>>, vector<1x32xf32>
    %c1 = arith.constant 1 : index
    %c0_9 = arith.constant 0 : index
    %15 = vector.load %arg5[%c1, %c0_9] : memref<2x32xf32, #tpu.memory_space<vmem>>, vector<1x32xf32>
    %16 = vector.shape_cast %13 : vector<16x1xi1> to vector<16x1xi1>
    %17 = vector.broadcast %16 : vector<16x1xi1> to vector<16x32xi1>
    %18 = vector.shape_cast %14 : vector<1x32xf32> to vector<1x32xf32>
    %19 = vector.broadcast %18 : vector<1x32xf32> to vector<16x32xf32>
    %20 = vector.shape_cast %15 : vector<1x32xf32> to vector<1x32xf32>
    %21 = vector.broadcast %20 : vector<1x32xf32> to vector<16x32xf32>
    %22 = arith.select %17, %19, %21 : vector<16x32xi1>, vector<16x32xf32>
    %23 = arith.addf %11, %22 : vector<16x32xf32>
    %c0_10 = arith.constant 0 : index
    %c0_11 = arith.constant 0 : index
    %24 = vector.load %arg6[%c0_10, %c0_11] : memref<1x32xf32, #tpu.memory_space<vmem>>, vector<1x32xf32>
    %c0_12 = arith.constant 0 : index
    %c0_13 = arith.constant 0 : index
    %25 = vector.load %arg7[%c0_12, %c0_13] : memref<1x32xf32, #tpu.memory_space<vmem>>, vector<1x32xf32>
    %cst_14 = arith.constant dense<0.000000e+00> : vector<16xf32>
    %26 = vector.multi_reduction <add>, %23, %cst_14 [1] : vector<16x32xf32> to vector<16xf32>
    %27 = vector.shape_cast %26 : vector<16xf32> to vector<16x1xf32>
    %cst_15 = arith.constant 3.200000e+01 : f32
    %28 = vector.broadcast %cst_15 : f32 to vector<16x1xf32>
    %29 = arith.divf %27, %28 : vector<16x1xf32>
    %30 = vector.broadcast %29 : vector<16x1xf32> to vector<16x32xf32>
    %31 = arith.subf %23, %30 : vector<16x32xf32>
    %32 = arith.mulf %31, %31 : vector<16x32xf32>
    %cst_16 = arith.constant dense<0.000000e+00> : vector<16xf32>
    %33 = vector.multi_reduction <add>, %32, %cst_16 [1] : vector<16x32xf32> to vector<16xf32>
    %34 = vector.shape_cast %33 : vector<16xf32> to vector<16x1xf32>
    %cst_17 = arith.constant 3.200000e+01 : f32
    %35 = vector.broadcast %cst_17 : f32 to vector<16x1xf32>
    %36 = arith.divf %34, %35 : vector<16x1xf32>
    %37 = vector.broadcast %29 : vector<16x1xf32> to vector<16x32xf32>
    %38 = arith.subf %23, %37 : vector<16x32xf32>
    %cst_18 = arith.constant 9.99999996E-13 : f32
    %39 = vector.broadcast %cst_18 : f32 to vector<16x1xf32>
    %40 = arith.addf %36, %39 : vector<16x1xf32>
    %41 = math.rsqrt %40 : vector<16x1xf32>
    %42 = vector.broadcast %41 : vector<16x1xf32> to vector<16x32xf32>
    %43 = arith.mulf %38, %42 : vector<16x32xf32>
    %44 = vector.broadcast %24 : vector<1x32xf32> to vector<16x32xf32>
    %45 = arith.mulf %43, %44 : vector<16x32xf32>
    %46 = vector.broadcast %25 : vector<1x32xf32> to vector<16x32xf32>
    %47 = arith.addf %45, %46 : vector<16x32xf32>
    %c0_19 = arith.constant 0 : index
    %c0_20 = arith.constant 0 : index
    %48 = vector.load %arg2[%c0_19, %c0_20] : memref<2x8xi32, #tpu.memory_space<vmem>>, vector<2x8xi32>
    %49 = arith.sitofp %48 : vector<2x8xi32> to vector<2x8xf32>
    %cst_21 = arith.constant 1.000000e+00 : f32
    %50 = vector.broadcast %cst_21 : f32 to vector<2x8xf32>
    %51 = arith.subf %50, %49 : vector<2x8xf32>
    %cst_22 = arith.constant -1.000000e+09 : f32
    %52 = vector.broadcast %cst_22 : f32 to vector<2x8xf32>
    %53 = arith.mulf %51, %52 : vector<2x8xf32>
    %54 = vector.extract_strided_slice %53 {offsets = [0, 0], sizes = [1, 8], strides = [1, 1]} : vector<2x8xf32> to vector<1x8xf32>
    %55 = vector.extract_strided_slice %53 {offsets = [0, 0], sizes = [1, 8], strides = [1, 1]} : vector<2x8xf32> to vector<1x8xf32>
    %56 = vector.extract_strided_slice %53 {offsets = [1, 0], sizes = [1, 8], strides = [1, 1]} : vector<2x8xf32> to vector<1x8xf32>
    %57 = vector.extract_strided_slice %53 {offsets = [1, 0], sizes = [1, 8], strides = [1, 1]} : vector<2x8xf32> to vector<1x8xf32>
    %58 = vector.shape_cast %54 : vector<1x8xf32> to vector<1x1x8xf32>
    %59 = vector.shape_cast %55 : vector<1x8xf32> to vector<1x1x8xf32>
    %60 = vector.shape_cast %56 : vector<1x8xf32> to vector<1x1x8xf32>
    %61 = vector.shape_cast %57 : vector<1x8xf32> to vector<1x1x8xf32>
    %62 = tpu.concatenate %58, %59, %60, %61 in 0 : vector<1x1x8xf32>, vector<1x1x8xf32>, vector<1x1x8xf32>, vector<1x1x8xf32> -> vector<4x1x8xf32>
    %c0_23 = arith.constant 0 : index
    %c0_24 = arith.constant 0 : index
    %c0_25 = arith.constant 0 : index
    %63 = vector.load %arg8[%c0_23, %c0_24, %c0_25] : memref<2x32x96xf32, #tpu.memory_space<vmem>>, vector<1x32x96xf32>
    %64 = vector.shape_cast %63 : vector<1x32x96xf32> to vector<32x96xf32>
    %cst_26 = arith.constant dense<0.000000e+00> : vector<16x96xf32>
    %65 = tpu.matmul %47, %64, %cst_26 {dimension_numbers = #tpu.dot_dimension_numbers<[1], [0], [0], [1], [0, 0, 1, 1], [], []>} : vector<16x32xf32>, vector<32x96xf32>, vector<16x96xf32> -> vector<16x96xf32>
    %c0_27 = arith.constant 0 : index
    %c0_28 = arith.constant 0 : index
    %c0_29 = arith.constant 0 : index
    %66 = vector.load %arg9[%c0_27, %c0_28, %c0_29] : memref<2x1x96xf32, #tpu.memory_space<vmem>>, vector<1x1x96xf32>
    %67 = vector.shape_cast %66 : vector<1x1x96xf32> to vector<1x96xf32>
    %68 = vector.broadcast %67 : vector<1x96xf32> to vector<16x96xf32>
    %69 = arith.addf %65, %68 : vector<16x96xf32>
    %70 = vector.extract_strided_slice %69 {offsets = [0, 0], sizes = [16, 32], strides = [1, 1]} : vector<16x96xf32> to vector<16x32xf32>
    %71 = vector.extract_strided_slice %69 {offsets = [0, 32], sizes = [16, 32], strides = [1, 1]} : vector<16x96xf32> to vector<16x32xf32>
    %72 = vector.extract_strided_slice %69 {offsets = [0, 64], sizes = [16, 32], strides = [1, 1]} : vector<16x96xf32> to vector<16x32xf32>
    %73 = vector.extract_strided_slice %70 {offsets = [0, 0], sizes = [8, 16], strides = [1, 1]} : vector<16x32xf32> to vector<8x16xf32>
    %74 = vector.extract_strided_slice %70 {offsets = [0, 16], sizes = [8, 16], strides = [1, 1]} : vector<16x32xf32> to vector<8x16xf32>
    %75 = vector.extract_strided_slice %70 {offsets = [8, 0], sizes = [8, 16], strides = [1, 1]} : vector<16x32xf32> to vector<8x16xf32>
    %76 = vector.extract_strided_slice %70 {offsets = [8, 16], sizes = [8, 16], strides = [1, 1]} : vector<16x32xf32> to vector<8x16xf32>
    %77 = vector.shape_cast %73 : vector<8x16xf32> to vector<1x8x16xf32>
    %78 = vector.shape_cast %74 : vector<8x16xf32> to vector<1x8x16xf32>
    %79 = vector.shape_cast %75 : vector<8x16xf32> to vector<1x8x16xf32>
    %80 = vector.shape_cast %76 : vector<8x16xf32> to vector<1x8x16xf32>
    %81 = tpu.concatenate %77, %78, %79, %80 in 0 : vector<1x8x16xf32>, vector<1x8x16xf32>, vector<1x8x16xf32>, vector<1x8x16xf32> -> vector<4x8x16xf32>
    %82 = vector.extract_strided_slice %71 {offsets = [0, 0], sizes = [8, 16], strides = [1, 1]} : vector<16x32xf32> to vector<8x16xf32>
    %83 = vector.extract_strided_slice %71 {offsets = [0, 16], sizes = [8, 16], strides = [1, 1]} : vector<16x32xf32> to vector<8x16xf32>
    %84 = vector.extract_strided_slice %71 {offsets = [8, 0], sizes = [8, 16], strides = [1, 1]} : vector<16x32xf32> to vector<8x16xf32>
    %85 = vector.extract_strided_slice %71 {offsets = [8, 16], sizes = [8, 16], strides = [1, 1]} : vector<16x32xf32> to vector<8x16xf32>
    %86 = vector.shape_cast %82 : vector<8x16xf32> to vector<1x8x16xf32>
    %87 = vector.shape_cast %83 : vector<8x16xf32> to vector<1x8x16xf32>
    %88 = vector.shape_cast %84 : vector<8x16xf32> to vector<1x8x16xf32>
    %89 = vector.shape_cast %85 : vector<8x16xf32> to vector<1x8x16xf32>
    %90 = tpu.concatenate %86, %87, %88, %89 in 0 : vector<1x8x16xf32>, vector<1x8x16xf32>, vector<1x8x16xf32>, vector<1x8x16xf32> -> vector<4x8x16xf32>
    %91 = vector.extract_strided_slice %72 {offsets = [0, 0], sizes = [8, 16], strides = [1, 1]} : vector<16x32xf32> to vector<8x16xf32>
    %92 = vector.extract_strided_slice %72 {offsets = [0, 16], sizes = [8, 16], strides = [1, 1]} : vector<16x32xf32> to vector<8x16xf32>
    %93 = vector.extract_strided_slice %72 {offsets = [8, 0], sizes = [8, 16], strides = [1, 1]} : vector<16x32xf32> to vector<8x16xf32>
    %94 = vector.extract_strided_slice %72 {offsets = [8, 16], sizes = [8, 16], strides = [1, 1]} : vector<16x32xf32> to vector<8x16xf32>
    %95 = vector.shape_cast %91 : vector<8x16xf32> to vector<1x8x16xf32>
    %96 = vector.shape_cast %92 : vector<8x16xf32> to vector<1x8x16xf32>
    %97 = vector.shape_cast %93 : vector<8x16xf32> to vector<1x8x16xf32>
    %98 = vector.shape_cast %94 : vector<8x16xf32> to vector<1x8x16xf32>
    %99 = tpu.concatenate %95, %96, %97, %98 in 0 : vector<1x8x16xf32>, vector<1x8x16xf32>, vector<1x8x16xf32>, vector<1x8x16xf32> -> vector<4x8x16xf32>
    "tpu.trace_start"() <{level = 10 : i32, message = "nqd,nkd->nqk"}> : () -> ()
    %cst_30 = arith.constant dense<0.000000e+00> : vector<4x8x8xf32>
    %100 = tpu.matmul %81, %90, %cst_30 {dimension_numbers = #tpu.dot_dimension_numbers<[2], [2], [1], [1], [0, 0, 0, 1, 1, 1], [0], [0]>} : vector<4x8x16xf32>, vector<4x8x16xf32>, vector<4x8x8xf32> -> vector<4x8x8xf32>
    "tpu.trace_stop"() : () -> ()
    %cst_31 = arith.constant 2.500000e-01 : f32
    %101 = vector.broadcast %cst_31 : f32 to vector<4x8x8xf32>
    %102 = arith.mulf %100, %101 : vector<4x8x8xf32>
    %103 = vector.broadcast %62 : vector<4x1x8xf32> to vector<4x8x8xf32>
    %104 = arith.addf %102, %103 : vector<4x8x8xf32>
    %cst_32 = arith.constant dense<0xFF800000> : vector<4x8xf32>
    %105 = vector.multi_reduction <maximumf>, %104, %cst_32 [2] : vector<4x8x8xf32> to vector<4x8xf32>
    %106 = vector.shape_cast %105 : vector<4x8xf32> to vector<4x8x1xf32>
    %107 = vector.broadcast %106 : vector<4x8x1xf32> to vector<4x8x8xf32>
    %108 = arith.subf %104, %107 : vector<4x8x8xf32>
    %109 = math.exp %108 : vector<4x8x8xf32>
    %cst_33 = arith.constant dense<0.000000e+00> : vector<4x8xf32>
    %110 = vector.multi_reduction <add>, %109, %cst_33 [2] : vector<4x8x8xf32> to vector<4x8xf32>
    %111 = vector.shape_cast %110 : vector<4x8xf32> to vector<4x8x1xf32>
    %112 = vector.broadcast %111 : vector<4x8x1xf32> to vector<4x8x8xf32>
    %113 = arith.divf %109, %112 : vector<4x8x8xf32>
    "tpu.trace_start"() <{level = 10 : i32, message = "nqk,nkd->nqd"}> : () -> ()
    %cst_34 = arith.constant dense<0.000000e+00> : vector<4x8x16xf32>
    %114 = tpu.matmul %113, %99, %cst_34 {dimension_numbers = #tpu.dot_dimension_numbers<[2], [1], [1], [2], [0, 0, 0, 1, 1, 2], [0], [0]>} : vector<4x8x8xf32>, vector<4x8x16xf32>, vector<4x8x16xf32> -> vector<4x8x16xf32>
    "tpu.trace_stop"() : () -> ()
    %115 = vector.extract_strided_slice %114 {offsets = [0, 0, 0], sizes = [1, 8, 16], strides = [1, 1, 1]} : vector<4x8x16xf32> to vector<1x8x16xf32>
    %116 = vector.shape_cast %115 : vector<1x8x16xf32> to vector<8x16xf32>
    %117 = vector.extract_strided_slice %114 {offsets = [1, 0, 0], sizes = [1, 8, 16], strides = [1, 1, 1]} : vector<4x8x16xf32> to vector<1x8x16xf32>
    %118 = vector.shape_cast %117 : vector<1x8x16xf32> to vector<8x16xf32>
    %119 = tpu.concatenate %116, %118 in 1 : vector<8x16xf32>, vector<8x16xf32> -> vector<8x32xf32>
    %120 = vector.extract_strided_slice %114 {offsets = [2, 0, 0], sizes = [1, 8, 16], strides = [1, 1, 1]} : vector<4x8x16xf32> to vector<1x8x16xf32>
    %121 = vector.shape_cast %120 : vector<1x8x16xf32> to vector<8x16xf32>
    %122 = vector.extract_strided_slice %114 {offsets = [3, 0, 0], sizes = [1, 8, 16], strides = [1, 1, 1]} : vector<4x8x16xf32> to vector<1x8x16xf32>
    %123 = vector.shape_cast %122 : vector<1x8x16xf32> to vector<8x16xf32>
    %124 = tpu.concatenate %121, %123 in 1 : vector<8x16xf32>, vector<8x16xf32> -> vector<8x32xf32>
    %125 = tpu.concatenate %119, %124 in 0 : vector<8x32xf32>, vector<8x32xf32> -> vector<16x32xf32>
    %c0_35 = arith.constant 0 : index
    %c0_36 = arith.constant 0 : index
    %c0_37 = arith.constant 0 : index
    %126 = vector.load %arg10[%c0_35, %c0_36, %c0_37] : memref<2x32x32xf32, #tpu.memory_space<vmem>>, vector<1x32x32xf32>
    %127 = vector.shape_cast %126 : vector<1x32x32xf32> to vector<32x32xf32>
    %cst_38 = arith.constant dense<0.000000e+00> : vector<16x32xf32>
    %128 = tpu.matmul %125, %127, %cst_38 {dimension_numbers = #tpu.dot_dimension_numbers<[1], [0], [0], [1], [0, 0, 1, 1], [], []>} : vector<16x32xf32>, vector<32x32xf32>, vector<16x32xf32> -> vector<16x32xf32>
    %c0_39 = arith.constant 0 : index
    %c0_40 = arith.constant 0 : index
    %c0_41 = arith.constant 0 : index
    %129 = vector.load %arg11[%c0_39, %c0_40, %c0_41] : memref<2x1x32xf32, #tpu.memory_space<vmem>>, vector<1x1x32xf32>
    %130 = vector.shape_cast %129 : vector<1x1x32xf32> to vector<1x32xf32>
    %131 = vector.broadcast %130 : vector<1x32xf32> to vector<16x32xf32>
    %132 = arith.addf %128, %131 : vector<16x32xf32>
    %133 = arith.addf %132, %47 : vector<16x32xf32>
    %c0_42 = arith.constant 0 : index
    %c0_43 = arith.constant 0 : index
    %c0_44 = arith.constant 0 : index
    %134 = vector.load %arg12[%c0_42, %c0_43, %c0_44] : memref<2x1x32xf32, #tpu.memory_space<vmem>>, vector<1x1x32xf32>
    %135 = vector.shape_cast %134 : vector<1x1x32xf32> to vector<1x32xf32>
    %c0_45 = arith.constant 0 : index
    %c0_46 = arith.constant 0 : index
    %c0_47 = arith.constant 0 : index
    %136 = vector.load %arg13[%c0_45, %c0_46, %c0_47] : memref<2x1x32xf32, #tpu.memory_space<vmem>>, vector<1x1x32xf32>
    %137 = vector.shape_cast %136 : vector<1x1x32xf32> to vector<1x32xf32>
    %cst_48 = arith.constant dense<0.000000e+00> : vector<16xf32>
    %138 = vector.multi_reduction <add>, %133, %cst_48 [1] : vector<16x32xf32> to vector<16xf32>
    %139 = vector.shape_cast %138 : vector<16xf32> to vector<16x1xf32>
    %cst_49 = arith.constant 3.200000e+01 : f32
    %140 = vector.broadcast %cst_49 : f32 to vector<16x1xf32>
    %141 = arith.divf %139, %140 : vector<16x1xf32>
    %142 = vector.broadcast %141 : vector<16x1xf32> to vector<16x32xf32>
    %143 = arith.subf %133, %142 : vector<16x32xf32>
    %144 = arith.mulf %143, %143 : vector<16x32xf32>
    %cst_50 = arith.constant dense<0.000000e+00> : vector<16xf32>
    %145 = vector.multi_reduction <add>, %144, %cst_50 [1] : vector<16x32xf32> to vector<16xf32>
    %146 = vector.shape_cast %145 : vector<16xf32> to vector<16x1xf32>
    %cst_51 = arith.constant 3.200000e+01 : f32
    %147 = vector.broadcast %cst_51 : f32 to vector<16x1xf32>
    %148 = arith.divf %146, %147 : vector<16x1xf32>
    %149 = vector.broadcast %141 : vector<16x1xf32> to vector<16x32xf32>
    %150 = arith.subf %133, %149 : vector<16x32xf32>
    %cst_52 = arith.constant 9.99999996E-13 : f32
    %151 = vector.broadcast %cst_52 : f32 to vector<16x1xf32>
    %152 = arith.addf %148, %151 : vector<16x1xf32>
    %153 = math.rsqrt %152 : vector<16x1xf32>
    %154 = vector.broadcast %153 : vector<16x1xf32> to vector<16x32xf32>
    %155 = arith.mulf %150, %154 : vector<16x32xf32>
    %156 = vector.broadcast %135 : vector<1x32xf32> to vector<16x32xf32>
    %157 = arith.mulf %155, %156 : vector<16x32xf32>
    %158 = vector.broadcast %137 : vector<1x32xf32> to vector<16x32xf32>
    %159 = arith.addf %157, %158 : vector<16x32xf32>
    %c0_53 = arith.constant 0 : index
    %c0_54 = arith.constant 0 : index
    %c0_55 = arith.constant 0 : index
    %160 = vector.load %arg14[%c0_53, %c0_54, %c0_55] : memref<2x32x64xf32, #tpu.memory_space<vmem>>, vector<1x32x64xf32>
    %161 = vector.shape_cast %160 : vector<1x32x64xf32> to vector<32x64xf32>
    %cst_56 = arith.constant dense<0.000000e+00> : vector<16x64xf32>
    %162 = tpu.matmul %159, %161, %cst_56 {dimension_numbers = #tpu.dot_dimension_numbers<[1], [0], [0], [1], [0, 0, 1, 1], [], []>} : vector<16x32xf32>, vector<32x64xf32>, vector<16x64xf32> -> vector<16x64xf32>
    %c0_57 = arith.constant 0 : index
    %c0_58 = arith.constant 0 : index
    %c0_59 = arith.constant 0 : index
    %163 = vector.load %arg15[%c0_57, %c0_58, %c0_59] : memref<2x1x64xf32, #tpu.memory_space<vmem>>, vector<1x1x64xf32>
    %164 = vector.shape_cast %163 : vector<1x1x64xf32> to vector<1x64xf32>
    %165 = vector.broadcast %164 : vector<1x64xf32> to vector<16x64xf32>
    %166 = arith.addf %162, %165 : vector<16x64xf32>
    %cst_60 = arith.constant 5.000000e-01 : f32
    %167 = vector.broadcast %cst_60 : f32 to vector<16x64xf32>
    %168 = arith.mulf %167, %166 : vector<16x64xf32>
    %cst_61 = arith.constant 4.471500e-02 : f32
    %169 = vector.broadcast %cst_61 : f32 to vector<16x64xf32>
    %170 = arith.mulf %169, %166 : vector<16x64xf32>
    %171 = arith.mulf %170, %166 : vector<16x64xf32>
    %172 = arith.mulf %171, %166 : vector<16x64xf32>
    %173 = arith.addf %166, %172 : vector<16x64xf32>
    %cst_62 = arith.constant 0.797884583 : f32
    %174 = vector.broadcast %cst_62 : f32 to vector<16x64xf32>
    %175 = arith.mulf %174, %173 : vector<16x64xf32>
    %176 = math.tanh %175 : vector<16x64xf32>
    %cst_63 = arith.constant 1.000000e+00 : f32
    %177 = vector.broadcast %cst_63 : f32 to vector<16x64xf32>
    %178 = arith.addf %177, %176 : vector<16x64xf32>
    %179 = arith.mulf %168, %178 : vector<16x64xf32>
    %c0_64 = arith.constant 0 : index
    %c0_65 = arith.constant 0 : index
    %c0_66 = arith.constant 0 : index
    %180 = vector.load %arg16[%c0_64, %c0_65, %c0_66] : memref<2x64x32xf32, #tpu.memory_space<vmem>>, vector<1x64x32xf32>
    %181 = vector.shape_cast %180 : vector<1x64x32xf32> to vector<64x32xf32>
    %cst_67 = arith.constant dense<0.000000e+00> : vector<16x32xf32>
    %182 = tpu.matmul %179, %181, %cst_67 {dimension_numbers = #tpu.dot_dimension_numbers<[1], [0], [0], [1], [0, 0, 1, 1], [], []>} : vector<16x64xf32>, vector<64x32xf32>, vector<16x32xf32> -> vector<16x32xf32>
    %c0_68 = arith.constant 0 : index
    %c0_69 = arith.constant 0 : index
    %c0_70 = arith.constant 0 : index
    %183 = vector.load %arg17[%c0_68, %c0_69, %c0_70] : memref<2x1x32xf32, #tpu.memory_space<vmem>>, vector<1x1x32xf32>
    %184 = vector.shape_cast %183 : vector<1x1x32xf32> to vector<1x32xf32>
    %185 = vector.broadcast %184 : vector<1x32xf32> to vector<16x32xf32>
    %186 = arith.addf %182, %185 : vector<16x32xf32>
    %187 = arith.addf %186, %159 : vector<16x32xf32>
    %c0_71 = arith.constant 0 : index
    %c0_72 = arith.constant 0 : index
    %c0_73 = arith.constant 0 : index
    %188 = vector.load %arg18[%c0_71, %c0_72, %c0_73] : memref<2x1x32xf32, #tpu.memory_space<vmem>>, vector<1x1x32xf32>
    %189 = vector.shape_cast %188 : vector<1x1x32xf32> to vector<1x32xf32>
    %c0_74 = arith.constant 0 : index
    %c0_75 = arith.constant 0 : index
    %c0_76 = arith.constant 0 : index
    %190 = vector.load %arg19[%c0_74, %c0_75, %c0_76] : memref<2x1x32xf32, #tpu.memory_space<vmem>>, vector<1x1x32xf32>
    %191 = vector.shape_cast %190 : vector<1x1x32xf32> to vector<1x32xf32>
    %cst_77 = arith.constant dense<0.000000e+00> : vector<16xf32>
    %192 = vector.multi_reduction <add>, %187, %cst_77 [1] : vector<16x32xf32> to vector<16xf32>
    %193 = vector.shape_cast %192 : vector<16xf32> to vector<16x1xf32>
    %cst_78 = arith.constant 3.200000e+01 : f32
    %194 = vector.broadcast %cst_78 : f32 to vector<16x1xf32>
    %195 = arith.divf %193, %194 : vector<16x1xf32>
    %196 = vector.broadcast %195 : vector<16x1xf32> to vector<16x32xf32>
    %197 = arith.subf %187, %196 : vector<16x32xf32>
    %198 = arith.mulf %197, %197 : vector<16x32xf32>
    %cst_79 = arith.constant dense<0.000000e+00> : vector<16xf32>
    %199 = vector.multi_reduction <add>, %198, %cst_79 [1] : vector<16x32xf32> to vector<16xf32>
    %200 = vector.shape_cast %199 : vector<16xf32> to vector<16x1xf32>
    %cst_80 = arith.constant 3.200000e+01 : f32
    %201 = vector.broadcast %cst_80 : f32 to vector<16x1xf32>
    %202 = arith.divf %200, %201 : vector<16x1xf32>
    %203 = vector.broadcast %195 : vector<16x1xf32> to vector<16x32xf32>
    %204 = arith.subf %187, %203 : vector<16x32xf32>
    %cst_81 = arith.constant 9.99999996E-13 : f32
    %205 = vector.broadcast %cst_81 : f32 to vector<16x1xf32>
    %206 = arith.addf %202, %205 : vector<16x1xf32>
    %207 = math.rsqrt %206 : vector<16x1xf32>
    %208 = vector.broadcast %207 : vector<16x1xf32> to vector<16x32xf32>
    %209 = arith.mulf %204, %208 : vector<16x32xf32>
    %210 = vector.broadcast %189 : vector<1x32xf32> to vector<16x32xf32>
    %211 = arith.mulf %209, %210 : vector<16x32xf32>
    %212 = vector.broadcast %191 : vector<1x32xf32> to vector<16x32xf32>
    %213 = arith.addf %211, %212 : vector<16x32xf32>
    %c1_82 = arith.constant 1 : index
    %c0_83 = arith.constant 0 : index
    %c0_84 = arith.constant 0 : index
    %214 = vector.load %arg8[%c1_82, %c0_83, %c0_84] : memref<2x32x96xf32, #tpu.memory_space<vmem>>, vector<1x32x96xf32>
    %215 = vector.shape_cast %214 : vector<1x32x96xf32> to vector<32x96xf32>
    %cst_85 = arith.constant dense<0.000000e+00> : vector<16x96xf32>
    %216 = tpu.matmul %213, %215, %cst_85 {dimension_numbers = #tpu.dot_dimension_numbers<[1], [0], [0], [1], [0, 0, 1, 1], [], []>} : vector<16x32xf32>, vector<32x96xf32>, vector<16x96xf32> -> vector<16x96xf32>
    %c1_86 = arith.constant 1 : index
    %c0_87 = arith.constant 0 : index
    %c0_88 = arith.constant 0 : index
    %217 = vector.load %arg9[%c1_86, %c0_87, %c0_88] : memref<2x1x96xf32, #tpu.memory_space<vmem>>, vector<1x1x96xf32>
    %218 = vector.shape_cast %217 : vector<1x1x96xf32> to vector<1x96xf32>
    %219 = vector.broadcast %218 : vector<1x96xf32> to vector<16x96xf32>
    %220 = arith.addf %216, %219 : vector<16x96xf32>
    %221 = vector.extract_strided_slice %220 {offsets = [0, 0], sizes = [16, 32], strides = [1, 1]} : vector<16x96xf32> to vector<16x32xf32>
    %222 = vector.extract_strided_slice %220 {offsets = [0, 32], sizes = [16, 32], strides = [1, 1]} : vector<16x96xf32> to vector<16x32xf32>
    %223 = vector.extract_strided_slice %220 {offsets = [0, 64], sizes = [16, 32], strides = [1, 1]} : vector<16x96xf32> to vector<16x32xf32>
    %224 = vector.extract_strided_slice %221 {offsets = [0, 0], sizes = [8, 16], strides = [1, 1]} : vector<16x32xf32> to vector<8x16xf32>
    %225 = vector.extract_strided_slice %221 {offsets = [0, 16], sizes = [8, 16], strides = [1, 1]} : vector<16x32xf32> to vector<8x16xf32>
    %226 = vector.extract_strided_slice %221 {offsets = [8, 0], sizes = [8, 16], strides = [1, 1]} : vector<16x32xf32> to vector<8x16xf32>
    %227 = vector.extract_strided_slice %221 {offsets = [8, 16], sizes = [8, 16], strides = [1, 1]} : vector<16x32xf32> to vector<8x16xf32>
    %228 = vector.shape_cast %224 : vector<8x16xf32> to vector<1x8x16xf32>
    %229 = vector.shape_cast %225 : vector<8x16xf32> to vector<1x8x16xf32>
    %230 = vector.shape_cast %226 : vector<8x16xf32> to vector<1x8x16xf32>
    %231 = vector.shape_cast %227 : vector<8x16xf32> to vector<1x8x16xf32>
    %232 = tpu.concatenate %228, %229, %230, %231 in 0 : vector<1x8x16xf32>, vector<1x8x16xf32>, vector<1x8x16xf32>, vector<1x8x16xf32> -> vector<4x8x16xf32>
    %233 = vector.extract_strided_slice %222 {offsets = [0, 0], sizes = [8, 16], strides = [1, 1]} : vector<16x32xf32> to vector<8x16xf32>
    %234 = vector.extract_strided_slice %222 {offsets = [0, 16], sizes = [8, 16], strides = [1, 1]} : vector<16x32xf32> to vector<8x16xf32>
    %235 = vector.extract_strided_slice %222 {offsets = [8, 0], sizes = [8, 16], strides = [1, 1]} : vector<16x32xf32> to vector<8x16xf32>
    %236 = vector.extract_strided_slice %222 {offsets = [8, 16], sizes = [8, 16], strides = [1, 1]} : vector<16x32xf32> to vector<8x16xf32>
    %237 = vector.shape_cast %233 : vector<8x16xf32> to vector<1x8x16xf32>
    %238 = vector.shape_cast %234 : vector<8x16xf32> to vector<1x8x16xf32>
    %239 = vector.shape_cast %235 : vector<8x16xf32> to vector<1x8x16xf32>
    %240 = vector.shape_cast %236 : vector<8x16xf32> to vector<1x8x16xf32>
    %241 = tpu.concatenate %237, %238, %239, %240 in 0 : vector<1x8x16xf32>, vector<1x8x16xf32>, vector<1x8x16xf32>, vector<1x8x16xf32> -> vector<4x8x16xf32>
    %242 = vector.extract_strided_slice %223 {offsets = [0, 0], sizes = [8, 16], strides = [1, 1]} : vector<16x32xf32> to vector<8x16xf32>
    %243 = vector.extract_strided_slice %223 {offsets = [0, 16], sizes = [8, 16], strides = [1, 1]} : vector<16x32xf32> to vector<8x16xf32>
    %244 = vector.extract_strided_slice %223 {offsets = [8, 0], sizes = [8, 16], strides = [1, 1]} : vector<16x32xf32> to vector<8x16xf32>
    %245 = vector.extract_strided_slice %223 {offsets = [8, 16], sizes = [8, 16], strides = [1, 1]} : vector<16x32xf32> to vector<8x16xf32>
    %246 = vector.shape_cast %242 : vector<8x16xf32> to vector<1x8x16xf32>
    %247 = vector.shape_cast %243 : vector<8x16xf32> to vector<1x8x16xf32>
    %248 = vector.shape_cast %244 : vector<8x16xf32> to vector<1x8x16xf32>
    %249 = vector.shape_cast %245 : vector<8x16xf32> to vector<1x8x16xf32>
    %250 = tpu.concatenate %246, %247, %248, %249 in 0 : vector<1x8x16xf32>, vector<1x8x16xf32>, vector<1x8x16xf32>, vector<1x8x16xf32> -> vector<4x8x16xf32>
    "tpu.trace_start"() <{level = 10 : i32, message = "nqd,nkd->nqk"}> : () -> ()
    %cst_89 = arith.constant dense<0.000000e+00> : vector<4x8x8xf32>
    %251 = tpu.matmul %232, %241, %cst_89 {dimension_numbers = #tpu.dot_dimension_numbers<[2], [2], [1], [1], [0, 0, 0, 1, 1, 1], [0], [0]>} : vector<4x8x16xf32>, vector<4x8x16xf32>, vector<4x8x8xf32> -> vector<4x8x8xf32>
    "tpu.trace_stop"() : () -> ()
    %cst_90 = arith.constant 2.500000e-01 : f32
    %252 = vector.broadcast %cst_90 : f32 to vector<4x8x8xf32>
    %253 = arith.mulf %251, %252 : vector<4x8x8xf32>
    %254 = vector.broadcast %62 : vector<4x1x8xf32> to vector<4x8x8xf32>
    %255 = arith.addf %253, %254 : vector<4x8x8xf32>
    %cst_91 = arith.constant dense<0xFF800000> : vector<4x8xf32>
    %256 = vector.multi_reduction <maximumf>, %255, %cst_91 [2] : vector<4x8x8xf32> to vector<4x8xf32>
    %257 = vector.shape_cast %256 : vector<4x8xf32> to vector<4x8x1xf32>
    %258 = vector.broadcast %257 : vector<4x8x1xf32> to vector<4x8x8xf32>
    %259 = arith.subf %255, %258 : vector<4x8x8xf32>
    %260 = math.exp %259 : vector<4x8x8xf32>
    %cst_92 = arith.constant dense<0.000000e+00> : vector<4x8xf32>
    %261 = vector.multi_reduction <add>, %260, %cst_92 [2] : vector<4x8x8xf32> to vector<4x8xf32>
    %262 = vector.shape_cast %261 : vector<4x8xf32> to vector<4x8x1xf32>
    %263 = vector.broadcast %262 : vector<4x8x1xf32> to vector<4x8x8xf32>
    %264 = arith.divf %260, %263 : vector<4x8x8xf32>
    "tpu.trace_start"() <{level = 10 : i32, message = "nqk,nkd->nqd"}> : () -> ()
    %cst_93 = arith.constant dense<0.000000e+00> : vector<4x8x16xf32>
    %265 = tpu.matmul %264, %250, %cst_93 {dimension_numbers = #tpu.dot_dimension_numbers<[2], [1], [1], [2], [0, 0, 0, 1, 1, 2], [0], [0]>} : vector<4x8x8xf32>, vector<4x8x16xf32>, vector<4x8x16xf32> -> vector<4x8x16xf32>
    "tpu.trace_stop"() : () -> ()
    %266 = vector.extract_strided_slice %265 {offsets = [0, 0, 0], sizes = [1, 8, 16], strides = [1, 1, 1]} : vector<4x8x16xf32> to vector<1x8x16xf32>
    %267 = vector.shape_cast %266 : vector<1x8x16xf32> to vector<8x16xf32>
    %268 = vector.extract_strided_slice %265 {offsets = [1, 0, 0], sizes = [1, 8, 16], strides = [1, 1, 1]} : vector<4x8x16xf32> to vector<1x8x16xf32>
    %269 = vector.shape_cast %268 : vector<1x8x16xf32> to vector<8x16xf32>
    %270 = tpu.concatenate %267, %269 in 1 : vector<8x16xf32>, vector<8x16xf32> -> vector<8x32xf32>
    %271 = vector.extract_strided_slice %265 {offsets = [2, 0, 0], sizes = [1, 8, 16], strides = [1, 1, 1]} : vector<4x8x16xf32> to vector<1x8x16xf32>
    %272 = vector.shape_cast %271 : vector<1x8x16xf32> to vector<8x16xf32>
    %273 = vector.extract_strided_slice %265 {offsets = [3, 0, 0], sizes = [1, 8, 16], strides = [1, 1, 1]} : vector<4x8x16xf32> to vector<1x8x16xf32>
    %274 = vector.shape_cast %273 : vector<1x8x16xf32> to vector<8x16xf32>
    %275 = tpu.concatenate %272, %274 in 1 : vector<8x16xf32>, vector<8x16xf32> -> vector<8x32xf32>
    %276 = tpu.concatenate %270, %275 in 0 : vector<8x32xf32>, vector<8x32xf32> -> vector<16x32xf32>
    %c1_94 = arith.constant 1 : index
    %c0_95 = arith.constant 0 : index
    %c0_96 = arith.constant 0 : index
    %277 = vector.load %arg10[%c1_94, %c0_95, %c0_96] : memref<2x32x32xf32, #tpu.memory_space<vmem>>, vector<1x32x32xf32>
    %278 = vector.shape_cast %277 : vector<1x32x32xf32> to vector<32x32xf32>
    %cst_97 = arith.constant dense<0.000000e+00> : vector<16x32xf32>
    %279 = tpu.matmul %276, %278, %cst_97 {dimension_numbers = #tpu.dot_dimension_numbers<[1], [0], [0], [1], [0, 0, 1, 1], [], []>} : vector<16x32xf32>, vector<32x32xf32>, vector<16x32xf32> -> vector<16x32xf32>
    %c1_98 = arith.constant 1 : index
    %c0_99 = arith.constant 0 : index
    %c0_100 = arith.constant 0 : index
    %280 = vector.load %arg11[%c1_98, %c0_99, %c0_100] : memref<2x1x32xf32, #tpu.memory_space<vmem>>, vector<1x1x32xf32>
    %281 = vector.shape_cast %280 : vector<1x1x32xf32> to vector<1x32xf32>
    %282 = vector.broadcast %281 : vector<1x32xf32> to vector<16x32xf32>
    %283 = arith.addf %279, %282 : vector<16x32xf32>
    %284 = arith.addf %283, %213 : vector<16x32xf32>
    %c1_101 = arith.constant 1 : index
    %c0_102 = arith.constant 0 : index
    %c0_103 = arith.constant 0 : index
    %285 = vector.load %arg12[%c1_101, %c0_102, %c0_103] : memref<2x1x32xf32, #tpu.memory_space<vmem>>, vector<1x1x32xf32>
    %286 = vector.shape_cast %285 : vector<1x1x32xf32> to vector<1x32xf32>
    %c1_104 = arith.constant 1 : index
    %c0_105 = arith.constant 0 : index
    %c0_106 = arith.constant 0 : index
    %287 = vector.load %arg13[%c1_104, %c0_105, %c0_106] : memref<2x1x32xf32, #tpu.memory_space<vmem>>, vector<1x1x32xf32>
    %288 = vector.shape_cast %287 : vector<1x1x32xf32> to vector<1x32xf32>
    %cst_107 = arith.constant dense<0.000000e+00> : vector<16xf32>
    %289 = vector.multi_reduction <add>, %284, %cst_107 [1] : vector<16x32xf32> to vector<16xf32>
    %290 = vector.shape_cast %289 : vector<16xf32> to vector<16x1xf32>
    %cst_108 = arith.constant 3.200000e+01 : f32
    %291 = vector.broadcast %cst_108 : f32 to vector<16x1xf32>
    %292 = arith.divf %290, %291 : vector<16x1xf32>
    %293 = vector.broadcast %292 : vector<16x1xf32> to vector<16x32xf32>
    %294 = arith.subf %284, %293 : vector<16x32xf32>
    %295 = arith.mulf %294, %294 : vector<16x32xf32>
    %cst_109 = arith.constant dense<0.000000e+00> : vector<16xf32>
    %296 = vector.multi_reduction <add>, %295, %cst_109 [1] : vector<16x32xf32> to vector<16xf32>
    %297 = vector.shape_cast %296 : vector<16xf32> to vector<16x1xf32>
    %cst_110 = arith.constant 3.200000e+01 : f32
    %298 = vector.broadcast %cst_110 : f32 to vector<16x1xf32>
    %299 = arith.divf %297, %298 : vector<16x1xf32>
    %300 = vector.broadcast %292 : vector<16x1xf32> to vector<16x32xf32>
    %301 = arith.subf %284, %300 : vector<16x32xf32>
    %cst_111 = arith.constant 9.99999996E-13 : f32
    %302 = vector.broadcast %cst_111 : f32 to vector<16x1xf32>
    %303 = arith.addf %299, %302 : vector<16x1xf32>
    %304 = math.rsqrt %303 : vector<16x1xf32>
    %305 = vector.broadcast %304 : vector<16x1xf32> to vector<16x32xf32>
    %306 = arith.mulf %301, %305 : vector<16x32xf32>
    %307 = vector.broadcast %286 : vector<1x32xf32> to vector<16x32xf32>
    %308 = arith.mulf %306, %307 : vector<16x32xf32>
    %309 = vector.broadcast %288 : vector<1x32xf32> to vector<16x32xf32>
    %310 = arith.addf %308, %309 : vector<16x32xf32>
    %c1_112 = arith.constant 1 : index
    %c0_113 = arith.constant 0 : index
    %c0_114 = arith.constant 0 : index
    %311 = vector.load %arg14[%c1_112, %c0_113, %c0_114] : memref<2x32x64xf32, #tpu.memory_space<vmem>>, vector<1x32x64xf32>
    %312 = vector.shape_cast %311 : vector<1x32x64xf32> to vector<32x64xf32>
    %cst_115 = arith.constant dense<0.000000e+00> : vector<16x64xf32>
    %313 = tpu.matmul %310, %312, %cst_115 {dimension_numbers = #tpu.dot_dimension_numbers<[1], [0], [0], [1], [0, 0, 1, 1], [], []>} : vector<16x32xf32>, vector<32x64xf32>, vector<16x64xf32> -> vector<16x64xf32>
    %c1_116 = arith.constant 1 : index
    %c0_117 = arith.constant 0 : index
    %c0_118 = arith.constant 0 : index
    %314 = vector.load %arg15[%c1_116, %c0_117, %c0_118] : memref<2x1x64xf32, #tpu.memory_space<vmem>>, vector<1x1x64xf32>
    %315 = vector.shape_cast %314 : vector<1x1x64xf32> to vector<1x64xf32>
    %316 = vector.broadcast %315 : vector<1x64xf32> to vector<16x64xf32>
    %317 = arith.addf %313, %316 : vector<16x64xf32>
    %cst_119 = arith.constant 5.000000e-01 : f32
    %318 = vector.broadcast %cst_119 : f32 to vector<16x64xf32>
    %319 = arith.mulf %318, %317 : vector<16x64xf32>
    %cst_120 = arith.constant 4.471500e-02 : f32
    %320 = vector.broadcast %cst_120 : f32 to vector<16x64xf32>
    %321 = arith.mulf %320, %317 : vector<16x64xf32>
    %322 = arith.mulf %321, %317 : vector<16x64xf32>
    %323 = arith.mulf %322, %317 : vector<16x64xf32>
    %324 = arith.addf %317, %323 : vector<16x64xf32>
    %cst_121 = arith.constant 0.797884583 : f32
    %325 = vector.broadcast %cst_121 : f32 to vector<16x64xf32>
    %326 = arith.mulf %325, %324 : vector<16x64xf32>
    %327 = math.tanh %326 : vector<16x64xf32>
    %cst_122 = arith.constant 1.000000e+00 : f32
    %328 = vector.broadcast %cst_122 : f32 to vector<16x64xf32>
    %329 = arith.addf %328, %327 : vector<16x64xf32>
    %330 = arith.mulf %319, %329 : vector<16x64xf32>
    %c1_123 = arith.constant 1 : index
    %c0_124 = arith.constant 0 : index
    %c0_125 = arith.constant 0 : index
    %331 = vector.load %arg16[%c1_123, %c0_124, %c0_125] : memref<2x64x32xf32, #tpu.memory_space<vmem>>, vector<1x64x32xf32>
    %332 = vector.shape_cast %331 : vector<1x64x32xf32> to vector<64x32xf32>
    %cst_126 = arith.constant dense<0.000000e+00> : vector<16x32xf32>
    %333 = tpu.matmul %330, %332, %cst_126 {dimension_numbers = #tpu.dot_dimension_numbers<[1], [0], [0], [1], [0, 0, 1, 1], [], []>} : vector<16x64xf32>, vector<64x32xf32>, vector<16x32xf32> -> vector<16x32xf32>
    %c1_127 = arith.constant 1 : index
    %c0_128 = arith.constant 0 : index
    %c0_129 = arith.constant 0 : index
    %334 = vector.load %arg17[%c1_127, %c0_128, %c0_129] : memref<2x1x32xf32, #tpu.memory_space<vmem>>, vector<1x1x32xf32>
    %335 = vector.shape_cast %334 : vector<1x1x32xf32> to vector<1x32xf32>
    %336 = vector.broadcast %335 : vector<1x32xf32> to vector<16x32xf32>
    %337 = arith.addf %333, %336 : vector<16x32xf32>
    %338 = arith.addf %337, %310 : vector<16x32xf32>
    %c1_130 = arith.constant 1 : index
    %c0_131 = arith.constant 0 : index
    %c0_132 = arith.constant 0 : index
    %339 = vector.load %arg18[%c1_130, %c0_131, %c0_132] : memref<2x1x32xf32, #tpu.memory_space<vmem>>, vector<1x1x32xf32>
    %340 = vector.shape_cast %339 : vector<1x1x32xf32> to vector<1x32xf32>
    %c1_133 = arith.constant 1 : index
    %c0_134 = arith.constant 0 : index
    %c0_135 = arith.constant 0 : index
    %341 = vector.load %arg19[%c1_133, %c0_134, %c0_135] : memref<2x1x32xf32, #tpu.memory_space<vmem>>, vector<1x1x32xf32>
    %342 = vector.shape_cast %341 : vector<1x1x32xf32> to vector<1x32xf32>
    %cst_136 = arith.constant dense<0.000000e+00> : vector<16xf32>
    %343 = vector.multi_reduction <add>, %338, %cst_136 [1] : vector<16x32xf32> to vector<16xf32>
    %344 = vector.shape_cast %343 : vector<16xf32> to vector<16x1xf32>
    %cst_137 = arith.constant 3.200000e+01 : f32
    %345 = vector.broadcast %cst_137 : f32 to vector<16x1xf32>
    %346 = arith.divf %344, %345 : vector<16x1xf32>
    %347 = vector.broadcast %346 : vector<16x1xf32> to vector<16x32xf32>
    %348 = arith.subf %338, %347 : vector<16x32xf32>
    %349 = arith.mulf %348, %348 : vector<16x32xf32>
    %cst_138 = arith.constant dense<0.000000e+00> : vector<16xf32>
    %350 = vector.multi_reduction <add>, %349, %cst_138 [1] : vector<16x32xf32> to vector<16xf32>
    %351 = vector.shape_cast %350 : vector<16xf32> to vector<16x1xf32>
    %cst_139 = arith.constant 3.200000e+01 : f32
    %352 = vector.broadcast %cst_139 : f32 to vector<16x1xf32>
    %353 = arith.divf %351, %352 : vector<16x1xf32>
    %354 = vector.broadcast %346 : vector<16x1xf32> to vector<16x32xf32>
    %355 = arith.subf %338, %354 : vector<16x32xf32>
    %cst_140 = arith.constant 9.99999996E-13 : f32
    %356 = vector.broadcast %cst_140 : f32 to vector<16x1xf32>
    %357 = arith.addf %353, %356 : vector<16x1xf32>
    %358 = math.rsqrt %357 : vector<16x1xf32>
    %359 = vector.broadcast %358 : vector<16x1xf32> to vector<16x32xf32>
    %360 = arith.mulf %355, %359 : vector<16x32xf32>
    %361 = vector.broadcast %340 : vector<1x32xf32> to vector<16x32xf32>
    %362 = arith.mulf %360, %361 : vector<16x32xf32>
    %363 = vector.broadcast %342 : vector<1x32xf32> to vector<16x32xf32>
    %364 = arith.addf %362, %363 : vector<16x32xf32>
    %c0_141 = arith.constant 0 : index
    %c0_142 = arith.constant 0 : index
    %365 = vector.load %arg20[%c0_141, %c0_142] : memref<32x15xf32, #tpu.memory_space<vmem>>, vector<32x15xf32>
    %cst_143 = arith.constant dense<0.000000e+00> : vector<16x15xf32>
    %366 = tpu.matmul %364, %365, %cst_143 {dimension_numbers = #tpu.dot_dimension_numbers<[1], [0], [0], [1], [0, 0, 1, 1], [], []>} : vector<16x32xf32>, vector<32x15xf32>, vector<16x15xf32> -> vector<16x15xf32>
    %c0_144 = arith.constant 0 : index
    %c0_145 = arith.constant 0 : index
    %367 = vector.load %arg21[%c0_144, %c0_145] : memref<1x15xf32, #tpu.memory_space<vmem>>, vector<1x15xf32>
    %368 = vector.broadcast %367 : vector<1x15xf32> to vector<16x15xf32>
    %369 = arith.addf %366, %368 : vector<16x15xf32>
    %c0_146 = arith.constant 0 : index
    %c0_147 = arith.constant 0 : index
    %370 = vector.load %arg24[%c0_146, %c0_147] : memref<15x15xf32, #tpu.memory_space<vmem>>, vector<15x15xf32>
    %371 = tpu.iota {dimensions = array<i32: 2>} : vector<2x15x15xi32>
    %372 = arith.sitofp %371 : vector<2x15x15xi32> to vector<2x15x15xf32>
    %373 = tpu.iota {dimensions = array<i32: 1>} : vector<2x15xi32>
    %374 = arith.sitofp %373 : vector<2x15xi32> to vector<2x15xf32>
    %c0_148 = arith.constant 0 : index
    %c0_149 = arith.constant 0 : index
    %375 = vector.load %arg22[%c0_148, %c0_149] : memref<1x15xf32, #tpu.memory_space<vmem>>, vector<1x15xf32>
    %376 = vector.extract_strided_slice %369 {offsets = [0, 0], sizes = [1, 15], strides = [1, 1]} : vector<16x15xf32> to vector<1x15xf32>
    %377 = vector.extract_strided_slice %369 {offsets = [8, 0], sizes = [1, 15], strides = [1, 1]} : vector<16x15xf32> to vector<1x15xf32>
    %378 = tpu.concatenate %376, %377 in 0 : vector<1x15xf32>, vector<1x15xf32> -> vector<2x15xf32>
    %379 = vector.broadcast %375 : vector<1x15xf32> to vector<2x15xf32>
    %380 = arith.addf %379, %378 : vector<2x15xf32>
    %381 = vector.shape_cast %380 : vector<2x15xf32> to vector<2x1x15xf32>
    %382 = vector.shape_cast %370 : vector<15x15xf32> to vector<1x15x15xf32>
    %383 = vector.broadcast %381 : vector<2x1x15xf32> to vector<2x15x15xf32>
    %384 = vector.broadcast %382 : vector<1x15x15xf32> to vector<2x15x15xf32>
    %385 = arith.addf %383, %384 : vector<2x15x15xf32>
    %cst_150 = arith.constant dense<0xFF800000> : vector<2x15xf32>
    %386 = vector.multi_reduction <maximumf>, %385, %cst_150 [2] : vector<2x15x15xf32> to vector<2x15xf32>
    %387 = vector.shape_cast %386 : vector<2x15xf32> to vector<2x15x1xf32>
    %388 = vector.broadcast %387 : vector<2x15x1xf32> to vector<2x15x15xf32>
    %389 = arith.cmpf oeq, %385, %388 : vector<2x15x15xf32>
    %cst_151 = arith.constant 1.500000e+01 : f32
    %390 = vector.broadcast %cst_151 : f32 to vector<2x15x15xf32>
    %391 = arith.select %389, %372, %390 : vector<2x15x15xi1>, vector<2x15x15xf32>
    %cst_152 = arith.constant dense<0x7F800000> : vector<2x15xf32>
    %392 = vector.multi_reduction <minimumf>, %391, %cst_152 [2] : vector<2x15x15xf32> to vector<2x15xf32>
    %393 = vector.extract_strided_slice %48 {offsets = [0, 1], sizes = [2, 1], strides = [1, 1]} : vector<2x8xi32> to vector<2x1xi32>
    %c0_i32_153 = arith.constant 0 : i32
    %394 = vector.broadcast %c0_i32_153 : i32 to vector<2x1xi32>
    %395 = arith.cmpi sgt, %393, %394 : vector<2x1xi32>
    %396 = vector.extract_strided_slice %369 {offsets = [1, 0], sizes = [1, 15], strides = [1, 1]} : vector<16x15xf32> to vector<1x15xf32>
    %397 = vector.extract_strided_slice %369 {offsets = [9, 0], sizes = [1, 15], strides = [1, 1]} : vector<16x15xf32> to vector<1x15xf32>
    %398 = tpu.concatenate %396, %397 in 0 : vector<1x15xf32>, vector<1x15xf32> -> vector<2x15xf32>
    %399 = arith.addf %386, %398 : vector<2x15xf32>
    %400 = vector.shape_cast %395 : vector<2x1xi1> to vector<2x1xi1>
    %401 = vector.broadcast %400 : vector<2x1xi1> to vector<2x15xi1>
    %402 = arith.select %401, %399, %380 : vector<2x15xi1>, vector<2x15xf32>
    %403 = vector.shape_cast %402 : vector<2x15xf32> to vector<2x1x15xf32>
    %404 = vector.shape_cast %370 : vector<15x15xf32> to vector<1x15x15xf32>
    %405 = vector.broadcast %403 : vector<2x1x15xf32> to vector<2x15x15xf32>
    %406 = vector.broadcast %404 : vector<1x15x15xf32> to vector<2x15x15xf32>
    %407 = arith.addf %405, %406 : vector<2x15x15xf32>
    %cst_154 = arith.constant dense<0xFF800000> : vector<2x15xf32>
    %408 = vector.multi_reduction <maximumf>, %407, %cst_154 [2] : vector<2x15x15xf32> to vector<2x15xf32>
    %409 = vector.shape_cast %408 : vector<2x15xf32> to vector<2x15x1xf32>
    %410 = vector.broadcast %409 : vector<2x15x1xf32> to vector<2x15x15xf32>
    %411 = arith.cmpf oeq, %407, %410 : vector<2x15x15xf32>
    %cst_155 = arith.constant 1.500000e+01 : f32
    %412 = vector.broadcast %cst_155 : f32 to vector<2x15x15xf32>
    %413 = arith.select %411, %372, %412 : vector<2x15x15xi1>, vector<2x15x15xf32>
    %cst_156 = arith.constant dense<0x7F800000> : vector<2x15xf32>
    %414 = vector.multi_reduction <minimumf>, %413, %cst_156 [2] : vector<2x15x15xf32> to vector<2x15xf32>
    %415 = vector.extract_strided_slice %48 {offsets = [0, 2], sizes = [2, 1], strides = [1, 1]} : vector<2x8xi32> to vector<2x1xi32>
    %c0_i32_157 = arith.constant 0 : i32
    %416 = vector.broadcast %c0_i32_157 : i32 to vector<2x1xi32>
    %417 = arith.cmpi sgt, %415, %416 : vector<2x1xi32>
    %418 = vector.extract_strided_slice %369 {offsets = [2, 0], sizes = [1, 15], strides = [1, 1]} : vector<16x15xf32> to vector<1x15xf32>
    %419 = vector.extract_strided_slice %369 {offsets = [10, 0], sizes = [1, 15], strides = [1, 1]} : vector<16x15xf32> to vector<1x15xf32>
    %420 = tpu.concatenate %418, %419 in 0 : vector<1x15xf32>, vector<1x15xf32> -> vector<2x15xf32>
    %421 = arith.addf %408, %420 : vector<2x15xf32>
    %422 = vector.shape_cast %417 : vector<2x1xi1> to vector<2x1xi1>
    %423 = vector.broadcast %422 : vector<2x1xi1> to vector<2x15xi1>
    %424 = arith.select %423, %421, %402 : vector<2x15xi1>, vector<2x15xf32>
    %425 = vector.shape_cast %424 : vector<2x15xf32> to vector<2x1x15xf32>
    %426 = vector.shape_cast %370 : vector<15x15xf32> to vector<1x15x15xf32>
    %427 = vector.broadcast %425 : vector<2x1x15xf32> to vector<2x15x15xf32>
    %428 = vector.broadcast %426 : vector<1x15x15xf32> to vector<2x15x15xf32>
    %429 = arith.addf %427, %428 : vector<2x15x15xf32>
    %cst_158 = arith.constant dense<0xFF800000> : vector<2x15xf32>
    %430 = vector.multi_reduction <maximumf>, %429, %cst_158 [2] : vector<2x15x15xf32> to vector<2x15xf32>
    %431 = vector.shape_cast %430 : vector<2x15xf32> to vector<2x15x1xf32>
    %432 = vector.broadcast %431 : vector<2x15x1xf32> to vector<2x15x15xf32>
    %433 = arith.cmpf oeq, %429, %432 : vector<2x15x15xf32>
    %cst_159 = arith.constant 1.500000e+01 : f32
    %434 = vector.broadcast %cst_159 : f32 to vector<2x15x15xf32>
    %435 = arith.select %433, %372, %434 : vector<2x15x15xi1>, vector<2x15x15xf32>
    %cst_160 = arith.constant dense<0x7F800000> : vector<2x15xf32>
    %436 = vector.multi_reduction <minimumf>, %435, %cst_160 [2] : vector<2x15x15xf32> to vector<2x15xf32>
    %437 = vector.extract_strided_slice %48 {offsets = [0, 3], sizes = [2, 1], strides = [1, 1]} : vector<2x8xi32> to vector<2x1xi32>
    %c0_i32_161 = arith.constant 0 : i32
    %438 = vector.broadcast %c0_i32_161 : i32 to vector<2x1xi32>
    %439 = arith.cmpi sgt, %437, %438 : vector<2x1xi32>
    %440 = vector.extract_strided_slice %369 {offsets = [3, 0], sizes = [1, 15], strides = [1, 1]} : vector<16x15xf32> to vector<1x15xf32>
    %441 = vector.extract_strided_slice %369 {offsets = [11, 0], sizes = [1, 15], strides = [1, 1]} : vector<16x15xf32> to vector<1x15xf32>
    %442 = tpu.concatenate %440, %441 in 0 : vector<1x15xf32>, vector<1x15xf32> -> vector<2x15xf32>
    %443 = arith.addf %430, %442 : vector<2x15xf32>
    %444 = vector.shape_cast %439 : vector<2x1xi1> to vector<2x1xi1>
    %445 = vector.broadcast %444 : vector<2x1xi1> to vector<2x15xi1>
    %446 = arith.select %445, %443, %424 : vector<2x15xi1>, vector<2x15xf32>
    %447 = vector.shape_cast %446 : vector<2x15xf32> to vector<2x1x15xf32>
    %448 = vector.shape_cast %370 : vector<15x15xf32> to vector<1x15x15xf32>
    %449 = vector.broadcast %447 : vector<2x1x15xf32> to vector<2x15x15xf32>
    %450 = vector.broadcast %448 : vector<1x15x15xf32> to vector<2x15x15xf32>
    %451 = arith.addf %449, %450 : vector<2x15x15xf32>
    %cst_162 = arith.constant dense<0xFF800000> : vector<2x15xf32>
    %452 = vector.multi_reduction <maximumf>, %451, %cst_162 [2] : vector<2x15x15xf32> to vector<2x15xf32>
    %453 = vector.shape_cast %452 : vector<2x15xf32> to vector<2x15x1xf32>
    %454 = vector.broadcast %453 : vector<2x15x1xf32> to vector<2x15x15xf32>
    %455 = arith.cmpf oeq, %451, %454 : vector<2x15x15xf32>
    %cst_163 = arith.constant 1.500000e+01 : f32
    %456 = vector.broadcast %cst_163 : f32 to vector<2x15x15xf32>
    %457 = arith.select %455, %372, %456 : vector<2x15x15xi1>, vector<2x15x15xf32>
    %cst_164 = arith.constant dense<0x7F800000> : vector<2x15xf32>
    %458 = vector.multi_reduction <minimumf>, %457, %cst_164 [2] : vector<2x15x15xf32> to vector<2x15xf32>
    %459 = vector.extract_strided_slice %48 {offsets = [0, 4], sizes = [2, 1], strides = [1, 1]} : vector<2x8xi32> to vector<2x1xi32>
    %c0_i32_165 = arith.constant 0 : i32
    %460 = vector.broadcast %c0_i32_165 : i32 to vector<2x1xi32>
    %461 = arith.cmpi sgt, %459, %460 : vector<2x1xi32>
    %462 = vector.extract_strided_slice %369 {offsets = [4, 0], sizes = [1, 15], strides = [1, 1]} : vector<16x15xf32> to vector<1x15xf32>
    %463 = vector.extract_strided_slice %369 {offsets = [12, 0], sizes = [1, 15], strides = [1, 1]} : vector<16x15xf32> to vector<1x15xf32>
    %464 = tpu.concatenate %462, %463 in 0 : vector<1x15xf32>, vector<1x15xf32> -> vector<2x15xf32>
    %465 = arith.addf %452, %464 : vector<2x15xf32>
    %466 = vector.shape_cast %461 : vector<2x1xi1> to vector<2x1xi1>
    %467 = vector.broadcast %466 : vector<2x1xi1> to vector<2x15xi1>
    %468 = arith.select %467, %465, %446 : vector<2x15xi1>, vector<2x15xf32>
    %469 = vector.shape_cast %468 : vector<2x15xf32> to vector<2x1x15xf32>
    %470 = vector.shape_cast %370 : vector<15x15xf32> to vector<1x15x15xf32>
    %471 = vector.broadcast %469 : vector<2x1x15xf32> to vector<2x15x15xf32>
    %472 = vector.broadcast %470 : vector<1x15x15xf32> to vector<2x15x15xf32>
    %473 = arith.addf %471, %472 : vector<2x15x15xf32>
    %cst_166 = arith.constant dense<0xFF800000> : vector<2x15xf32>
    %474 = vector.multi_reduction <maximumf>, %473, %cst_166 [2] : vector<2x15x15xf32> to vector<2x15xf32>
    %475 = vector.shape_cast %474 : vector<2x15xf32> to vector<2x15x1xf32>
    %476 = vector.broadcast %475 : vector<2x15x1xf32> to vector<2x15x15xf32>
    %477 = arith.cmpf oeq, %473, %476 : vector<2x15x15xf32>
    %cst_167 = arith.constant 1.500000e+01 : f32
    %478 = vector.broadcast %cst_167 : f32 to vector<2x15x15xf32>
    %479 = arith.select %477, %372, %478 : vector<2x15x15xi1>, vector<2x15x15xf32>
    %cst_168 = arith.constant dense<0x7F800000> : vector<2x15xf32>
    %480 = vector.multi_reduction <minimumf>, %479, %cst_168 [2] : vector<2x15x15xf32> to vector<2x15xf32>
    %481 = vector.extract_strided_slice %48 {offsets = [0, 5], sizes = [2, 1], strides = [1, 1]} : vector<2x8xi32> to vector<2x1xi32>
    %c0_i32_169 = arith.constant 0 : i32
    %482 = vector.broadcast %c0_i32_169 : i32 to vector<2x1xi32>
    %483 = arith.cmpi sgt, %481, %482 : vector<2x1xi32>
    %484 = vector.extract_strided_slice %369 {offsets = [5, 0], sizes = [1, 15], strides = [1, 1]} : vector<16x15xf32> to vector<1x15xf32>
    %485 = vector.extract_strided_slice %369 {offsets = [13, 0], sizes = [1, 15], strides = [1, 1]} : vector<16x15xf32> to vector<1x15xf32>
    %486 = tpu.concatenate %484, %485 in 0 : vector<1x15xf32>, vector<1x15xf32> -> vector<2x15xf32>
    %487 = arith.addf %474, %486 : vector<2x15xf32>
    %488 = vector.shape_cast %483 : vector<2x1xi1> to vector<2x1xi1>
    %489 = vector.broadcast %488 : vector<2x1xi1> to vector<2x15xi1>
    %490 = arith.select %489, %487, %468 : vector<2x15xi1>, vector<2x15xf32>
    %491 = vector.shape_cast %490 : vector<2x15xf32> to vector<2x1x15xf32>
    %492 = vector.shape_cast %370 : vector<15x15xf32> to vector<1x15x15xf32>
    %493 = vector.broadcast %491 : vector<2x1x15xf32> to vector<2x15x15xf32>
    %494 = vector.broadcast %492 : vector<1x15x15xf32> to vector<2x15x15xf32>
    %495 = arith.addf %493, %494 : vector<2x15x15xf32>
    %cst_170 = arith.constant dense<0xFF800000> : vector<2x15xf32>
    %496 = vector.multi_reduction <maximumf>, %495, %cst_170 [2] : vector<2x15x15xf32> to vector<2x15xf32>
    %497 = vector.shape_cast %496 : vector<2x15xf32> to vector<2x15x1xf32>
    %498 = vector.broadcast %497 : vector<2x15x1xf32> to vector<2x15x15xf32>
    %499 = arith.cmpf oeq, %495, %498 : vector<2x15x15xf32>
    %cst_171 = arith.constant 1.500000e+01 : f32
    %500 = vector.broadcast %cst_171 : f32 to vector<2x15x15xf32>
    %501 = arith.select %499, %372, %500 : vector<2x15x15xi1>, vector<2x15x15xf32>
    %cst_172 = arith.constant dense<0x7F800000> : vector<2x15xf32>
    %502 = vector.multi_reduction <minimumf>, %501, %cst_172 [2] : vector<2x15x15xf32> to vector<2x15xf32>
    %503 = vector.extract_strided_slice %48 {offsets = [0, 6], sizes = [2, 1], strides = [1, 1]} : vector<2x8xi32> to vector<2x1xi32>
    %c0_i32_173 = arith.constant 0 : i32
    %504 = vector.broadcast %c0_i32_173 : i32 to vector<2x1xi32>
    %505 = arith.cmpi sgt, %503, %504 : vector<2x1xi32>
    %506 = vector.extract_strided_slice %369 {offsets = [6, 0], sizes = [1, 15], strides = [1, 1]} : vector<16x15xf32> to vector<1x15xf32>
    %507 = vector.extract_strided_slice %369 {offsets = [14, 0], sizes = [1, 15], strides = [1, 1]} : vector<16x15xf32> to vector<1x15xf32>
    %508 = tpu.concatenate %506, %507 in 0 : vector<1x15xf32>, vector<1x15xf32> -> vector<2x15xf32>
    %509 = arith.addf %496, %508 : vector<2x15xf32>
    %510 = vector.shape_cast %505 : vector<2x1xi1> to vector<2x1xi1>
    %511 = vector.broadcast %510 : vector<2x1xi1> to vector<2x15xi1>
    %512 = arith.select %511, %509, %490 : vector<2x15xi1>, vector<2x15xf32>
    %513 = vector.shape_cast %512 : vector<2x15xf32> to vector<2x1x15xf32>
    %514 = vector.shape_cast %370 : vector<15x15xf32> to vector<1x15x15xf32>
    %515 = vector.broadcast %513 : vector<2x1x15xf32> to vector<2x15x15xf32>
    %516 = vector.broadcast %514 : vector<1x15x15xf32> to vector<2x15x15xf32>
    %517 = arith.addf %515, %516 : vector<2x15x15xf32>
    %cst_174 = arith.constant dense<0xFF800000> : vector<2x15xf32>
    %518 = vector.multi_reduction <maximumf>, %517, %cst_174 [2] : vector<2x15x15xf32> to vector<2x15xf32>
    %519 = vector.shape_cast %518 : vector<2x15xf32> to vector<2x15x1xf32>
    %520 = vector.broadcast %519 : vector<2x15x1xf32> to vector<2x15x15xf32>
    %521 = arith.cmpf oeq, %517, %520 : vector<2x15x15xf32>
    %cst_175 = arith.constant 1.500000e+01 : f32
    %522 = vector.broadcast %cst_175 : f32 to vector<2x15x15xf32>
    %523 = arith.select %521, %372, %522 : vector<2x15x15xi1>, vector<2x15x15xf32>
    %cst_176 = arith.constant dense<0x7F800000> : vector<2x15xf32>
    %524 = vector.multi_reduction <minimumf>, %523, %cst_176 [2] : vector<2x15x15xf32> to vector<2x15xf32>
    %525 = vector.extract_strided_slice %48 {offsets = [0, 7], sizes = [2, 1], strides = [1, 1]} : vector<2x8xi32> to vector<2x1xi32>
    %c0_i32_177 = arith.constant 0 : i32
    %526 = vector.broadcast %c0_i32_177 : i32 to vector<2x1xi32>
    %527 = arith.cmpi sgt, %525, %526 : vector<2x1xi32>
    %528 = vector.extract_strided_slice %369 {offsets = [7, 0], sizes = [1, 15], strides = [1, 1]} : vector<16x15xf32> to vector<1x15xf32>
    %529 = vector.extract_strided_slice %369 {offsets = [15, 0], sizes = [1, 15], strides = [1, 1]} : vector<16x15xf32> to vector<1x15xf32>
    %530 = tpu.concatenate %528, %529 in 0 : vector<1x15xf32>, vector<1x15xf32> -> vector<2x15xf32>
    %531 = arith.addf %518, %530 : vector<2x15xf32>
    %532 = vector.shape_cast %527 : vector<2x1xi1> to vector<2x1xi1>
    %533 = vector.broadcast %532 : vector<2x1xi1> to vector<2x15xi1>
    %534 = arith.select %533, %531, %512 : vector<2x15xi1>, vector<2x15xf32>
    %c0_178 = arith.constant 0 : index
    %c0_179 = arith.constant 0 : index
    %535 = vector.load %arg23[%c0_178, %c0_179] : memref<1x15xf32, #tpu.memory_space<vmem>>, vector<1x15xf32>
    %536 = vector.broadcast %535 : vector<1x15xf32> to vector<2x15xf32>
    %537 = arith.addf %534, %536 : vector<2x15xf32>
    %cst_180 = arith.constant dense<0xFF800000> : vector<2xf32>
    %538 = vector.multi_reduction <maximumf>, %537, %cst_180 [1] : vector<2x15xf32> to vector<2xf32>
    %539 = vector.shape_cast %538 : vector<2xf32> to vector<2x1xf32>
    %540 = vector.broadcast %539 : vector<2x1xf32> to vector<2x15xf32>
    %541 = arith.cmpf oeq, %537, %540 : vector<2x15xf32>
    %cst_181 = arith.constant 1.500000e+01 : f32
    %542 = vector.broadcast %cst_181 : f32 to vector<2x15xf32>
    %543 = arith.select %541, %374, %542 : vector<2x15xi1>, vector<2x15xf32>
    %cst_182 = arith.constant dense<0x7F800000> : vector<2xf32>
    %544 = vector.multi_reduction <minimumf>, %543, %cst_182 [1] : vector<2x15xf32> to vector<2xf32>
    %545 = vector.shape_cast %544 : vector<2xf32> to vector<2x1xf32>
    %546 = vector.extract_strided_slice %48 {offsets = [0, 7], sizes = [2, 1], strides = [1, 1]} : vector<2x8xi32> to vector<2x1xi32>
    %c0_i32_183 = arith.constant 0 : i32
    %547 = vector.broadcast %c0_i32_183 : i32 to vector<2x1xi32>
    %548 = arith.cmpi sgt, %546, %547 : vector<2x1xi32>
    %cst_184 = arith.constant 0.000000e+00 : f32
    %549 = vector.broadcast %cst_184 : f32 to vector<2x1xf32>
    %550 = arith.select %548, %545, %549 : vector<2x1xi1>, vector<2x1xf32>
    %551 = vector.broadcast %545 : vector<2x1xf32> to vector<2x15xf32>
    %552 = arith.cmpf oeq, %374, %551 : vector<2x15xf32>
    %cst_185 = arith.constant 0.000000e+00 : f32
    %553 = vector.broadcast %cst_185 : f32 to vector<2x15xf32>
    %554 = arith.select %552, %524, %553 : vector<2x15xi1>, vector<2x15xf32>
    %cst_186 = arith.constant dense<0.000000e+00> : vector<2xf32>
    %555 = vector.multi_reduction <add>, %554, %cst_186 [1] : vector<2x15xf32> to vector<2xf32>
    %556 = vector.shape_cast %555 : vector<2xf32> to vector<2x1xf32>
    %557 = arith.select %548, %556, %545 : vector<2x1xi1>, vector<2x1xf32>
    %558 = vector.extract_strided_slice %48 {offsets = [0, 6], sizes = [2, 1], strides = [1, 1]} : vector<2x8xi32> to vector<2x1xi32>
    %c0_i32_187 = arith.constant 0 : i32
    %559 = vector.broadcast %c0_i32_187 : i32 to vector<2x1xi32>
    %560 = arith.cmpi sgt, %558, %559 : vector<2x1xi32>
    %cst_188 = arith.constant 0.000000e+00 : f32
    %561 = vector.broadcast %cst_188 : f32 to vector<2x1xf32>
    %562 = arith.select %560, %557, %561 : vector<2x1xi1>, vector<2x1xf32>
    %563 = vector.broadcast %557 : vector<2x1xf32> to vector<2x15xf32>
    %564 = arith.cmpf oeq, %374, %563 : vector<2x15xf32>
    %cst_189 = arith.constant 0.000000e+00 : f32
    %565 = vector.broadcast %cst_189 : f32 to vector<2x15xf32>
    %566 = arith.select %564, %502, %565 : vector<2x15xi1>, vector<2x15xf32>
    %cst_190 = arith.constant dense<0.000000e+00> : vector<2xf32>
    %567 = vector.multi_reduction <add>, %566, %cst_190 [1] : vector<2x15xf32> to vector<2xf32>
    %568 = vector.shape_cast %567 : vector<2xf32> to vector<2x1xf32>
    %569 = arith.select %560, %568, %557 : vector<2x1xi1>, vector<2x1xf32>
    %570 = vector.extract_strided_slice %48 {offsets = [0, 5], sizes = [2, 1], strides = [1, 1]} : vector<2x8xi32> to vector<2x1xi32>
    %c0_i32_191 = arith.constant 0 : i32
    %571 = vector.broadcast %c0_i32_191 : i32 to vector<2x1xi32>
    %572 = arith.cmpi sgt, %570, %571 : vector<2x1xi32>
    %cst_192 = arith.constant 0.000000e+00 : f32
    %573 = vector.broadcast %cst_192 : f32 to vector<2x1xf32>
    %574 = arith.select %572, %569, %573 : vector<2x1xi1>, vector<2x1xf32>
    %575 = vector.broadcast %569 : vector<2x1xf32> to vector<2x15xf32>
    %576 = arith.cmpf oeq, %374, %575 : vector<2x15xf32>
    %cst_193 = arith.constant 0.000000e+00 : f32
    %577 = vector.broadcast %cst_193 : f32 to vector<2x15xf32>
    %578 = arith.select %576, %480, %577 : vector<2x15xi1>, vector<2x15xf32>
    %cst_194 = arith.constant dense<0.000000e+00> : vector<2xf32>
    %579 = vector.multi_reduction <add>, %578, %cst_194 [1] : vector<2x15xf32> to vector<2xf32>
    %580 = vector.shape_cast %579 : vector<2xf32> to vector<2x1xf32>
    %581 = arith.select %572, %580, %569 : vector<2x1xi1>, vector<2x1xf32>
    %582 = vector.extract_strided_slice %48 {offsets = [0, 4], sizes = [2, 1], strides = [1, 1]} : vector<2x8xi32> to vector<2x1xi32>
    %c0_i32_195 = arith.constant 0 : i32
    %583 = vector.broadcast %c0_i32_195 : i32 to vector<2x1xi32>
    %584 = arith.cmpi sgt, %582, %583 : vector<2x1xi32>
    %cst_196 = arith.constant 0.000000e+00 : f32
    %585 = vector.broadcast %cst_196 : f32 to vector<2x1xf32>
    %586 = arith.select %584, %581, %585 : vector<2x1xi1>, vector<2x1xf32>
    %587 = vector.broadcast %581 : vector<2x1xf32> to vector<2x15xf32>
    %588 = arith.cmpf oeq, %374, %587 : vector<2x15xf32>
    %cst_197 = arith.constant 0.000000e+00 : f32
    %589 = vector.broadcast %cst_197 : f32 to vector<2x15xf32>
    %590 = arith.select %588, %458, %589 : vector<2x15xi1>, vector<2x15xf32>
    %cst_198 = arith.constant dense<0.000000e+00> : vector<2xf32>
    %591 = vector.multi_reduction <add>, %590, %cst_198 [1] : vector<2x15xf32> to vector<2xf32>
    %592 = vector.shape_cast %591 : vector<2xf32> to vector<2x1xf32>
    %593 = arith.select %584, %592, %581 : vector<2x1xi1>, vector<2x1xf32>
    %594 = vector.extract_strided_slice %48 {offsets = [0, 3], sizes = [2, 1], strides = [1, 1]} : vector<2x8xi32> to vector<2x1xi32>
    %c0_i32_199 = arith.constant 0 : i32
    %595 = vector.broadcast %c0_i32_199 : i32 to vector<2x1xi32>
    %596 = arith.cmpi sgt, %594, %595 : vector<2x1xi32>
    %cst_200 = arith.constant 0.000000e+00 : f32
    %597 = vector.broadcast %cst_200 : f32 to vector<2x1xf32>
    %598 = arith.select %596, %593, %597 : vector<2x1xi1>, vector<2x1xf32>
    %599 = vector.broadcast %593 : vector<2x1xf32> to vector<2x15xf32>
    %600 = arith.cmpf oeq, %374, %599 : vector<2x15xf32>
    %cst_201 = arith.constant 0.000000e+00 : f32
    %601 = vector.broadcast %cst_201 : f32 to vector<2x15xf32>
    %602 = arith.select %600, %436, %601 : vector<2x15xi1>, vector<2x15xf32>
    %cst_202 = arith.constant dense<0.000000e+00> : vector<2xf32>
    %603 = vector.multi_reduction <add>, %602, %cst_202 [1] : vector<2x15xf32> to vector<2xf32>
    %604 = vector.shape_cast %603 : vector<2xf32> to vector<2x1xf32>
    %605 = arith.select %596, %604, %593 : vector<2x1xi1>, vector<2x1xf32>
    %606 = vector.extract_strided_slice %48 {offsets = [0, 2], sizes = [2, 1], strides = [1, 1]} : vector<2x8xi32> to vector<2x1xi32>
    %c0_i32_203 = arith.constant 0 : i32
    %607 = vector.broadcast %c0_i32_203 : i32 to vector<2x1xi32>
    %608 = arith.cmpi sgt, %606, %607 : vector<2x1xi32>
    %cst_204 = arith.constant 0.000000e+00 : f32
    %609 = vector.broadcast %cst_204 : f32 to vector<2x1xf32>
    %610 = arith.select %608, %605, %609 : vector<2x1xi1>, vector<2x1xf32>
    %611 = vector.broadcast %605 : vector<2x1xf32> to vector<2x15xf32>
    %612 = arith.cmpf oeq, %374, %611 : vector<2x15xf32>
    %cst_205 = arith.constant 0.000000e+00 : f32
    %613 = vector.broadcast %cst_205 : f32 to vector<2x15xf32>
    %614 = arith.select %612, %414, %613 : vector<2x15xi1>, vector<2x15xf32>
    %cst_206 = arith.constant dense<0.000000e+00> : vector<2xf32>
    %615 = vector.multi_reduction <add>, %614, %cst_206 [1] : vector<2x15xf32> to vector<2xf32>
    %616 = vector.shape_cast %615 : vector<2xf32> to vector<2x1xf32>
    %617 = arith.select %608, %616, %605 : vector<2x1xi1>, vector<2x1xf32>
    %618 = vector.extract_strided_slice %48 {offsets = [0, 1], sizes = [2, 1], strides = [1, 1]} : vector<2x8xi32> to vector<2x1xi32>
    %c0_i32_207 = arith.constant 0 : i32
    %619 = vector.broadcast %c0_i32_207 : i32 to vector<2x1xi32>
    %620 = arith.cmpi sgt, %618, %619 : vector<2x1xi32>
    %cst_208 = arith.constant 0.000000e+00 : f32
    %621 = vector.broadcast %cst_208 : f32 to vector<2x1xf32>
    %622 = arith.select %620, %617, %621 : vector<2x1xi1>, vector<2x1xf32>
    %623 = vector.broadcast %617 : vector<2x1xf32> to vector<2x15xf32>
    %624 = arith.cmpf oeq, %374, %623 : vector<2x15xf32>
    %cst_209 = arith.constant 0.000000e+00 : f32
    %625 = vector.broadcast %cst_209 : f32 to vector<2x15xf32>
    %626 = arith.select %624, %392, %625 : vector<2x15xi1>, vector<2x15xf32>
    %cst_210 = arith.constant dense<0.000000e+00> : vector<2xf32>
    %627 = vector.multi_reduction <add>, %626, %cst_210 [1] : vector<2x15xf32> to vector<2xf32>
    %628 = vector.shape_cast %627 : vector<2xf32> to vector<2x1xf32>
    %629 = arith.select %620, %628, %617 : vector<2x1xi1>, vector<2x1xf32>
    %630 = vector.extract_strided_slice %48 {offsets = [0, 0], sizes = [2, 1], strides = [1, 1]} : vector<2x8xi32> to vector<2x1xi32>
    %c0_i32_211 = arith.constant 0 : i32
    %631 = vector.broadcast %c0_i32_211 : i32 to vector<2x1xi32>
    %632 = arith.cmpi sgt, %630, %631 : vector<2x1xi32>
    %cst_212 = arith.constant 0.000000e+00 : f32
    %633 = vector.broadcast %cst_212 : f32 to vector<2x1xf32>
    %634 = arith.select %632, %629, %633 : vector<2x1xi1>, vector<2x1xf32>
    %635 = tpu.concatenate %634, %622, %610, %598, %586, %574, %562, %550 in 1 : vector<2x1xf32>, vector<2x1xf32>, vector<2x1xf32>, vector<2x1xf32>, vector<2x1xf32>, vector<2x1xf32>, vector<2x1xf32>, vector<2x1xf32> -> vector<2x8xf32>
    %636 = arith.fptosi %635 : vector<2x8xf32> to vector<2x8xi32>
    %c0_213 = arith.constant 0 : index
    %c0_214 = arith.constant 0 : index
    %637 = vector.load %arg25[%c0_213, %c0_214] : memref<2x8xi32, #tpu.memory_space<vmem>>, vector<2x8xi32>
    tpu.vector_store %arg25[%c0_213, %c0_214], %636 {strides = array<i32>} : memref<2x8xi32, #tpu.memory_space<vmem>>, vector<2x8xi32>,
    return
  }
}

</mosaic_0001>

<llo_original>
// kernel: bert_crf_forward.1
$region0: #{bert_crf_forward.1}
  #allocation0 [shape = 'u32[]', space=smem, size = 0x4, offset = 0x4, fixed_abs, tag = 'smem constant byte address 0x4 - core index']
  #allocation1 [shape = 'u32[144,128]{1,0:T(1,128)}', space=vmem, size = 0x12000, scoped, tag = 'internal scratch']
  %s0 = inlined_call_operand.vmem [shape: s32[16,1], index: 0, kind: input, shape index: {}]
  %s1 = inlined_call_operand.vmem [shape: s32[16,1], index: 1, kind: input, shape index: {}]
  %s2 = inlined_call_operand.vmem [shape: s32[2,8], index: 2, kind: input, shape index: {}]
  %s3 = inlined_call_operand.vmem [shape: f32[100,32], index: 3, kind: input, shape index: {}]
  %s4 = inlined_call_operand.vmem [shape: f32[32,32], index: 4, kind: input, shape index: {}]
  %s5 = inlined_call_operand.vmem [shape: f32[2,32], index: 5, kind: input, shape index: {}]
  %s6 = inlined_call_operand.vmem [shape: f32[1,32], index: 6, kind: input, shape index: {}]
  %s7 = inlined_call_operand.vmem [shape: f32[1,32], index: 7, kind: input, shape index: {}]
  %s8 = inlined_call_operand.vmem [shape: f32[2,32,96], index: 8, kind: input, shape index: {}]
  %s9 = inlined_call_operand.vmem [shape: f32[2,1,96], index: 9, kind: input, shape index: {}]
  %s10 = inlined_call_operand.vmem [shape: f32[2,32,32], index: 10, kind: input, shape index: {}]
  %s11 = inlined_call_operand.vmem [shape: f32[2,1,32], index: 11, kind: input, shape index: {}]
  %s12 = inlined_call_operand.vmem [shape: f32[2,1,32], index: 12, kind: input, shape index: {}]
  %s13 = inlined_call_operand.vmem [shape: f32[2,1,32], index: 13, kind: input, shape index: {}]
  %s14 = inlined_call_operand.vmem [shape: f32[2,32,64], index: 14, kind: input, shape index: {}]
  %s15 = inlined_call_operand.vmem [shape: f32[2,1,64], index: 15, kind: input, shape index: {}]
  %s16 = inlined_call_operand.vmem [shape: f32[2,64,32], index: 16, kind: input, shape index: {}]
  %s17 = inlined_call_operand.vmem [shape: f32[2,1,32], index: 17, kind: input, shape index: {}]
  %s18 = inlined_call_operand.vmem [shape: f32[2,1,32], index: 18, kind: input, shape index: {}]
  %s19 = inlined_call_operand.vmem [shape: f32[2,1,32], index: 19, kind: input, shape index: {}]
  %s20 = inlined_call_operand.vmem [shape: f32[32,15], index: 20, kind: input, shape index: {}]
  %s21 = inlined_call_operand.vmem [shape: f32[1,15], index: 21, kind: input, shape index: {}]
  %s22 = inlined_call_operand.vmem [shape: f32[1,15], index: 22, kind: input, shape index: {}]
  %s23 = inlined_call_operand.vmem [shape: f32[1,15], index: 23, kind: input, shape index: {}]
  %s24 = inlined_call_operand.vmem [shape: f32[15,15], index: 24, kind: input, shape index: {}]
  %s25 = inlined_call_operand.hbm [shape: s32[2,8], index: 25, kind: output, shape index: {}]
  %s26 = sld [smem:[#allocation0]]
  $region110: #{bert_crf_forward.1} parent=0
    _
  %s28 = ssub.s32 1, %s26
  %s29 = scalar_select 0, %s28, %s26
  $region1: #{bert_crf_forward.1} parent=0
    #allocation2 [shape = 'u8[1024]{0}', space=vmem, size = 0x400, scoped, tag = 'output window, operand 0, single buffered']
    #allocation3 [shape = 's32[1]{0}', space=sflag, size = 0x4, scoped, tag = 'scoped memory for bert_crf_forward.1']
    %30 = vsyncpa [#allocation3], 0
    // Predicated region
    $region2: #{bert_crf_forward.1} parent=1 // pred_check
      _
    $region3: #{bert_crf_forward.1} parent=1 // pred_check_branch
      %32 = sbr.rel (0) target = $region5
    $region4: #{bert_crf_forward.1} parent=1 // pred_region
      _
    $region5: #{bert_crf_forward.1} parent=1 // pred_fallthru
      _
    // Predicated region
    $region6: #{bert_crf_forward.1} parent=1 // pred_check
      _
    $region7: #{bert_crf_forward.1} parent=1 // pred_check_branch
      %34 = sbr.rel (0) target = $region9
    $region8: #{bert_crf_forward.1} parent=1 // pred_region
      _
    $region9: #{bert_crf_forward.1} parent=1 // pred_fallthru
      _
    // Predicated region
    $region10: #{bert_crf_forward.1} parent=1 // pred_check
      _
    $region11: #{bert_crf_forward.1} parent=1 // pred_check_branch
      %36 = sbr.rel (0) target = $region13
    $region12: #{bert_crf_forward.1} parent=1 // pred_region
      _
    $region13: #{bert_crf_forward.1} parent=1 // pred_fallthru
      _
    // Predicated region
    $region14: #{bert_crf_forward.1} parent=1 // pred_check
      _
    $region15: #{bert_crf_forward.1} parent=1 // pred_check_branch
      %38 = sbr.rel (0) target = $region17
    $region16: #{bert_crf_forward.1} parent=1 // pred_region
      _
    $region17: #{bert_crf_forward.1} parent=1 // pred_fallthru
      _
    // Predicated region
    $region18: #{bert_crf_forward.1} parent=1 // pred_check
      _
    $region19: #{bert_crf_forward.1} parent=1 // pred_check_branch
      %40 = sbr.rel (0) target = $region21
    $region20: #{bert_crf_forward.1} parent=1 // pred_region
      _
    $region21: #{bert_crf_forward.1} parent=1 // pred_fallthru
      _
    // Predicated region
    $region22: #{bert_crf_forward.1} parent=1 // pred_check
      _
    $region23: #{bert_crf_forward.1} parent=1 // pred_check_branch
      %42 = sbr.rel (0) target = $region25
    $region24: #{bert_crf_forward.1} parent=1 // pred_region
      _
    $region25: #{bert_crf_forward.1} parent=1 // pred_fallthru
      _
    // Predicated region
    $region26: #{bert_crf_forward.1} parent=1 // pred_check
      _
    $region27: #{bert_crf_forward.1} parent=1 // pred_check_branch
      %44 = sbr.rel (0) target = $region29
    $region28: #{bert_crf_forward.1} parent=1 // pred_region
      _
    $region29: #{bert_crf_forward.1} parent=1 // pred_fallthru
      _
    // Predicated region
    $region30: #{bert_crf_forward.1} parent=1 // pred_check
      _
    $region31: #{bert_crf_forward.1} parent=1 // pred_check_branch
      %46 = sbr.rel (0) target = $region33
    $region32: #{bert_crf_forward.1} parent=1 // pred_region
      _
    $region33: #{bert_crf_forward.1} parent=1 // pred_fallthru
      _
    // Predicated region
    $region34: #{bert_crf_forward.1} parent=1 // pred_check
      _
    $region35: #{bert_crf_forward.1} parent=1 // pred_check_branch
      %48 = sbr.rel (0) target = $region37
    $region36: #{bert_crf_forward.1} parent=1 // pred_region
      _
    $region37: #{bert_crf_forward.1} parent=1 // pred_fallthru
      _
    // Predicated region
    $region38: #{bert_crf_forward.1} parent=1 // pred_check
      _
    $region39: #{bert_crf_forward.1} parent=1 // pred_check_branch
      %50 = sbr.rel (0) target = $region41
    $region40: #{bert_crf_forward.1} parent=1 // pred_region
      _
    $region41: #{bert_crf_forward.1} parent=1 // pred_fallthru
      _
    // Predicated region
    $region42: #{bert_crf_forward.1} parent=1 // pred_check
      _
    $region43: #{bert_crf_forward.1} parent=1 // pred_check_branch
      %52 = sbr.rel (0) target = $region45
    $region44: #{bert_crf_forward.1} parent=1 // pred_region
      _
    $region45: #{bert_crf_forward.1} parent=1 // pred_fallthru
      _
    // Predicated region
    $region46: #{bert_crf_forward.1} parent=1 // pred_check
      _
    $region47: #{bert_crf_forward.1} parent=1 // pred_check_branch
      %54 = sbr.rel (0) target = $region49
    $region48: #{bert_crf_forward.1} parent=1 // pred_region
      _
    $region49: #{bert_crf_forward.1} parent=1 // pred_fallthru
      _
    // Predicated region
    $region50: #{bert_crf_forward.1} parent=1 // pred_check
      _
    $region51: #{bert_crf_forward.1} parent=1 // pred_check_branch
      %56 = sbr.rel (0) target = $region53
    $region52: #{bert_crf_forward.1} parent=1 // pred_region
      _
    $region53: #{bert_crf_forward.1} parent=1 // pred_fallthru
      _
    // Predicated region
    $region54: #{bert_crf_forward.1} parent=1 // pred_check
      _
    $region55: #{bert_crf_forward.1} parent=1 // pred_check_branch
      %58 = sbr.rel (0) target = $region57
    $region56: #{bert_crf_forward.1} parent=1 // pred_region
      _
    $region57: #{bert_crf_forward.1} parent=1 // pred_fallthru
      _
    // Predicated region
    $region58: #{bert_crf_forward.1} parent=1 // pred_check
      _
    $region59: #{bert_crf_forward.1} parent=1 // pred_check_branch
      %60 = sbr.rel (0) target = $region61
    $region60: #{bert_crf_forward.1} parent=1 // pred_region
      _
    $region61: #{bert_crf_forward.1} parent=1 // pred_fallthru
      _
    // Predicated region
    $region62: #{bert_crf_forward.1} parent=1 // pred_check
      _
    $region63: #{bert_crf_forward.1} parent=1 // pred_check_branch
      %62 = sbr.rel (0) target = $region65
    $region64: #{bert_crf_forward.1} parent=1 // pred_region
      _
    $region65: #{bert_crf_forward.1} parent=1 // pred_fallthru
      _
    // Predicated region
    $region66: #{bert_crf_forward.1} parent=1 // pred_check
      _
    $region67: #{bert_crf_forward.1} parent=1 // pred_check_branch
      %64 = sbr.rel (0) target = $region69
    $region68: #{bert_crf_forward.1} parent=1 // pred_region
      _
    $region69: #{bert_crf_forward.1} parent=1 // pred_fallthru
      _
    // Predicated region
    $region70: #{bert_crf_forward.1} parent=1 // pred_check
      _
    $region71: #{bert_crf_forward.1} parent=1 // pred_check_branch
      %66 = sbr.rel (0) target = $region73
    $region72: #{bert_crf_forward.1} parent=1 // pred_region
      _
    $region73: #{bert_crf_forward.1} parent=1 // pred_fallthru
      _
    // Predicated region
    $region74: #{bert_crf_forward.1} parent=1 // pred_check
      _
    $region75: #{bert_crf_forward.1} parent=1 // pred_check_branch
      %68 = sbr.rel (0) target = $region77
    $region76: #{bert_crf_forward.1} parent=1 // pred_region
      _
    $region77: #{bert_crf_forward.1} parent=1 // pred_fallthru
      _
    // Predicated region
    $region78: #{bert_crf_forward.1} parent=1 // pred_check
      _
    $region79: #{bert_crf_forward.1} parent=1 // pred_check_branch
      %70 = sbr.rel (0) target = $region81
    $region80: #{bert_crf_forward.1} parent=1 // pred_region
      _
    $region81: #{bert_crf_forward.1} parent=1 // pred_fallthru
      _
    // Predicated region
    $region82: #{bert_crf_forward.1} parent=1 // pred_check
      _
    $region83: #{bert_crf_forward.1} parent=1 // pred_check_branch
      %72 = sbr.rel (0) target = $region85
    $region84: #{bert_crf_forward.1} parent=1 // pred_region
      _
    $region85: #{bert_crf_forward.1} parent=1 // pred_fallthru
      _
    // Predicated region
    $region86: #{bert_crf_forward.1} parent=1 // pred_check
      _
    $region87: #{bert_crf_forward.1} parent=1 // pred_check_branch
      %74 = sbr.rel (0) target = $region89
    $region88: #{bert_crf_forward.1} parent=1 // pred_region
      _
    $region89: #{bert_crf_forward.1} parent=1 // pred_fallthru
      _
    // Predicated region
    $region90: #{bert_crf_forward.1} parent=1 // pred_check
      _
    $region91: #{bert_crf_forward.1} parent=1 // pred_check_branch
      %76 = sbr.rel (0) target = $region93
    $region92: #{bert_crf_forward.1} parent=1 // pred_region
      _
    $region93: #{bert_crf_forward.1} parent=1 // pred_fallthru
      _
    // Predicated region
    $region94: #{bert_crf_forward.1} parent=1 // pred_check
      _
    $region95: #{bert_crf_forward.1} parent=1 // pred_check_branch
      %78 = sbr.rel (0) target = $region97
    $region96: #{bert_crf_forward.1} parent=1 // pred_region
      _
    $region97: #{bert_crf_forward.1} parent=1 // pred_fallthru
      _
    // Predicated region
    $region98: #{bert_crf_forward.1} parent=1 // pred_check
      _
    $region99: #{bert_crf_forward.1} parent=1 // pred_check_branch
      %80 = sbr.rel (0) target = $region101
    $region100: #{bert_crf_forward.1} parent=1 // pred_region
      _
    $region101: #{bert_crf_forward.1} parent=1 // pred_fallthru
      _
    %v81 = vld [vmem:[%s0] sm:$0xff]
    %v82 = vld [vmem:[%s0 + $0x8] sm:$0xff]
    %v83 = vld [vmem:[%s1] sm:$0xff]
    %v84 = vld [vmem:[%s1 + $0x8] sm:$0xff]
    %v85 = vlaneseq
    %v86 = vand.u32 %v85, 127
    %87 = vset.pattern.permute.xlu0 0
    %88 = vperm.xlu0 %87, %v81
    %v89 = vpop.permute.xlu0 %88
    %90 = vset.pattern.permute.xlu0 0
    %91 = vperm.xlu0 %90, %v82
    %v92 = vpop.permute.xlu0 %91
    %vm93 = vcmp.eq.s32.totalorder %v89, %v86
    %vm94 = vcmp.eq.s32.totalorder %v92, %v86
    %v95 = vsel %vm93, 1, 0
    %v96 = vsel %vm94, 1, 0
    %v97 = vcvt.s32.f32 %v95
    %v98 = vcvt.s32.f32 %v96
    %v99 = vld [vmem:[%s3] sm:$0xff]
    %v100 = vld [vmem:[%s3 + $0x8] sm:$0xff]
    %v101 = vld [vmem:[%s3 + $0x10] sm:$0xff]
    %v102 = vld [vmem:[%s3 + $0x18] sm:$0xff]
    %v103 = vld [vmem:[%s3 + $0x20] sm:$0xff]
    %v104 = vld [vmem:[%s3 + $0x28] sm:$0xff]
    %v105 = vld [vmem:[%s3 + $0x30] sm:$0xff]
    %v106 = vld [vmem:[%s3 + $0x38] sm:$0xff]
    %v107 = vld [vmem:[%s3 + $0x40] sm:$0xff]
    %v108 = vld [vmem:[%s3 + $0x48] sm:$0xff]
    %v109 = vld [vmem:[%s3 + $0x50] sm:$0xff]
    %v110 = vld [vmem:[%s3 + $0x58] sm:$0xff]
    %v111 = vld [vmem:[%s3 + $0x60] sm:$0xf]
    %v112 = vld [vmem:[%s4] sm:$0xff]
    %vm113 = vcmask 818176
    %v115 = vsel %vm113, %v97, 0
    %v118 = vsel %vm113, %v98, 0
    %vm120 = vcmask 1043456
    %v122 = vsel %vm120, %v111, 0
    %124 = vmatprep.subr.mxu0 0.0
    %125 = vmatpush1.msra.mxu0 %v99
    %126 = vmatprep.subr.mxu0 0.0
    %127 = vmatpush1.msra.mxu0 %v100
    %128 = vmatprep.subr.mxu0 0.0
    %129 = vmatpush1.msra.mxu0 %v101
    %130 = vmatprep.subr.mxu0 0.0
    %131 = vmatpush1.msra.mxu0 %v102
    %132 = vmatprep.subr.mxu0 0.0
    %133 = vmatpush1.msra.mxu0 %v103
    %134 = vmatprep.subr.mxu0 0.0
    %135 = vmatpush1.msra.mxu0 %v104
    %136 = vmatprep.subr.mxu0 0.0
    %137 = vmatpush1.msra.mxu0 %v105
    %138 = vmatprep.subr.mxu0 0.0
    %139 = vmatpush1.msra.mxu0 %v106
    %140 = vmatprep.subr.mxu0 0.0
    %141 = vmatpush1.msra.mxu0 %v107
    %142 = vmatprep.subr.mxu0 0.0
    %143 = vmatpush1.msra.mxu0 %v108
    %144 = vmatprep.subr.mxu0 0.0
    %145 = vmatpush1.msra.mxu0 %v109
    %146 = vmatprep.subr.mxu0 0.0
    %147 = vmatpush1.msra.mxu0 %v110
    %148 = vmatprep.subr.mxu0 0.0
    %149 = vmatpush1.msra.mxu0 %v122
    %150 = vmatprep.subr.mxu0 0.0
    %151 = vmatpush1.msra.mxu0 0.0
    %152 = vmatprep.subr.mxu0 0.0
    %153 = vmatpush1.msra.mxu0 0.0
    %154 = vmatprep.subr.mxu0 0.0
    %155 = vmatpush1.msra.mxu0 0.0
    %156 = vmatprep.subr.mxu0 0.0
    %157 = vmatpush1.msra.mxu0 0.0
    %158 = vmatprep.subr.mxu0 0.0
    %159 = vmatpush1.msra.mxu0 0.0
    %160 = vmatprep.subr.mxu0 0.0
    %161 = vmatpush1.msra.mxu0 0.0
    %162 = vmatprep.subr.mxu0 0.0
    %163 = vmatpush1.msra.mxu0 0.0
    %164 = vmatprep.subr.mxu0 0.0
    %165 = vmatpush1.msra.mxu0 0.0
    %166 = vmatprep.subr.mxu0 0.0
    %167 = vmatpush1.msra.mxu0 0.0
    %168 = vmatprep.subr.mxu0 0.0
    %169 = vmatpush1.msra.mxu0 0.0
    %170 = vmatprep.subr.mxu0 0.0
    %171 = vmatpush1.msra.mxu0 0.0
    %172 = vmatprep.subr.mxu0 0.0
    %173 = vmatpush1.msra.mxu0 0.0
    %174 = vmatprep.subr.mxu0 0.0
    %175 = vmatpush1.msra.mxu0 0.0
    %176 = vmatprep.subr.mxu0 0.0
    %177 = vmatpush1.msra.mxu0 0.0
    %178 = vmatprep.subr.mxu0 0.0
    %179 = vmatpush1.msra.mxu0 0.0
    %180 = vmatprep.subr.mxu0 0.0
    %181 = vmatpush1.msra.mxu0 0.0
    %182 = vmatprep.subr.mxu0 0.0
    %183 = vmatpush1.msra.mxu0 0.0
    %184 = vmatprep.subr.mxu0 0.0
    %185 = vmatpush1.msra.mxu0 0.0
    %186 = vmatprep.subr.mxu0 0.0
    %187 = vmatpush1.msra.mxu0 0.0
    %188 = vmatprep.mubr.f32.mxu0 0.0
    %189 = vmatmul.mubr.f32.gmra.mrb[0].mxu0 %v115
    %v190 = vpop.f32.mrb[0].mxu0
    %v191 = vadd.f32 %v112, %v190
    %v192 = vpop.f32.mrb[0].mxu0
    %193 = vmatprep.mubr.f32.mxu0 0.0
    %194 = vmatmul.mubr.f32.gmra.mrb[0].mxu0 %v118
    %v195 = vpop.f32.mrb[0].mxu0
    %v196 = vadd.f32 %v112, %v195
    %v197 = vpop.f32.mrb[0].mxu0
    %198 = vdwg.mxu0
    %vm199 = vcmp.eq.s32.totalorder %v83, 0
    %vm200 = vcmp.eq.s32.totalorder %v84, 0
    %v201 = vld [vmem:[%s5] sm:$0x1]
    %v202 = vld [vmem:[%s5 + $0x1] sm:$0x1]
    %v203 = vsel %vm199, 1, 0
    %v204 = vsel %vm200, 1, 0
    %205 = vset.pattern.permute.xlu0 0
    %206 = vperm.xlu0 %205, %v203
    %v207 = vpop.permute.xlu0 %206
    %208 = vset.pattern.permute.xlu0 0
    %209 = vperm.xlu0 %208, %v204
    %v210 = vpop.permute.xlu0 %209
    %vm211 = vcmp.eq.s32.totalorder %v207, 1
    %vm212 = vcmp.eq.s32.totalorder %v210, 1
    %v213 = vlaneseq
    %v214 = vshrl.u32 %v213, 7
    %v215 = vsub.s32 0, %v214
    %v216 = vrot.slane %v201, %v215
    %v217 = vlaneseq
    %v218 = vshrl.u32 %v217, 7
    %v219 = vsub.s32 0, %v218
    %v220 = vrot.slane %v202, %v219
    %v221 = vsel %vm211, %v216, %v220
    %v222 = vsel %vm212, %v216, %v220
    %v223 = vadd.f32 %v191, %v221
    %v224 = vadd.f32 %v196, %v222
    %v225 = vld [vmem:[%s6] sm:$0x1]
    %v226 = vld [vmem:[%s7] sm:$0x1]
    %vm227 = vcmask 261120
    %v228 = vsel %vm227, %v223, 0.0
    %229 = vadd.xlane.f32.xlu0 %v228
    %v230 = vpop.xlane.xlu0 %229
    %v231 = vsel %vm227, %v224, 0.0
    %232 = vadd.xlane.f32.xlu0 %v231
    %v233 = vpop.xlane.xlu0 %232
    %v234 = vrcp.pop 32.0
    %v235 = vmul.f32 %v230, %v234
    %v236 = vmul.f32 %v233, %v234
    %v237 = vsub.f32 %v223, %v235
    %v238 = vsub.f32 %v224, %v236
    %v239 = vmul.f32 %v237, %v237
    %v240 = vmul.f32 %v238, %v238
    %v241 = vsel %vm227, %v239, 0.0
    %242 = vadd.xlane.f32.xlu0 %v241
    %v243 = vpop.xlane.xlu0 %242
    %v244 = vsel %vm227, %v240, 0.0
    %245 = vadd.xlane.f32.xlu0 %v244
    %v246 = vpop.xlane.xlu0 %245
    %v247 = vmul.f32 %v243, %v234
    %v248 = vmul.f32 %v246, %v234
    %v249 = vadd.f32 %v247, 1e-12
    %v250 = vadd.f32 %v248, 1e-12
    %v251 = vrsqrt.pop %v249
    %v252 = vrsqrt.pop %v250
    %v253 = vmul.f32 %v237, %v251
    %v254 = vmul.f32 %v238, %v252
    %v256 = vlaneseq
    %v257 = vshrl.u32 %v256, 7
    %v258 = vsub.s32 0, %v257
    %v259 = vrot.slane %v225, %v258
    %v261 = vmul.f32 %v253, %v259
    %v262 = vmul.f32 %v254, %v259
    %v264 = vlaneseq
    %v265 = vshrl.u32 %v264, 7
    %v266 = vsub.s32 0, %v265
    %v267 = vrot.slane %v226, %v266
    %v269 = vadd.f32 %v261, %v267
    %v270 = vadd.f32 %v262, %v267
    %v271 = vld [vmem:[%s2] sm:$0x3]
    %v272 = vcvt.s32.f32 %v271
    %v273 = vsub.f32 1.0, %v272
    %v274 = vmul.f32 %v273, -1e+09
    %v276 = vrot.slane %v274, 1
    %v278 = vld [vmem:[%s8] sm:$0xff]
    %v279 = vld [vmem:[%s8 + $0x8] sm:$0xff]
    %v280 = vld [vmem:[%s8 + $0x10] sm:$0xff]
    %v281 = vld [vmem:[%s8 + $0x18] sm:$0xff]
    %v282 = vld [vmem:[%s9] sm:$0x1]
    %v284 = vlaneseq
    %v285 = vshrl.u32 %v284, 7
    %v286 = vsub.s32 0, %v285
    %v287 = vrot.slane %v282, %v286
    %v290 = vsel %vm227, %v269, 0
    %v293 = vsel %vm227, %v270, 0
    %295 = vmatprep.subr.mxu0 0.0
    %296 = vmatpush1.msra.mxu0 %v278
    %297 = vmatprep.subr.mxu0 0.0
    %298 = vmatpush1.msra.mxu0 %v279
    %299 = vmatprep.subr.mxu0 0.0
    %300 = vmatpush1.msra.mxu0 %v280
    %301 = vmatprep.subr.mxu0 0.0
    %302 = vmatpush1.msra.mxu0 %v281
    %303 = vmatprep.subr.mxu0 0.0
    %304 = vmatpush1.msra.mxu0 0.0
    %305 = vmatprep.subr.mxu0 0.0
    %306 = vmatpush1.msra.mxu0 0.0
    %307 = vmatprep.subr.mxu0 0.0
    %308 = vmatpush1.msra.mxu0 0.0
    %309 = vmatprep.subr.mxu0 0.0
    %310 = vmatpush1.msra.mxu0 0.0
    %311 = vmatprep.subr.mxu0 0.0
    %312 = vmatpush1.msra.mxu0 0.0
    %313 = vmatprep.subr.mxu0 0.0
    %314 = vmatpush1.msra.mxu0 0.0
    %315 = vmatprep.subr.mxu0 0.0
    %316 = vmatpush1.msra.mxu0 0.0
    %317 = vmatprep.subr.mxu0 0.0
    %318 = vmatpush1.msra.mxu0 0.0
    %319 = vmatprep.subr.mxu0 0.0
    %320 = vmatpush1.msra.mxu0 0.0
    %321 = vmatprep.subr.mxu0 0.0
    %322 = vmatpush1.msra.mxu0 0.0
    %323 = vmatprep.subr.mxu0 0.0
    %324 = vmatpush1.msra.mxu0 0.0
    %325 = vmatprep.subr.mxu0 0.0
    %326 = vmatpush1.msra.mxu0 0.0
    %327 = vmatprep.subr.mxu0 0.0
    %328 = vmatpush1.msra.mxu0 0.0
    %329 = vmatprep.subr.mxu0 0.0
    %330 = vmatpush1.msra.mxu0 0.0
    %331 = vmatprep.subr.mxu0 0.0
    %332 = vmatpush1.msra.mxu0 0.0
    %333 = vmatprep.subr.mxu0 0.0
    %334 = vmatpush1.msra.mxu0 0.0
    %335 = vmatprep.subr.mxu0 0.0
    %336 = vmatpush1.msra.mxu0 0.0
    %337 = vmatprep.subr.mxu0 0.0
    %338 = vmatpush1.msra.mxu0 0.0
    %339 = vmatprep.subr.mxu0 0.0
    %340 = vmatpush1.msra.mxu0 0.0
    %341 = vmatprep.subr.mxu0 0.0
    %342 = vmatpush1.msra.mxu0 0.0
    %343 = vmatprep.subr.mxu0 0.0
    %344 = vmatpush1.msra.mxu0 0.0
    %345 = vmatprep.subr.mxu0 0.0
    %346 = vmatpush1.msra.mxu0 0.0
    %347 = vmatprep.subr.mxu0 0.0
    %348 = vmatpush1.msra.mxu0 0.0
    %349 = vmatprep.subr.mxu0 0.0
    %350 = vmatpush1.msra.mxu0 0.0
    %351 = vmatprep.subr.mxu0 0.0
    %352 = vmatpush1.msra.mxu0 0.0
    %353 = vmatprep.subr.mxu0 0.0
    %354 = vmatpush1.msra.mxu0 0.0
    %355 = vmatprep.subr.mxu0 0.0
    %356 = vmatpush1.msra.mxu0 0.0
    %357 = vmatprep.subr.mxu0 0.0
    %358 = vmatpush1.msra.mxu0 0.0
    %359 = vmatprep.mubr.f32.mxu0 0.0
    %360 = vmatmul.mubr.f32.gmra.mrb[0].mxu0 %v290
    %v361 = vpop.f32.mrb[0].mxu0
    %v362 = vadd.f32 %v287, %v361
    %v363 = vpop.f32.mrb[0].mxu0
    %364 = vmatprep.mubr.f32.mxu0 0.0
    %365 = vmatmul.mubr.f32.gmra.mrb[0].mxu0 %v293
    %v366 = vpop.f32.mrb[0].mxu0
    %v367 = vadd.f32 %v287, %v366
    %v368 = vpop.f32.mrb[0].mxu0
    %369 = vdwg.mxu0
    %371 = vrot.lane.b32.xlu0 %v362, 112
    %v372 = vpop.permute.xlu0 %371
    %374 = vrot.lane.b32.xlu0 %v367, 112
    %v375 = vpop.permute.xlu0 %374
    %376 = vrot.lane.b32.xlu0 %v362, 96
    %v377 = vpop.permute.xlu0 %376
    %vm378 = vcmask 130048
    %v379 = vsel %vm378, %v362, 0
    %v381 = vsel %vm378, %v377, 0
    %383 = vmatprep.subr.mxu0 0.0
    %384 = vmatpush1.xpose.msra.mxu0 %v381
    %385 = vmatprep.subr.mxu0 0.0
    %386 = vmatpush1.xpose.msra.mxu0 0.0
    %387 = vmatprep.subr.mxu0 0.0
    %388 = vmatpush1.xpose.msra.mxu0 0.0
    %389 = vmatprep.subr.mxu0 0.0
    %390 = vmatpush1.xpose.msra.mxu0 0.0
    %391 = vmatprep.subr.mxu0 0.0
    %392 = vmatpush1.xpose.msra.mxu0 0.0
    %393 = vmatprep.subr.mxu0 0.0
    %394 = vmatpush1.xpose.msra.mxu0 0.0
    %395 = vmatprep.subr.mxu0 0.0
    %396 = vmatpush1.xpose.msra.mxu0 0.0
    %397 = vmatprep.subr.mxu0 0.0
    %398 = vmatpush1.xpose.msra.mxu0 0.0
    %399 = vmatprep.subr.mxu0 0.0
    %400 = vmatpush1.xpose.msra.mxu0 0.0
    %401 = vmatprep.subr.mxu0 0.0
    %402 = vmatpush1.xpose.msra.mxu0 0.0
    %403 = vmatprep.subr.mxu0 0.0
    %404 = vmatpush1.xpose.msra.mxu0 0.0
    %405 = vmatprep.subr.mxu0 0.0
    %406 = vmatpush1.xpose.msra.mxu0 0.0
    %407 = vmatprep.subr.mxu0 0.0
    %408 = vmatpush1.xpose.msra.mxu0 0.0
    %409 = vmatprep.subr.mxu0 0.0
    %410 = vmatpush1.xpose.msra.mxu0 0.0
    %411 = vmatprep.subr.mxu0 0.0
    %412 = vmatpush1.xpose.msra.mxu0 0.0
    %413 = vmatprep.subr.mxu0 0.0
    %414 = vmatpush1.xpose.msra.mxu0 0.0
    %415 = vmatprep.subr.mxu0 0.0
    %416 = vmatpush1.xpose.msra.mxu0 0.0
    %417 = vmatprep.subr.mxu0 0.0
    %418 = vmatpush1.xpose.msra.mxu0 0.0
    %419 = vmatprep.subr.mxu0 0.0
    %420 = vmatpush1.xpose.msra.mxu0 0.0
    %421 = vmatprep.subr.mxu0 0.0
    %422 = vmatpush1.xpose.msra.mxu0 0.0
    %423 = vmatprep.subr.mxu0 0.0
    %424 = vmatpush1.xpose.msra.mxu0 0.0
    %425 = vmatprep.subr.mxu0 0.0
    %426 = vmatpush1.xpose.msra.mxu0 0.0
    %427 = vmatprep.subr.mxu0 0.0
    %428 = vmatpush1.xpose.msra.mxu0 0.0
    %429 = vmatprep.subr.mxu0 0.0
    %430 = vmatpush1.xpose.msra.mxu0 0.0
    %431 = vmatprep.subr.mxu0 0.0
    %432 = vmatpush1.xpose.msra.mxu0 0.0
    %433 = vmatprep.subr.mxu0 0.0
    %434 = vmatpush1.xpose.msra.mxu0 0.0
    %435 = vmatprep.subr.mxu0 0.0
    %436 = vmatpush1.xpose.msra.mxu0 0.0
    %437 = vmatprep.subr.mxu0 0.0
    %438 = vmatpush1.xpose.msra.mxu0 0.0
    %439 = vmatprep.subr.mxu0 0.0
    %440 = vmatpush1.xpose.msra.mxu0 0.0
    %441 = vmatprep.subr.mxu0 0.0
    %442 = vmatpush1.xpose.msra.mxu0 0.0
    %443 = vmatprep.subr.mxu0 0.0
    %444 = vmatpush1.xpose.msra.mxu0 0.0
    %445 = vmatprep.subr.mxu0 0.0
    %446 = vmatpush1.xpose.msra.mxu0 0.0
    %447 = vmatprep.mubr.f32.mxu0 0.0
    %448 = vmatmul.mubr.f32.gmra.mrb[0].mxu0 %v379
    %v449 = vpop.f32.mrb[0].mxu0
    %v450 = vadd.f32 0.0, %v449
    %v451 = vpop.f32.mrb[0].mxu0
    %452 = vdwg.mxu0
    %453 = vrot.lane.b32.xlu0 %v372, 96
    %v454 = vpop.permute.xlu0 %453
    %v455 = vsel %vm378, %v372, 0
    %v457 = vsel %vm378, %v454, 0
    %459 = vmatprep.subr.mxu0 0.0
    %460 = vmatpush1.xpose.msra.mxu0 %v457
    %461 = vmatprep.subr.mxu0 0.0
    %462 = vmatpush1.xpose.msra.mxu0 0.0
    %463 = vmatprep.subr.mxu0 0.0
    %464 = vmatpush1.xpose.msra.mxu0 0.0
    %465 = vmatprep.subr.mxu0 0.0
    %466 = vmatpush1.xpose.msra.mxu0 0.0
    %467 = vmatprep.subr.mxu0 0.0
    %468 = vmatpush1.xpose.msra.mxu0 0.0
    %469 = vmatprep.subr.mxu0 0.0
    %470 = vmatpush1.xpose.msra.mxu0 0.0
    %471 = vmatprep.subr.mxu0 0.0
    %472 = vmatpush1.xpose.msra.mxu0 0.0
    %473 = vmatprep.subr.mxu0 0.0
    %474 = vmatpush1.xpose.msra.mxu0 0.0
    %475 = vmatprep.subr.mxu0 0.0
    %476 = vmatpush1.xpose.msra.mxu0 0.0
    %477 = vmatprep.subr.mxu0 0.0
    %478 = vmatpush1.xpose.msra.mxu0 0.0
    %479 = vmatprep.subr.mxu0 0.0
    %480 = vmatpush1.xpose.msra.mxu0 0.0
    %481 = vmatprep.subr.mxu0 0.0
    %482 = vmatpush1.xpose.msra.mxu0 0.0
    %483 = vmatprep.subr.mxu0 0.0
    %484 = vmatpush1.xpose.msra.mxu0 0.0
    %485 = vmatprep.subr.mxu0 0.0
    %486 = vmatpush1.xpose.msra.mxu0 0.0
    %487 = vmatprep.subr.mxu0 0.0
    %488 = vmatpush1.xpose.msra.mxu0 0.0
    %489 = vmatprep.subr.mxu0 0.0
    %490 = vmatpush1.xpose.msra.mxu0 0.0
    %491 = vmatprep.subr.mxu0 0.0
    %492 = vmatpush1.xpose.msra.mxu0 0.0
    %493 = vmatprep.subr.mxu0 0.0
    %494 = vmatpush1.xpose.msra.mxu0 0.0
    %495 = vmatprep.subr.mxu0 0.0
    %496 = vmatpush1.xpose.msra.mxu0 0.0
    %497 = vmatprep.subr.mxu0 0.0
    %498 = vmatpush1.xpose.msra.mxu0 0.0
    %499 = vmatprep.subr.mxu0 0.0
    %500 = vmatpush1.xpose.msra.mxu0 0.0
    %501 = vmatprep.subr.mxu0 0.0
    %502 = vmatpush1.xpose.msra.mxu0 0.0
    %503 = vmatprep.subr.mxu0 0.0
    %504 = vmatpush1.xpose.msra.mxu0 0.0
    %505 = vmatprep.subr.mxu0 0.0
    %506 = vmatpush1.xpose.msra.mxu0 0.0
    %507 = vmatprep.subr.mxu0 0.0
    %508 = vmatpush1.xpose.msra.mxu0 0.0
    %509 = vmatprep.subr.mxu0 0.0
    %510 = vmatpush1.xpose.msra.mxu0 0.0
    %511 = vmatprep.subr.mxu0 0.0
    %512 = vmatpush1.xpose.msra.mxu0 0.0
    %513 = vmatprep.subr.mxu0 0.0
    %514 = vmatpush1.xpose.msra.mxu0 0.0
    %515 = vmatprep.subr.mxu0 0.0
    %516 = vmatpush1.xpose.msra.mxu0 0.0
    %517 = vmatprep.subr.mxu0 0.0
    %518 = vmatpush1.xpose.msra.mxu0 0.0
    %519 = vmatprep.subr.mxu0 0.0
    %520 = vmatpush1.xpose.msra.mxu0 0.0
    %521 = vmatprep.subr.mxu0 0.0
    %522 = vmatpush1.xpose.msra.mxu0 0.0
    %523 = vmatprep.mubr.f32.mxu0 0.0
    %524 = vmatmul.mubr.f32.gmra.mrb[0].mxu0 %v455
    %v525 = vpop.f32.mrb[0].mxu0
    %v526 = vadd.f32 0.0, %v525
    %v527 = vpop.f32.mrb[0].mxu0
    %528 = vdwg.mxu0
    %529 = vrot.lane.b32.xlu0 %v367, 96
    %v530 = vpop.permute.xlu0 %529
    %v531 = vsel %vm378, %v367, 0
    %v533 = vsel %vm378, %v530, 0
    %535 = vmatprep.subr.mxu0 0.0
    %536 = vmatpush1.xpose.msra.mxu0 %v533
    %537 = vmatprep.subr.mxu0 0.0
    %538 = vmatpush1.xpose.msra.mxu0 0.0
    %539 = vmatprep.subr.mxu0 0.0
    %540 = vmatpush1.xpose.msra.mxu0 0.0
    %541 = vmatprep.subr.mxu0 0.0
    %542 = vmatpush1.xpose.msra.mxu0 0.0
    %543 = vmatprep.subr.mxu0 0.0
    %544 = vmatpush1.xpose.msra.mxu0 0.0
    %545 = vmatprep.subr.mxu0 0.0
    %546 = vmatpush1.xpose.msra.mxu0 0.0
    %547 = vmatprep.subr.mxu0 0.0
    %548 = vmatpush1.xpose.msra.mxu0 0.0
    %549 = vmatprep.subr.mxu0 0.0
    %550 = vmatpush1.xpose.msra.mxu0 0.0
    %551 = vmatprep.subr.mxu0 0.0
    %552 = vmatpush1.xpose.msra.mxu0 0.0
    %553 = vmatprep.subr.mxu0 0.0
    %554 = vmatpush1.xpose.msra.mxu0 0.0
    %555 = vmatprep.subr.mxu0 0.0
    %556 = vmatpush1.xpose.msra.mxu0 0.0
    %557 = vmatprep.subr.mxu0 0.0
    %558 = vmatpush1.xpose.msra.mxu0 0.0
    %559 = vmatprep.subr.mxu0 0.0
    %560 = vmatpush1.xpose.msra.mxu0 0.0
    %561 = vmatprep.subr.mxu0 0.0
    %562 = vmatpush1.xpose.msra.mxu0 0.0
    %563 = vmatprep.subr.mxu0 0.0
    %564 = vmatpush1.xpose.msra.mxu0 0.0
    %565 = vmatprep.subr.mxu0 0.0
    %566 = vmatpush1.xpose.msra.mxu0 0.0
    %567 = vmatprep.subr.mxu0 0.0
    %568 = vmatpush1.xpose.msra.mxu0 0.0
    %569 = vmatprep.subr.mxu0 0.0
    %570 = vmatpush1.xpose.msra.mxu0 0.0
    %571 = vmatprep.subr.mxu0 0.0
    %572 = vmatpush1.xpose.msra.mxu0 0.0
    %573 = vmatprep.subr.mxu0 0.0
    %574 = vmatpush1.xpose.msra.mxu0 0.0
    %575 = vmatprep.subr.mxu0 0.0
    %576 = vmatpush1.xpose.msra.mxu0 0.0
    %577 = vmatprep.subr.mxu0 0.0
    %578 = vmatpush1.xpose.msra.mxu0 0.0
    %579 = vmatprep.subr.mxu0 0.0
    %580 = vmatpush1.xpose.msra.mxu0 0.0
    %581 = vmatprep.subr.mxu0 0.0
    %582 = vmatpush1.xpose.msra.mxu0 0.0
    %583 = vmatprep.subr.mxu0 0.0
    %584 = vmatpush1.xpose.msra.mxu0 0.0
    %585 = vmatprep.subr.mxu0 0.0
    %586 = vmatpush1.xpose.msra.mxu0 0.0
    %587 = vmatprep.subr.mxu0 0.0
    %588 = vmatpush1.xpose.msra.mxu0 0.0
    %589 = vmatprep.subr.mxu0 0.0
    %590 = vmatpush1.xpose.msra.mxu0 0.0
    %591 = vmatprep.subr.mxu0 0.0
    %592 = vmatpush1.xpose.msra.mxu0 0.0
    %593 = vmatprep.subr.mxu0 0.0
    %594 = vmatpush1.xpose.msra.mxu0 0.0
    %595 = vmatprep.subr.mxu0 0.0
    %596 = vmatpush1.xpose.msra.mxu0 0.0
    %597 = vmatprep.subr.mxu0 0.0
    %598 = vmatpush1.xpose.msra.mxu0 0.0
    %599 = vmatprep.mubr.f32.mxu0 0.0
    %600 = vmatmul.mubr.f32.gmra.mrb[0].mxu0 %v531
    %v601 = vpop.f32.mrb[0].mxu0
    %v602 = vadd.f32 0.0, %v601
    %v603 = vpop.f32.mrb[0].mxu0
    %604 = vdwg.mxu0
    %605 = vrot.lane.b32.xlu0 %v375, 96
    %v606 = vpop.permute.xlu0 %605
    %v607 = vsel %vm378, %v375, 0
    %v609 = vsel %vm378, %v606, 0
    %611 = vmatprep.subr.mxu0 0.0
    %612 = vmatpush1.xpose.msra.mxu0 %v609
    %613 = vmatprep.subr.mxu0 0.0
    %614 = vmatpush1.xpose.msra.mxu0 0.0
    %615 = vmatprep.subr.mxu0 0.0
    %616 = vmatpush1.xpose.msra.mxu0 0.0
    %617 = vmatprep.subr.mxu0 0.0
    %618 = vmatpush1.xpose.msra.mxu0 0.0
    %619 = vmatprep.subr.mxu0 0.0
    %620 = vmatpush1.xpose.msra.mxu0 0.0
    %621 = vmatprep.subr.mxu0 0.0
    %622 = vmatpush1.xpose.msra.mxu0 0.0
    %623 = vmatprep.subr.mxu0 0.0
    %624 = vmatpush1.xpose.msra.mxu0 0.0
    %625 = vmatprep.subr.mxu0 0.0
    %626 = vmatpush1.xpose.msra.mxu0 0.0
    %627 = vmatprep.subr.mxu0 0.0
    %628 = vmatpush1.xpose.msra.mxu0 0.0
    %629 = vmatprep.subr.mxu0 0.0
    %630 = vmatpush1.xpose.msra.mxu0 0.0
    %631 = vmatprep.subr.mxu0 0.0
    %632 = vmatpush1.xpose.msra.mxu0 0.0
    %633 = vmatprep.subr.mxu0 0.0
    %634 = vmatpush1.xpose.msra.mxu0 0.0
    %635 = vmatprep.subr.mxu0 0.0
    %636 = vmatpush1.xpose.msra.mxu0 0.0
    %637 = vmatprep.subr.mxu0 0.0
    %638 = vmatpush1.xpose.msra.mxu0 0.0
    %639 = vmatprep.subr.mxu0 0.0
    %640 = vmatpush1.xpose.msra.mxu0 0.0
    %641 = vmatprep.subr.mxu0 0.0
    %642 = vmatpush1.xpose.msra.mxu0 0.0
    %643 = vmatprep.subr.mxu0 0.0
    %644 = vmatpush1.xpose.msra.mxu0 0.0
    %645 = vmatprep.subr.mxu0 0.0
    %646 = vmatpush1.xpose.msra.mxu0 0.0
    %647 = vmatprep.subr.mxu0 0.0
    %648 = vmatpush1.xpose.msra.mxu0 0.0
    %649 = vmatprep.subr.mxu0 0.0
    %650 = vmatpush1.xpose.msra.mxu0 0.0
    %651 = vmatprep.subr.mxu0 0.0
    %652 = vmatpush1.xpose.msra.mxu0 0.0
    %653 = vmatprep.subr.mxu0 0.0
    %654 = vmatpush1.xpose.msra.mxu0 0.0
    %655 = vmatprep.subr.mxu0 0.0
    %656 = vmatpush1.xpose.msra.mxu0 0.0
    %657 = vmatprep.subr.mxu0 0.0
    %658 = vmatpush1.xpose.msra.mxu0 0.0
    %659 = vmatprep.subr.mxu0 0.0
    %660 = vmatpush1.xpose.msra.mxu0 0.0
    %661 = vmatprep.subr.mxu0 0.0
    %662 = vmatpush1.xpose.msra.mxu0 0.0
    %663 = vmatprep.subr.mxu0 0.0
    %664 = vmatpush1.xpose.msra.mxu0 0.0
    %665 = vmatprep.subr.mxu0 0.0
    %666 = vmatpush1.xpose.msra.mxu0 0.0
    %667 = vmatprep.subr.mxu0 0.0
    %668 = vmatpush1.xpose.msra.mxu0 0.0
    %669 = vmatprep.subr.mxu0 0.0
    %670 = vmatpush1.xpose.msra.mxu0 0.0
    %671 = vmatprep.subr.mxu0 0.0
    %672 = vmatpush1.xpose.msra.mxu0 0.0
    %673 = vmatprep.subr.mxu0 0.0
    %674 = vmatpush1.xpose.msra.mxu0 0.0
    %675 = vmatprep.mubr.f32.mxu0 0.0
    %676 = vmatmul.mubr.f32.gmra.mrb[0].mxu0 %v607
    %v677 = vpop.f32.mrb[0].mxu0
    %v678 = vadd.f32 0.0, %v677
    %v679 = vpop.f32.mrb[0].mxu0
    %680 = vdwg.mxu0
    %v681 = vmul.f32 %v450, 0.25
    %v682 = vmul.f32 %v526, 0.25
    %v683 = vmul.f32 %v602, 0.25
    %v684 = vmul.f32 %v678, 0.25
    %v685 = vlaneseq
    %v686 = vshrl.u32 %v685, 7
    %v687 = vsub.s32 0, %v686
    %v688 = vrot.slane %v274, %v687
    %v689 = vlaneseq
    %v690 = vshrl.u32 %v689, 7
    %v691 = vsub.s32 0, %v690
    %v692 = vrot.slane %v276, %v691
    %v693 = vadd.f32 %v681, %v688
    %v694 = vadd.f32 %v682, %v688
    %v695 = vadd.f32 %v683, %v692
    %v696 = vadd.f32 %v684, %v692
    %vm697 = vcmask 64512
    %v698 = vsel %vm697, %v693, -inf
    %699 = vmax.xlane.f32.xlu0 %v698
    %v700 = vpop.xlane.xlu0 %699
    %v701 = vsel %vm697, %v694, -inf
    %702 = vmax.xlane.f32.xlu0 %v701
    %v703 = vpop.xlane.xlu0 %702
    %v704 = vsel %vm697, %v695, -inf
    %705 = vmax.xlane.f32.xlu0 %v704
    %v706 = vpop.xlane.xlu0 %705
    %v707 = vsel %vm697, %v696, -inf
    %708 = vmax.xlane.f32.xlu0 %v707
    %v709 = vpop.xlane.xlu0 %708
    %v710 = vsub.f32 %v693, %v700
    %v711 = vsub.f32 %v694, %v703
    %v712 = vsub.f32 %v695, %v706
    %v713 = vsub.f32 %v696, %v709
    %v714 = vmul.f32 %v710, 1.442695
    %v715 = vpow.pop %v714
    %v716 = vmul.f32 %v711, 1.442695
    %v717 = vpow.pop %v716
    %v718 = vmul.f32 %v712, 1.442695
    %v719 = vpow.pop %v718
    %v720 = vmul.f32 %v713, 1.442695
    %v721 = vpow.pop %v720
    %v722 = vsel %vm697, %v715, 0.0
    %723 = vadd.xlane.f32.xlu0 %v722
    %v724 = vpop.xlane.xlu0 %723
    %v725 = vsel %vm697, %v717, 0.0
    %726 = vadd.xlane.f32.xlu0 %v725
    %v727 = vpop.xlane.xlu0 %726
    %v728 = vsel %vm697, %v719, 0.0
    %729 = vadd.xlane.f32.xlu0 %v728
    %v730 = vpop.xlane.xlu0 %729
    %v731 = vsel %vm697, %v721, 0.0
    %732 = vadd.xlane.f32.xlu0 %v731
    %v733 = vpop.xlane.xlu0 %732
    %v734 = vrcp.pop %v724
    %v735 = vmul.f32 %v715, %v734
    %v736 = vrcp.pop %v727
    %v737 = vmul.f32 %v717, %v736
    %v738 = vrcp.pop %v730
    %v739 = vmul.f32 %v719, %v738
    %v740 = vrcp.pop %v733
    %v741 = vmul.f32 %v721, %v740
    %742 = vrot.lane.b32.xlu0 %v362, 64
    %v743 = vpop.permute.xlu0 %742
    %v746 = vsel %vm697, %v735, 0
    %748 = vmatprep.subr.mxu0 0.0
    %749 = vmatpush1.msra.mxu0 %v743
    %750 = vmatprep.subr.mxu0 0.0
    %751 = vmatpush1.msra.mxu0 0.0
    %752 = vmatprep.subr.mxu0 0.0
    %753 = vmatpush1.msra.mxu0 0.0
    %754 = vmatprep.subr.mxu0 0.0
    %755 = vmatpush1.msra.mxu0 0.0
    %756 = vmatprep.subr.mxu0 0.0
    %757 = vmatpush1.msra.mxu0 0.0
    %758 = vmatprep.subr.mxu0 0.0
    %759 = vmatpush1.msra.mxu0 0.0
    %760 = vmatprep.subr.mxu0 0.0
    %761 = vmatpush1.msra.mxu0 0.0
    %762 = vmatprep.subr.mxu0 0.0
    %763 = vmatpush1.msra.mxu0 0.0
    %764 = vmatprep.subr.mxu0 0.0
    %765 = vmatpush1.msra.mxu0 0.0
    %766 = vmatprep.subr.mxu0 0.0
    %767 = vmatpush1.msra.mxu0 0.0
    %768 = vmatprep.subr.mxu0 0.0
    %769 = vmatpush1.msra.mxu0 0.0
    %770 = vmatprep.subr.mxu0 0.0
    %771 = vmatpush1.msra.mxu0 0.0
    %772 = vmatprep.subr.mxu0 0.0
    %773 = vmatpush1.msra.mxu0 0.0
    %774 = vmatprep.subr.mxu0 0.0
    %775 = vmatpush1.msra.mxu0 0.0
    %776 = vmatprep.subr.mxu0 0.0
    %777 = vmatpush1.msra.mxu0 0.0
    %778 = vmatprep.subr.mxu0 0.0
    %779 = vmatpush1.msra.mxu0 0.0
    %780 = vmatprep.subr.mxu0 0.0
    %781 = vmatpush1.msra.mxu0 0.0
    %782 = vmatprep.subr.mxu0 0.0
    %783 = vmatpush1.msra.mxu0 0.0
    %784 = vmatprep.subr.mxu0 0.0
    %785 = vmatpush1.msra.mxu0 0.0
    %786 = vmatprep.subr.mxu0 0.0
    %787 = vmatpush1.msra.mxu0 0.0
    %788 = vmatprep.subr.mxu0 0.0
    %789 = vmatpush1.msra.mxu0 0.0
    %790 = vmatprep.subr.mxu0 0.0
    %791 = vmatpush1.msra.mxu0 0.0
    %792 = vmatprep.subr.mxu0 0.0
    %793 = vmatpush1.msra.mxu0 0.0
    %794 = vmatprep.subr.mxu0 0.0
    %795 = vmatpush1.msra.mxu0 0.0
    %796 = vmatprep.subr.mxu0 0.0
    %797 = vmatpush1.msra.mxu0 0.0
    %798 = vmatprep.subr.mxu0 0.0
    %799 = vmatpush1.msra.mxu0 0.0
    %800 = vmatprep.subr.mxu0 0.0
    %801 = vmatpush1.msra.mxu0 0.0
    %802 = vmatprep.subr.mxu0 0.0
    %803 = vmatpush1.msra.mxu0 0.0
    %804 = vmatprep.subr.mxu0 0.0
    %805 = vmatpush1.msra.mxu0 0.0
    %806 = vmatprep.subr.mxu0 0.0
    %807 = vmatpush1.msra.mxu0 0.0
    %808 = vmatprep.subr.mxu0 0.0
    %809 = vmatpush1.msra.mxu0 0.0
    %810 = vmatprep.subr.mxu0 0.0
    %811 = vmatpush1.msra.mxu0 0.0
    %812 = vmatprep.mubr.f32.mxu0 0.0
    %813 = vmatmul.mubr.f32.gmra.mrb[0].mxu0 %v746
    %v814 = vpop.f32.mrb[0].mxu0
    %v815 = vadd.f32 0.0, %v814
    %v816 = vpop.f32.mrb[0].mxu0
    %817 = vdwg.mxu0
    %818 = vrot.lane.b32.xlu0 %v372, 64
    %v819 = vpop.permute.xlu0 %818
    %v822 = vsel %vm697, %v737, 0
    %824 = vmatprep.subr.mxu0 0.0
    %825 = vmatpush1.msra.mxu0 %v819
    %826 = vmatprep.subr.mxu0 0.0
    %827 = vmatpush1.msra.mxu0 0.0
    %828 = vmatprep.subr.mxu0 0.0
    %829 = vmatpush1.msra.mxu0 0.0
    %830 = vmatprep.subr.mxu0 0.0
    %831 = vmatpush1.msra.mxu0 0.0
    %832 = vmatprep.subr.mxu0 0.0
    %833 = vmatpush1.msra.mxu0 0.0
    %834 = vmatprep.subr.mxu0 0.0
    %835 = vmatpush1.msra.mxu0 0.0
    %836 = vmatprep.subr.mxu0 0.0
    %837 = vmatpush1.msra.mxu0 0.0
    %838 = vmatprep.subr.mxu0 0.0
    %839 = vmatpush1.msra.mxu0 0.0
    %840 = vmatprep.subr.mxu0 0.0
    %841 = vmatpush1.msra.mxu0 0.0
    %842 = vmatprep.subr.mxu0 0.0
    %843 = vmatpush1.msra.mxu0 0.0
    %844 = vmatprep.subr.mxu0 0.0
    %845 = vmatpush1.msra.mxu0 0.0
    %846 = vmatprep.subr.mxu0 0.0
    %847 = vmatpush1.msra.mxu0 0.0
    %848 = vmatprep.subr.mxu0 0.0
    %849 = vmatpush1.msra.mxu0 0.0
    %850 = vmatprep.subr.mxu0 0.0
    %851 = vmatpush1.msra.mxu0 0.0
    %852 = vmatprep.subr.mxu0 0.0
    %853 = vmatpush1.msra.mxu0 0.0
    %854 = vmatprep.subr.mxu0 0.0
    %855 = vmatpush1.msra.mxu0 0.0
    %856 = vmatprep.subr.mxu0 0.0
    %857 = vmatpush1.msra.mxu0 0.0
    %858 = vmatprep.subr.mxu0 0.0
    %859 = vmatpush1.msra.mxu0 0.0
    %860 = vmatprep.subr.mxu0 0.0
    %861 = vmatpush1.msra.mxu0 0.0
    %862 = vmatprep.subr.mxu0 0.0
    %863 = vmatpush1.msra.mxu0 0.0
    %864 = vmatprep.subr.mxu0 0.0
    %865 = vmatpush1.msra.mxu0 0.0
    %866 = vmatprep.subr.mxu0 0.0
    %867 = vmatpush1.msra.mxu0 0.0
    %868 = vmatprep.subr.mxu0 0.0
    %869 = vmatpush1.msra.mxu0 0.0
    %870 = vmatprep.subr.mxu0 0.0
    %871 = vmatpush1.msra.mxu0 0.0
    %872 = vmatprep.subr.mxu0 0.0
    %873 = vmatpush1.msra.mxu0 0.0
    %874 = vmatprep.subr.mxu0 0.0
    %875 = vmatpush1.msra.mxu0 0.0
    %876 = vmatprep.subr.mxu0 0.0
    %877 = vmatpush1.msra.mxu0 0.0
    %878 = vmatprep.subr.mxu0 0.0
    %879 = vmatpush1.msra.mxu0 0.0
    %880 = vmatprep.subr.mxu0 0.0
    %881 = vmatpush1.msra.mxu0 0.0
    %882 = vmatprep.subr.mxu0 0.0
    %883 = vmatpush1.msra.mxu0 0.0
    %884 = vmatprep.subr.mxu0 0.0
    %885 = vmatpush1.msra.mxu0 0.0
    %886 = vmatprep.subr.mxu0 0.0
    %887 = vmatpush1.msra.mxu0 0.0
    %888 = vmatprep.mubr.f32.mxu0 0.0
    %889 = vmatmul.mubr.f32.gmra.mrb[0].mxu0 %v822
    %v890 = vpop.f32.mrb[0].mxu0
    %v891 = vadd.f32 0.0, %v890
    %v892 = vpop.f32.mrb[0].mxu0
    %893 = vdwg.mxu0
    %894 = vrot.lane.b32.xlu0 %v367, 64
    %v895 = vpop.permute.xlu0 %894
    %v898 = vsel %vm697, %v739, 0
    %900 = vmatprep.subr.mxu0 0.0
    %901 = vmatpush1.msra.mxu0 %v895
    %902 = vmatprep.subr.mxu0 0.0
    %903 = vmatpush1.msra.mxu0 0.0
    %904 = vmatprep.subr.mxu0 0.0
    %905 = vmatpush1.msra.mxu0 0.0
    %906 = vmatprep.subr.mxu0 0.0
    %907 = vmatpush1.msra.mxu0 0.0
    %908 = vmatprep.subr.mxu0 0.0
    %909 = vmatpush1.msra.mxu0 0.0
    %910 = vmatprep.subr.mxu0 0.0
    %911 = vmatpush1.msra.mxu0 0.0
    %912 = vmatprep.subr.mxu0 0.0
    %913 = vmatpush1.msra.mxu0 0.0
    %914 = vmatprep.subr.mxu0 0.0
    %915 = vmatpush1.msra.mxu0 0.0
    %916 = vmatprep.subr.mxu0 0.0
    %917 = vmatpush1.msra.mxu0 0.0
    %918 = vmatprep.subr.mxu0 0.0
    %919 = vmatpush1.msra.mxu0 0.0
    %920 = vmatprep.subr.mxu0 0.0
    %921 = vmatpush1.msra.mxu0 0.0
    %922 = vmatprep.subr.mxu0 0.0
    %923 = vmatpush1.msra.mxu0 0.0
    %924 = vmatprep.subr.mxu0 0.0
    %925 = vmatpush1.msra.mxu0 0.0
    %926 = vmatprep.subr.mxu0 0.0
    %927 = vmatpush1.msra.mxu0 0.0
    %928 = vmatprep.subr.mxu0 0.0
    %929 = vmatpush1.msra.mxu0 0.0
    %930 = vmatprep.subr.mxu0 0.0
    %931 = vmatpush1.msra.mxu0 0.0
    %932 = vmatprep.subr.mxu0 0.0
    %933 = vmatpush1.msra.mxu0 0.0
    %934 = vmatprep.subr.mxu0 0.0
    %935 = vmatpush1.msra.mxu0 0.0
    %936 = vmatprep.subr.mxu0 0.0
    %937 = vmatpush1.msra.mxu0 0.0
    %938 = vmatprep.subr.mxu0 0.0
    %939 = vmatpush1.msra.mxu0 0.0
    %940 = vmatprep.subr.mxu0 0.0
    %941 = vmatpush1.msra.mxu0 0.0
    %942 = vmatprep.subr.mxu0 0.0
    %943 = vmatpush1.msra.mxu0 0.0
    %944 = vmatprep.subr.mxu0 0.0
    %945 = vmatpush1.msra.mxu0 0.0
    %946 = vmatprep.subr.mxu0 0.0
    %947 = vmatpush1.msra.mxu0 0.0
    %948 = vmatprep.subr.mxu0 0.0
    %949 = vmatpush1.msra.mxu0 0.0
    %950 = vmatprep.subr.mxu0 0.0
    %951 = vmatpush1.msra.mxu0 0.0
    %952 = vmatprep.subr.mxu0 0.0
    %953 = vmatpush1.msra.mxu0 0.0
    %954 = vmatprep.subr.mxu0 0.0
    %955 = vmatpush1.msra.mxu0 0.0
    %956 = vmatprep.subr.mxu0 0.0
    %957 = vmatpush1.msra.mxu0 0.0
    %958 = vmatprep.subr.mxu0 0.0
    %959 = vmatpush1.msra.mxu0 0.0
    %960 = vmatprep.subr.mxu0 0.0
    %961 = vmatpush1.msra.mxu0 0.0
    %962 = vmatprep.subr.mxu0 0.0
    %963 = vmatpush1.msra.mxu0 0.0
    %964 = vmatprep.mubr.f32.mxu0 0.0
    %965 = vmatmul.mubr.f32.gmra.mrb[0].mxu0 %v898
    %v966 = vpop.f32.mrb[0].mxu0
    %v967 = vadd.f32 0.0, %v966
    %v968 = vpop.f32.mrb[0].mxu0
    %969 = vdwg.mxu0
    %970 = vrot.lane.b32.xlu0 %v375, 64
    %v971 = vpop.permute.xlu0 %970
    %v974 = vsel %vm697, %v741, 0
    %976 = vmatprep.subr.mxu0 0.0
    %977 = vmatpush1.msra.mxu0 %v971
    %978 = vmatprep.subr.mxu0 0.0
    %979 = vmatpush1.msra.mxu0 0.0
    %980 = vmatprep.subr.mxu0 0.0
    %981 = vmatpush1.msra.mxu0 0.0
    %982 = vmatprep.subr.mxu0 0.0
    %983 = vmatpush1.msra.mxu0 0.0
    %984 = vmatprep.subr.mxu0 0.0
    %985 = vmatpush1.msra.mxu0 0.0
    %986 = vmatprep.subr.mxu0 0.0
    %987 = vmatpush1.msra.mxu0 0.0
    %988 = vmatprep.subr.mxu0 0.0
    %989 = vmatpush1.msra.mxu0 0.0
    %990 = vmatprep.subr.mxu0 0.0
    %991 = vmatpush1.msra.mxu0 0.0
    %992 = vmatprep.subr.mxu0 0.0
    %993 = vmatpush1.msra.mxu0 0.0
    %994 = vmatprep.subr.mxu0 0.0
    %995 = vmatpush1.msra.mxu0 0.0
    %996 = vmatprep.subr.mxu0 0.0
    %997 = vmatpush1.msra.mxu0 0.0
    %998 = vmatprep.subr.mxu0 0.0
    %999 = vmatpush1.msra.mxu0 0.0
    %1000 = vmatprep.subr.mxu0 0.0
    %1001 = vmatpush1.msra.mxu0 0.0
    %1002 = vmatprep.subr.mxu0 0.0
    %1003 = vmatpush1.msra.mxu0 0.0
    %1004 = vmatprep.subr.mxu0 0.0
    %1005 = vmatpush1.msra.mxu0 0.0
    %1006 = vmatprep.subr.mxu0 0.0
    %1007 = vmatpush1.msra.mxu0 0.0
    %1008 = vmatprep.subr.mxu0 0.0
    %1009 = vmatpush1.msra.mxu0 0.0
    %1010 = vmatprep.subr.mxu0 0.0
    %1011 = vmatpush1.msra.mxu0 0.0
    %1012 = vmatprep.subr.mxu0 0.0
    %1013 = vmatpush1.msra.mxu0 0.0
    %1014 = vmatprep.subr.mxu0 0.0
    %1015 = vmatpush1.msra.mxu0 0.0
    %1016 = vmatprep.subr.mxu0 0.0
    %1017 = vmatpush1.msra.mxu0 0.0
    %1018 = vmatprep.subr.mxu0 0.0
    %1019 = vmatpush1.msra.mxu0 0.0
    %1020 = vmatprep.subr.mxu0 0.0
    %1021 = vmatpush1.msra.mxu0 0.0
    %1022 = vmatprep.subr.mxu0 0.0
    %1023 = vmatpush1.msra.mxu0 0.0
    %1024 = vmatprep.subr.mxu0 0.0
    %1025 = vmatpush1.msra.mxu0 0.0
    %1026 = vmatprep.subr.mxu0 0.0
    %1027 = vmatpush1.msra.mxu0 0.0
    %1028 = vmatprep.subr.mxu0 0.0
    %1029 = vmatpush1.msra.mxu0 0.0
    %1030 = vmatprep.subr.mxu0 0.0
    %1031 = vmatpush1.msra.mxu0 0.0
    %1032 = vmatprep.subr.mxu0 0.0
    %1033 = vmatpush1.msra.mxu0 0.0
    %1034 = vmatprep.subr.mxu0 0.0
    %1035 = vmatpush1.msra.mxu0 0.0
    %1036 = vmatprep.subr.mxu0 0.0
    %1037 = vmatpush1.msra.mxu0 0.0
    %1038 = vmatprep.subr.mxu0 0.0
    %1039 = vmatpush1.msra.mxu0 0.0
    %1040 = vmatprep.mubr.f32.mxu0 0.0
    %1041 = vmatmul.mubr.f32.gmra.mrb[0].mxu0 %v974
    %v1042 = vpop.f32.mrb[0].mxu0
    %v1043 = vadd.f32 0.0, %v1042
    %v1044 = vpop.f32.mrb[0].mxu0
    %1045 = vdwg.mxu0
    %1047 = vrot.lane.b32.xlu0 %v891, 16
    %v1048 = vpop.permute.xlu0 %1047
    %v1050 = vsel %vm378, %v815, %v1048
    %1052 = vrot.lane.b32.xlu0 %v1043, 16
    %v1053 = vpop.permute.xlu0 %1052
    %v1055 = vsel %vm378, %v967, %v1053
    %v1056 = vld [vmem:[%s10] sm:$0xff]
    %v1057 = vld [vmem:[%s10 + $0x8] sm:$0xff]
    %v1058 = vld [vmem:[%s10 + $0x10] sm:$0xff]
    %v1059 = vld [vmem:[%s10 + $0x18] sm:$0xff]
    %v1060 = vld [vmem:[%s11] sm:$0x1]
    %v1062 = vlaneseq
    %v1063 = vshrl.u32 %v1062, 7
    %v1064 = vsub.s32 0, %v1063
    %v1065 = vrot.slane %v1060, %v1064
    %v1068 = vsel %vm227, %v1050, 0
    %v1071 = vsel %vm227, %v1055, 0
    %1073 = vmatprep.subr.mxu0 0.0
    %1074 = vmatpush1.msra.mxu0 %v1056
    %1075 = vmatprep.subr.mxu0 0.0
    %1076 = vmatpush1.msra.mxu0 %v1057
    %1077 = vmatprep.subr.mxu0 0.0
    %1078 = vmatpush1.msra.mxu0 %v1058
    %1079 = vmatprep.subr.mxu0 0.0
    %1080 = vmatpush1.msra.mxu0 %v1059
    %1081 = vmatprep.subr.mxu0 0.0
    %1082 = vmatpush1.msra.mxu0 0.0
    %1083 = vmatprep.subr.mxu0 0.0
    %1084 = vmatpush1.msra.mxu0 0.0
    %1085 = vmatprep.subr.mxu0 0.0
    %1086 = vmatpush1.msra.mxu0 0.0
    %1087 = vmatprep.subr.mxu0 0.0
    %1088 = vmatpush1.msra.mxu0 0.0
    %1089 = vmatprep.subr.mxu0 0.0
    %1090 = vmatpush1.msra.mxu0 0.0
    %1091 = vmatprep.subr.mxu0 0.0
    %1092 = vmatpush1.msra.mxu0 0.0
    %1093 = vmatprep.subr.mxu0 0.0
    %1094 = vmatpush1.msra.mxu0 0.0
    %1095 = vmatprep.subr.mxu0 0.0
    %1096 = vmatpush1.msra.mxu0 0.0
    %1097 = vmatprep.subr.mxu0 0.0
    %1098 = vmatpush1.msra.mxu0 0.0
    %1099 = vmatprep.subr.mxu0 0.0
    %1100 = vmatpush1.msra.mxu0 0.0
    %1101 = vmatprep.subr.mxu0 0.0
    %1102 = vmatpush1.msra.mxu0 0.0
    %1103 = vmatprep.subr.mxu0 0.0
    %1104 = vmatpush1.msra.mxu0 0.0
    %1105 = vmatprep.subr.mxu0 0.0
    %1106 = vmatpush1.msra.mxu0 0.0
    %1107 = vmatprep.subr.mxu0 0.0
    %1108 = vmatpush1.msra.mxu0 0.0
    %1109 = vmatprep.subr.mxu0 0.0
    %1110 = vmatpush1.msra.mxu0 0.0
    %1111 = vmatprep.subr.mxu0 0.0
    %1112 = vmatpush1.msra.mxu0 0.0
    %1113 = vmatprep.subr.mxu0 0.0
    %1114 = vmatpush1.msra.mxu0 0.0
    %1115 = vmatprep.subr.mxu0 0.0
    %1116 = vmatpush1.msra.mxu0 0.0
    %1117 = vmatprep.subr.mxu0 0.0
    %1118 = vmatpush1.msra.mxu0 0.0
    %1119 = vmatprep.subr.mxu0 0.0
    %1120 = vmatpush1.msra.mxu0 0.0
    %1121 = vmatprep.subr.mxu0 0.0
    %1122 = vmatpush1.msra.mxu0 0.0
    %1123 = vmatprep.subr.mxu0 0.0
    %1124 = vmatpush1.msra.mxu0 0.0
    %1125 = vmatprep.subr.mxu0 0.0
    %1126 = vmatpush1.msra.mxu0 0.0
    %1127 = vmatprep.subr.mxu0 0.0
    %1128 = vmatpush1.msra.mxu0 0.0
    %1129 = vmatprep.subr.mxu0 0.0
    %1130 = vmatpush1.msra.mxu0 0.0
    %1131 = vmatprep.subr.mxu0 0.0
    %1132 = vmatpush1.msra.mxu0 0.0
    %1133 = vmatprep.subr.mxu0 0.0
    %1134 = vmatpush1.msra.mxu0 0.0
    %1135 = vmatprep.subr.mxu0 0.0
    %1136 = vmatpush1.msra.mxu0 0.0
    %1137 = vmatprep.mubr.f32.mxu0 0.0
    %1138 = vmatmul.mubr.f32.gmra.mrb[0].mxu0 %v1068
    %v1139 = vpop.f32.mrb[0].mxu0
    %v1140 = vadd.f32 %v1065, %v1139
    %v1141 = vpop.f32.mrb[0].mxu0
    %1142 = vmatprep.mubr.f32.mxu0 0.0
    %1143 = vmatmul.mubr.f32.gmra.mrb[0].mxu0 %v1071
    %v1144 = vpop.f32.mrb[0].mxu0
    %v1145 = vadd.f32 %v1065, %v1144
    %v1146 = vpop.f32.mrb[0].mxu0
    %1147 = vdwg.mxu0
    %v1148 = vadd.f32 %v1140, %v269
    %v1149 = vadd.f32 %v1145, %v270
    %v1150 = vld [vmem:[%s12] sm:$0x1]
    %v1151 = vld [vmem:[%s13] sm:$0x1]
    %v1152 = vsel %vm227, %v1148, 0.0
    %1153 = vadd.xlane.f32.xlu0 %v1152
    %v1154 = vpop.xlane.xlu0 %1153
    %v1155 = vsel %vm227, %v1149, 0.0
    %1156 = vadd.xlane.f32.xlu0 %v1155
    %v1157 = vpop.xlane.xlu0 %1156
    %v1158 = vmul.f32 %v1154, %v234
    %v1159 = vmul.f32 %v1157, %v234
    %v1160 = vsub.f32 %v1148, %v1158
    %v1161 = vsub.f32 %v1149, %v1159
    %v1162 = vmul.f32 %v1160, %v1160
    %v1163 = vmul.f32 %v1161, %v1161
    %v1164 = vsel %vm227, %v1162, 0.0
    %1165 = vadd.xlane.f32.xlu0 %v1164
    %v1166 = vpop.xlane.xlu0 %1165
    %v1167 = vsel %vm227, %v1163, 0.0
    %1168 = vadd.xlane.f32.xlu0 %v1167
    %v1169 = vpop.xlane.xlu0 %1168
    %v1170 = vmul.f32 %v1166, %v234
    %v1171 = vmul.f32 %v1169, %v234
    %v1172 = vadd.f32 %v1170, 1e-12
    %v1173 = vadd.f32 %v1171, 1e-12
    %v1174 = vrsqrt.pop %v1172
    %v1175 = vrsqrt.pop %v1173
    %v1176 = vmul.f32 %v1160, %v1174
    %v1177 = vmul.f32 %v1161, %v1175
    %v1179 = vlaneseq
    %v1180 = vshrl.u32 %v1179, 7
    %v1181 = vsub.s32 0, %v1180
    %v1182 = vrot.slane %v1150, %v1181
    %v1184 = vmul.f32 %v1176, %v1182
    %v1185 = vmul.f32 %v1177, %v1182
    %v1187 = vlaneseq
    %v1188 = vshrl.u32 %v1187, 7
    %v1189 = vsub.s32 0, %v1188
    %v1190 = vrot.slane %v1151, %v1189
    %v1192 = vadd.f32 %v1184, %v1190
    %v1193 = vadd.f32 %v1185, %v1190
    %v1194 = vld [vmem:[%s14] sm:$0xff]
    %v1195 = vld [vmem:[%s14 + $0x8] sm:$0xff]
    %v1196 = vld [vmem:[%s14 + $0x10] sm:$0xff]
    %v1197 = vld [vmem:[%s14 + $0x18] sm:$0xff]
    %v1198 = vld [vmem:[%s15] sm:$0x1]
    %v1200 = vlaneseq
    %v1201 = vshrl.u32 %v1200, 7
    %v1202 = vsub.s32 0, %v1201
    %v1203 = vrot.slane %v1198, %v1202
    %v1206 = vsel %vm227, %v1192, 0
    %v1209 = vsel %vm227, %v1193, 0
    %1211 = vmatprep.subr.mxu0 0.0
    %1212 = vmatpush1.msra.mxu0 %v1194
    %1213 = vmatprep.subr.mxu0 0.0
    %1214 = vmatpush1.msra.mxu0 %v1195
    %1215 = vmatprep.subr.mxu0 0.0
    %1216 = vmatpush1.msra.mxu0 %v1196
    %1217 = vmatprep.subr.mxu0 0.0
    %1218 = vmatpush1.msra.mxu0 %v1197
    %1219 = vmatprep.subr.mxu0 0.0
    %1220 = vmatpush1.msra.mxu0 0.0
    %1221 = vmatprep.subr.mxu0 0.0
    %1222 = vmatpush1.msra.mxu0 0.0
    %1223 = vmatprep.subr.mxu0 0.0
    %1224 = vmatpush1.msra.mxu0 0.0
    %1225 = vmatprep.subr.mxu0 0.0
    %1226 = vmatpush1.msra.mxu0 0.0
    %1227 = vmatprep.subr.mxu0 0.0
    %1228 = vmatpush1.msra.mxu0 0.0
    %1229 = vmatprep.subr.mxu0 0.0
    %1230 = vmatpush1.msra.mxu0 0.0
    %1231 = vmatprep.subr.mxu0 0.0
    %1232 = vmatpush1.msra.mxu0 0.0
    %1233 = vmatprep.subr.mxu0 0.0
    %1234 = vmatpush1.msra.mxu0 0.0
    %1235 = vmatprep.subr.mxu0 0.0
    %1236 = vmatpush1.msra.mxu0 0.0
    %1237 = vmatprep.subr.mxu0 0.0
    %1238 = vmatpush1.msra.mxu0 0.0
    %1239 = vmatprep.subr.mxu0 0.0
    %1240 = vmatpush1.msra.mxu0 0.0
    %1241 = vmatprep.subr.mxu0 0.0
    %1242 = vmatpush1.msra.mxu0 0.0
    %1243 = vmatprep.subr.mxu0 0.0
    %1244 = vmatpush1.msra.mxu0 0.0
    %1245 = vmatprep.subr.mxu0 0.0
    %1246 = vmatpush1.msra.mxu0 0.0
    %1247 = vmatprep.subr.mxu0 0.0
    %1248 = vmatpush1.msra.mxu0 0.0
    %1249 = vmatprep.subr.mxu0 0.0
    %1250 = vmatpush1.msra.mxu0 0.0
    %1251 = vmatprep.subr.mxu0 0.0
    %1252 = vmatpush1.msra.mxu0 0.0
    %1253 = vmatprep.subr.mxu0 0.0
    %1254 = vmatpush1.msra.mxu0 0.0
    %1255 = vmatprep.subr.mxu0 0.0
    %1256 = vmatpush1.msra.mxu0 0.0
    %1257 = vmatprep.subr.mxu0 0.0
    %1258 = vmatpush1.msra.mxu0 0.0
    %1259 = vmatprep.subr.mxu0 0.0
    %1260 = vmatpush1.msra.mxu0 0.0
    %1261 = vmatprep.subr.mxu0 0.0
    %1262 = vmatpush1.msra.mxu0 0.0
    %1263 = vmatprep.subr.mxu0 0.0
    %1264 = vmatpush1.msra.mxu0 0.0
    %1265 = vmatprep.subr.mxu0 0.0
    %1266 = vmatpush1.msra.mxu0 0.0
    %1267 = vmatprep.subr.mxu0 0.0
    %1268 = vmatpush1.msra.mxu0 0.0
    %1269 = vmatprep.subr.mxu0 0.0
    %1270 = vmatpush1.msra.mxu0 0.0
    %1271 = vmatprep.subr.mxu0 0.0
    %1272 = vmatpush1.msra.mxu0 0.0
    %1273 = vmatprep.subr.mxu0 0.0
    %1274 = vmatpush1.msra.mxu0 0.0
    %1275 = vmatprep.mubr.f32.mxu0 0.0
    %1276 = vmatmul.mubr.f32.gmra.mrb[0].mxu0 %v1206
    %v1277 = vpop.f32.mrb[0].mxu0
    %v1278 = vadd.f32 %v1203, %v1277
    %v1279 = vpop.f32.mrb[0].mxu0
    %1280 = vmatprep.mubr.f32.mxu0 0.0
    %1281 = vmatmul.mubr.f32.gmra.mrb[0].mxu0 %v1209
    %v1282 = vpop.f32.mrb[0].mxu0
    %v1283 = vadd.f32 %v1203, %v1282
    %v1284 = vpop.f32.mrb[0].mxu0
    %1285 = vdwg.mxu0
    %v1286 = vmul.f32 %v1278, 0.5
    %v1287 = vmul.f32 %v1283, 0.5
    %v1288 = vmul.f32 %v1278, 0.044715
    %v1289 = vmul.f32 %v1283, 0.044715
    %v1290 = vmul.f32 %v1288, %v1278
    %v1291 = vmul.f32 %v1289, %v1283
    %v1292 = vmul.f32 %v1290, %v1278
    %v1293 = vmul.f32 %v1291, %v1283
    %v1294 = vadd.f32 %v1278, %v1292
    %v1295 = vadd.f32 %v1283, %v1293
    %v1296 = vmul.f32 %v1294, 0.7978846
    %v1297 = vmul.f32 %v1295, 0.7978846
    %v1298 = vtanh.pop %v1296
    %v1299 = vtanh.pop %v1297
    %v1300 = vadd.f32 %v1298, 1.0
    %v1301 = vadd.f32 %v1299, 1.0
    %v1302 = vmul.f32 %v1286, %v1300
    %v1303 = vmul.f32 %v1287, %v1301
    %v1304 = vld [vmem:[%s16] sm:$0xff]
    %v1305 = vld [vmem:[%s16 + $0x8] sm:$0xff]
    %v1306 = vld [vmem:[%s16 + $0x10] sm:$0xff]
    %v1307 = vld [vmem:[%s16 + $0x18] sm:$0xff]
    %v1308 = vld [vmem:[%s16 + $0x20] sm:$0xff]
    %v1309 = vld [vmem:[%s16 + $0x28] sm:$0xff]
    %v1310 = vld [vmem:[%s16 + $0x30] sm:$0xff]
    %v1311 = vld [vmem:[%s16 + $0x38] sm:$0xff]
    %v1312 = vld [vmem:[%s17] sm:$0x1]
    %v1314 = vlaneseq
    %v1315 = vshrl.u32 %v1314, 7
    %v1316 = vsub.s32 0, %v1315
    %v1317 = vrot.slane %v1312, %v1316
    %vm1319 = vcmask 523264
    %v1321 = vsel %vm1319, %v1302, 0
    %v1324 = vsel %vm1319, %v1303, 0
    %1326 = vmatprep.subr.mxu0 0.0
    %1327 = vmatpush1.msra.mxu0 %v1304
    %1328 = vmatprep.subr.mxu0 0.0
    %1329 = vmatpush1.msra.mxu0 %v1305
    %1330 = vmatprep.subr.mxu0 0.0
    %1331 = vmatpush1.msra.mxu0 %v1306
    %1332 = vmatprep.subr.mxu0 0.0
    %1333 = vmatpush1.msra.mxu0 %v1307
    %1334 = vmatprep.subr.mxu0 0.0
    %1335 = vmatpush1.msra.mxu0 %v1308
    %1336 = vmatprep.subr.mxu0 0.0
    %1337 = vmatpush1.msra.mxu0 %v1309
    %1338 = vmatprep.subr.mxu0 0.0
    %1339 = vmatpush1.msra.mxu0 %v1310
    %1340 = vmatprep.subr.mxu0 0.0
    %1341 = vmatpush1.msra.mxu0 %v1311
    %1342 = vmatprep.subr.mxu0 0.0
    %1343 = vmatpush1.msra.mxu0 0.0
    %1344 = vmatprep.subr.mxu0 0.0
    %1345 = vmatpush1.msra.mxu0 0.0
    %1346 = vmatprep.subr.mxu0 0.0
    %1347 = vmatpush1.msra.mxu0 0.0
    %1348 = vmatprep.subr.mxu0 0.0
    %1349 = vmatpush1.msra.mxu0 0.0
    %1350 = vmatprep.subr.mxu0 0.0
    %1351 = vmatpush1.msra.mxu0 0.0
    %1352 = vmatprep.subr.mxu0 0.0
    %1353 = vmatpush1.msra.mxu0 0.0
    %1354 = vmatprep.subr.mxu0 0.0
    %1355 = vmatpush1.msra.mxu0 0.0
    %1356 = vmatprep.subr.mxu0 0.0
    %1357 = vmatpush1.msra.mxu0 0.0
    %1358 = vmatprep.subr.mxu0 0.0
    %1359 = vmatpush1.msra.mxu0 0.0
    %1360 = vmatprep.subr.mxu0 0.0
    %1361 = vmatpush1.msra.mxu0 0.0
    %1362 = vmatprep.subr.mxu0 0.0
    %1363 = vmatpush1.msra.mxu0 0.0
    %1364 = vmatprep.subr.mxu0 0.0
    %1365 = vmatpush1.msra.mxu0 0.0
    %1366 = vmatprep.subr.mxu0 0.0
    %1367 = vmatpush1.msra.mxu0 0.0
    %1368 = vmatprep.subr.mxu0 0.0
    %1369 = vmatpush1.msra.mxu0 0.0
    %1370 = vmatprep.subr.mxu0 0.0
    %1371 = vmatpush1.msra.mxu0 0.0
    %1372 = vmatprep.subr.mxu0 0.0
    %1373 = vmatpush1.msra.mxu0 0.0
    %1374 = vmatprep.subr.mxu0 0.0
    %1375 = vmatpush1.msra.mxu0 0.0
    %1376 = vmatprep.subr.mxu0 0.0
    %1377 = vmatpush1.msra.mxu0 0.0
    %1378 = vmatprep.subr.mxu0 0.0
    %1379 = vmatpush1.msra.mxu0 0.0
    %1380 = vmatprep.subr.mxu0 0.0
    %1381 = vmatpush1.msra.mxu0 0.0
    %1382 = vmatprep.subr.mxu0 0.0
    %1383 = vmatpush1.msra.mxu0 0.0
    %1384 = vmatprep.subr.mxu0 0.0
    %1385 = vmatpush1.msra.mxu0 0.0
    %1386 = vmatprep.subr.mxu0 0.0
    %1387 = vmatpush1.msra.mxu0 0.0
    %1388 = vmatprep.subr.mxu0 0.0
    %1389 = vmatpush1.msra.mxu0 0.0
    %1390 = vmatprep.mubr.f32.mxu0 0.0
    %1391 = vmatmul.mubr.f32.gmra.mrb[0].mxu0 %v1321
    %v1392 = vpop.f32.mrb[0].mxu0
    %v1393 = vadd.f32 %v1317, %v1392
    %v1394 = vpop.f32.mrb[0].mxu0
    %1395 = vmatprep.mubr.f32.mxu0 0.0
    %1396 = vmatmul.mubr.f32.gmra.mrb[0].mxu0 %v1324
    %v1397 = vpop.f32.mrb[0].mxu0
    %v1398 = vadd.f32 %v1317, %v1397
    %v1399 = vpop.f32.mrb[0].mxu0
    %1400 = vdwg.mxu0
    %v1401 = vadd.f32 %v1393, %v1192
    %v1402 = vadd.f32 %v1398, %v1193
    %v1403 = vld [vmem:[%s18] sm:$0x1]
    %v1404 = vld [vmem:[%s19] sm:$0x1]
    %v1405 = vsel %vm227, %v1401, 0.0
    %1406 = vadd.xlane.f32.xlu0 %v1405
    %v1407 = vpop.xlane.xlu0 %1406
    %v1408 = vsel %vm227, %v1402, 0.0
    %1409 = vadd.xlane.f32.xlu0 %v1408
    %v1410 = vpop.xlane.xlu0 %1409
    %v1411 = vmul.f32 %v1407, %v234
    %v1412 = vmul.f32 %v1410, %v234
    %v1413 = vsub.f32 %v1401, %v1411
    %v1414 = vsub.f32 %v1402, %v1412
    %v1415 = vmul.f32 %v1413, %v1413
    %v1416 = vmul.f32 %v1414, %v1414
    %v1417 = vsel %vm227, %v1415, 0.0
    %1418 = vadd.xlane.f32.xlu0 %v1417
    %v1419 = vpop.xlane.xlu0 %1418
    %v1420 = vsel %vm227, %v1416, 0.0
    %1421 = vadd.xlane.f32.xlu0 %v1420
    %v1422 = vpop.xlane.xlu0 %1421
    %v1423 = vmul.f32 %v1419, %v234
    %v1424 = vmul.f32 %v1422, %v234
    %v1425 = vadd.f32 %v1423, 1e-12
    %v1426 = vadd.f32 %v1424, 1e-12
    %v1427 = vrsqrt.pop %v1425
    %v1428 = vrsqrt.pop %v1426
    %v1429 = vmul.f32 %v1413, %v1427
    %v1430 = vmul.f32 %v1414, %v1428
    %v1432 = vlaneseq
    %v1433 = vshrl.u32 %v1432, 7
    %v1434 = vsub.s32 0, %v1433
    %v1435 = vrot.slane %v1403, %v1434
    %v1437 = vmul.f32 %v1429, %v1435
    %v1438 = vmul.f32 %v1430, %v1435
    %v1440 = vlaneseq
    %v1441 = vshrl.u32 %v1440, 7
    %v1442 = vsub.s32 0, %v1441
    %v1443 = vrot.slane %v1404, %v1442
    %v1445 = vadd.f32 %v1437, %v1443
    %v1446 = vadd.f32 %v1438, %v1443
    %s1447 = scalar_lea.vmem %s8, 32
    %v1448 = vld [vmem:[%s1447] sm:$0xff]
    %v1449 = vld [vmem:[%s1447 + $0x8] sm:$0xff]
    %v1450 = vld [vmem:[%s1447 + $0x10] sm:$0xff]
    %v1451 = vld [vmem:[%s1447 + $0x18] sm:$0xff]
    %s1452 = scalar_lea.vmem %s9, 1
    %v1453 = vld [vmem:[%s1452] sm:$0x1]
    %v1455 = vlaneseq
    %v1456 = vshrl.u32 %v1455, 7
    %v1457 = vsub.s32 0, %v1456
    %v1458 = vrot.slane %v1453, %v1457
    %v1461 = vsel %vm227, %v1445, 0
    %v1464 = vsel %vm227, %v1446, 0
    %1466 = vmatprep.subr.mxu0 0.0
    %1467 = vmatpush1.msra.mxu0 %v1448
    %1468 = vmatprep.subr.mxu0 0.0
    %1469 = vmatpush1.msra.mxu0 %v1449
    %1470 = vmatprep.subr.mxu0 0.0
    %1471 = vmatpush1.msra.mxu0 %v1450
    %1472 = vmatprep.subr.mxu0 0.0
    %1473 = vmatpush1.msra.mxu0 %v1451
    %1474 = vmatprep.subr.mxu0 0.0
    %1475 = vmatpush1.msra.mxu0 0.0
    %1476 = vmatprep.subr.mxu0 0.0
    %1477 = vmatpush1.msra.mxu0 0.0
    %1478 = vmatprep.subr.mxu0 0.0
    %1479 = vmatpush1.msra.mxu0 0.0
    %1480 = vmatprep.subr.mxu0 0.0
    %1481 = vmatpush1.msra.mxu0 0.0
    %1482 = vmatprep.subr.mxu0 0.0
    %1483 = vmatpush1.msra.mxu0 0.0
    %1484 = vmatprep.subr.mxu0 0.0
    %1485 = vmatpush1.msra.mxu0 0.0
    %1486 = vmatprep.subr.mxu0 0.0
    %1487 = vmatpush1.msra.mxu0 0.0
    %1488 = vmatprep.subr.mxu0 0.0
    %1489 = vmatpush1.msra.mxu0 0.0
    %1490 = vmatprep.subr.mxu0 0.0
    %1491 = vmatpush1.msra.mxu0 0.0
    %1492 = vmatprep.subr.mxu0 0.0
    %1493 = vmatpush1.msra.mxu0 0.0
    %1494 = vmatprep.subr.mxu0 0.0
    %1495 = vmatpush1.msra.mxu0 0.0
    %1496 = vmatprep.subr.mxu0 0.0
    %1497 = vmatpush1.msra.mxu0 0.0
    %1498 = vmatprep.subr.mxu0 0.0
    %1499 = vmatpush1.msra.mxu0 0.0
    %1500 = vmatprep.subr.mxu0 0.0
    %1501 = vmatpush1.msra.mxu0 0.0
    %1502 = vmatprep.subr.mxu0 0.0
    %1503 = vmatpush1.msra.mxu0 0.0
    %1504 = vmatprep.subr.mxu0 0.0
    %1505 = vmatpush1.msra.mxu0 0.0
    %1506 = vmatprep.subr.mxu0 0.0
    %1507 = vmatpush1.msra.mxu0 0.0
    %1508 = vmatprep.subr.mxu0 0.0
    %1509 = vmatpush1.msra.mxu0 0.0
    %1510 = vmatprep.subr.mxu0 0.0
    %1511 = vmatpush1.msra.mxu0 0.0
    %1512 = vmatprep.subr.mxu0 0.0
    %1513 = vmatpush1.msra.mxu0 0.0
    %1514 = vmatprep.subr.mxu0 0.0
    %1515 = vmatpush1.msra.mxu0 0.0
    %1516 = vmatprep.subr.mxu0 0.0
    %1517 = vmatpush1.msra.mxu0 0.0
    %1518 = vmatprep.subr.mxu0 0.0
    %1519 = vmatpush1.msra.mxu0 0.0
    %1520 = vmatprep.subr.mxu0 0.0
    %1521 = vmatpush1.msra.mxu0 0.0
    %1522 = vmatprep.subr.mxu0 0.0
    %1523 = vmatpush1.msra.mxu0 0.0
    %1524 = vmatprep.subr.mxu0 0.0
    %1525 = vmatpush1.msra.mxu0 0.0
    %1526 = vmatprep.subr.mxu0 0.0
    %1527 = vmatpush1.msra.mxu0 0.0
    %1528 = vmatprep.subr.mxu0 0.0
    %1529 = vmatpush1.msra.mxu0 0.0
    %1530 = vmatprep.mubr.f32.mxu0 0.0
    %1531 = vmatmul.mubr.f32.gmra.mrb[0].mxu0 %v1461
    %v1532 = vpop.f32.mrb[0].mxu0
    %v1533 = vadd.f32 %v1458, %v1532
    %v1534 = vpop.f32.mrb[0].mxu0
    %1535 = vmatprep.mubr.f32.mxu0 0.0
    %1536 = vmatmul.mubr.f32.gmra.mrb[0].mxu0 %v1464
    %v1537 = vpop.f32.mrb[0].mxu0
    %v1538 = vadd.f32 %v1458, %v1537
    %v1539 = vpop.f32.mrb[0].mxu0
    %1540 = vdwg.mxu0
    %1542 = vrot.lane.b32.xlu0 %v1533, 112
    %v1543 = vpop.permute.xlu0 %1542
    %1545 = vrot.lane.b32.xlu0 %v1538, 112
    %v1546 = vpop.permute.xlu0 %1545
    %1547 = vrot.lane.b32.xlu0 %v1533, 96
    %v1548 = vpop.permute.xlu0 %1547
    %v1549 = vsel %vm378, %v1533, 0
    %v1551 = vsel %vm378, %v1548, 0
    %1553 = vmatprep.subr.mxu0 0.0
    %1554 = vmatpush1.xpose.msra.mxu0 %v1551
    %1555 = vmatprep.subr.mxu0 0.0
    %1556 = vmatpush1.xpose.msra.mxu0 0.0
    %1557 = vmatprep.subr.mxu0 0.0
    %1558 = vmatpush1.xpose.msra.mxu0 0.0
    %1559 = vmatprep.subr.mxu0 0.0
    %1560 = vmatpush1.xpose.msra.mxu0 0.0
    %1561 = vmatprep.subr.mxu0 0.0
    %1562 = vmatpush1.xpose.msra.mxu0 0.0
    %1563 = vmatprep.subr.mxu0 0.0
    %1564 = vmatpush1.xpose.msra.mxu0 0.0
    %1565 = vmatprep.subr.mxu0 0.0
    %1566 = vmatpush1.xpose.msra.mxu0 0.0
    %1567 = vmatprep.subr.mxu0 0.0
    %1568 = vmatpush1.xpose.msra.mxu0 0.0
    %1569 = vmatprep.subr.mxu0 0.0
    %1570 = vmatpush1.xpose.msra.mxu0 0.0
    %1571 = vmatprep.subr.mxu0 0.0
    %1572 = vmatpush1.xpose.msra.mxu0 0.0
    %1573 = vmatprep.subr.mxu0 0.0
    %1574 = vmatpush1.xpose.msra.mxu0 0.0
    %1575 = vmatprep.subr.mxu0 0.0
    %1576 = vmatpush1.xpose.msra.mxu0 0.0
    %1577 = vmatprep.subr.mxu0 0.0
    %1578 = vmatpush1.xpose.msra.mxu0 0.0
    %1579 = vmatprep.subr.mxu0 0.0
    %1580 = vmatpush1.xpose.msra.mxu0 0.0
    %1581 = vmatprep.subr.mxu0 0.0
    %1582 = vmatpush1.xpose.msra.mxu0 0.0
    %1583 = vmatprep.subr.mxu0 0.0
    %1584 = vmatpush1.xpose.msra.mxu0 0.0
    %1585 = vmatprep.subr.mxu0 0.0
    %1586 = vmatpush1.xpose.msra.mxu0 0.0
    %1587 = vmatprep.subr.mxu0 0.0
    %1588 = vmatpush1.xpose.msra.mxu0 0.0
    %1589 = vmatprep.subr.mxu0 0.0
    %1590 = vmatpush1.xpose.msra.mxu0 0.0
    %1591 = vmatprep.subr.mxu0 0.0
    %1592 = vmatpush1.xpose.msra.mxu0 0.0
    %1593 = vmatprep.subr.mxu0 0.0
    %1594 = vmatpush1.xpose.msra.mxu0 0.0
    %1595 = vmatprep.subr.mxu0 0.0
    %1596 = vmatpush1.xpose.msra.mxu0 0.0
    %1597 = vmatprep.subr.mxu0 0.0
    %1598 = vmatpush1.xpose.msra.mxu0 0.0
    %1599 = vmatprep.subr.mxu0 0.0
    %1600 = vmatpush1.xpose.msra.mxu0 0.0
    %1601 = vmatprep.subr.mxu0 0.0
    %1602 = vmatpush1.xpose.msra.mxu0 0.0
    %1603 = vmatprep.subr.mxu0 0.0
    %1604 = vmatpush1.xpose.msra.mxu0 0.0
    %1605 = vmatprep.subr.mxu0 0.0
    %1606 = vmatpush1.xpose.msra.mxu0 0.0
    %1607 = vmatprep.subr.mxu0 0.0
    %1608 = vmatpush1.xpose.msra.mxu0 0.0
    %1609 = vmatprep.subr.mxu0 0.0
    %1610 = vmatpush1.xpose.msra.mxu0 0.0
    %1611 = vmatprep.subr.mxu0 0.0
    %1612 = vmatpush1.xpose.msra.mxu0 0.0
    %1613 = vmatprep.subr.mxu0 0.0
    %1614 = vmatpush1.xpose.msra.mxu0 0.0
    %1615 = vmatprep.subr.mxu0 0.0
    %1616 = vmatpush1.xpose.msra.mxu0 0.0
    %1617 = vmatprep.mubr.f32.mxu0 0.0
    %1618 = vmatmul.mubr.f32.gmra.mrb[0].mxu0 %v1549
    %v1619 = vpop.f32.mrb[0].mxu0
    %v1620 = vadd.f32 0.0, %v1619
    %v1621 = vpop.f32.mrb[0].mxu0
    %1622 = vdwg.mxu0
    %1623 = vrot.lane.b32.xlu0 %v1543, 96
    %v1624 = vpop.permute.xlu0 %1623
    %v1625 = vsel %vm378, %v1543, 0
    %v1627 = vsel %vm378, %v1624, 0
    %1629 = vmatprep.subr.mxu0 0.0
    %1630 = vmatpush1.xpose.msra.mxu0 %v1627
    %1631 = vmatprep.subr.mxu0 0.0
    %1632 = vmatpush1.xpose.msra.mxu0 0.0
    %1633 = vmatprep.subr.mxu0 0.0
    %1634 = vmatpush1.xpose.msra.mxu0 0.0
    %1635 = vmatprep.subr.mxu0 0.0
    %1636 = vmatpush1.xpose.msra.mxu0 0.0
    %1637 = vmatprep.subr.mxu0 0.0
    %1638 = vmatpush1.xpose.msra.mxu0 0.0
    %1639 = vmatprep.subr.mxu0 0.0
    %1640 = vmatpush1.xpose.msra.mxu0 0.0
    %1641 = vmatprep.subr.mxu0 0.0
    %1642 = vmatpush1.xpose.msra.mxu0 0.0
    %1643 = vmatprep.subr.mxu0 0.0
    %1644 = vmatpush1.xpose.msra.mxu0 0.0
    %1645 = vmatprep.subr.mxu0 0.0
    %1646 = vmatpush1.xpose.msra.mxu0 0.0
    %1647 = vmatprep.subr.mxu0 0.0
    %1648 = vmatpush1.xpose.msra.mxu0 0.0
    %1649 = vmatprep.subr.mxu0 0.0
    %1650 = vmatpush1.xpose.msra.mxu0 0.0
    %1651 = vmatprep.subr.mxu0 0.0
    %1652 = vmatpush1.xpose.msra.mxu0 0.0
    %1653 = vmatprep.subr.mxu0 0.0
    %1654 = vmatpush1.xpose.msra.mxu0 0.0
    %1655 = vmatprep.subr.mxu0 0.0
    %1656 = vmatpush1.xpose.msra.mxu0 0.0
    %1657 = vmatprep.subr.mxu0 0.0
    %1658 = vmatpush1.xpose.msra.mxu0 0.0
    %1659 = vmatprep.subr.mxu0 0.0
    %1660 = vmatpush1.xpose.msra.mxu0 0.0
    %1661 = vmatprep.subr.mxu0 0.0
    %1662 = vmatpush1.xpose.msra.mxu0 0.0
    %1663 = vmatprep.subr.mxu0 0.0
    %1664 = vmatpush1.xpose.msra.mxu0 0.0
    %1665 = vmatprep.subr.mxu0 0.0
    %1666 = vmatpush1.xpose.msra.mxu0 0.0
    %1667 = vmatprep.subr.mxu0 0.0
    %1668 = vmatpush1.xpose.msra.mxu0 0.0
    %1669 = vmatprep.subr.mxu0 0.0
    %1670 = vmatpush1.xpose.msra.mxu0 0.0
    %1671 = vmatprep.subr.mxu0 0.0
    %1672 = vmatpush1.xpose.msra.mxu0 0.0
    %1673 = vmatprep.subr.mxu0 0.0
    %1674 = vmatpush1.xpose.msra.mxu0 0.0
    %1675 = vmatprep.subr.mxu0 0.0
    %1676 = vmatpush1.xpose.msra.mxu0 0.0
    %1677 = vmatprep.subr.mxu0 0.0
    %1678 = vmatpush1.xpose.msra.mxu0 0.0
    %1679 = vmatprep.subr.mxu0 0.0
    %1680 = vmatpush1.xpose.msra.mxu0 0.0
    %1681 = vmatprep.subr.mxu0 0.0
    %1682 = vmatpush1.xpose.msra.mxu0 0.0
    %1683 = vmatprep.subr.mxu0 0.0
    %1684 = vmatpush1.xpose.msra.mxu0 0.0
    %1685 = vmatprep.subr.mxu0 0.0
    %1686 = vmatpush1.xpose.msra.mxu0 0.0
    %1687 = vmatprep.subr.mxu0 0.0
    %1688 = vmatpush1.xpose.msra.mxu0 0.0
    %1689 = vmatprep.subr.mxu0 0.0
    %1690 = vmatpush1.xpose.msra.mxu0 0.0
    %1691 = vmatprep.subr.mxu0 0.0
    %1692 = vmatpush1.xpose.msra.mxu0 0.0
    %1693 = vmatprep.mubr.f32.mxu0 0.0
    %1694 = vmatmul.mubr.f32.gmra.mrb[0].mxu0 %v1625
    %v1695 = vpop.f32.mrb[0].mxu0
    %v1696 = vadd.f32 0.0, %v1695
    %v1697 = vpop.f32.mrb[0].mxu0
    %1698 = vdwg.mxu0
    %1699 = vrot.lane.b32.xlu0 %v1538, 96
    %v1700 = vpop.permute.xlu0 %1699
    %v1701 = vsel %vm378, %v1538, 0
    %v1703 = vsel %vm378, %v1700, 0
    %1705 = vmatprep.subr.mxu0 0.0
    %1706 = vmatpush1.xpose.msra.mxu0 %v1703
    %1707 = vmatprep.subr.mxu0 0.0
    %1708 = vmatpush1.xpose.msra.mxu0 0.0
    %1709 = vmatprep.subr.mxu0 0.0
    %1710 = vmatpush1.xpose.msra.mxu0 0.0
    %1711 = vmatprep.subr.mxu0 0.0
    %1712 = vmatpush1.xpose.msra.mxu0 0.0
    %1713 = vmatprep.subr.mxu0 0.0
    %1714 = vmatpush1.xpose.msra.mxu0 0.0
    %1715 = vmatprep.subr.mxu0 0.0
    %1716 = vmatpush1.xpose.msra.mxu0 0.0
    %1717 = vmatprep.subr.mxu0 0.0
    %1718 = vmatpush1.xpose.msra.mxu0 0.0
    %1719 = vmatprep.subr.mxu0 0.0
    %1720 = vmatpush1.xpose.msra.mxu0 0.0
    %1721 = vmatprep.subr.mxu0 0.0
    %1722 = vmatpush1.xpose.msra.mxu0 0.0
    %1723 = vmatprep.subr.mxu0 0.0
    %1724 = vmatpush1.xpose.msra.mxu0 0.0
    %1725 = vmatprep.subr.mxu0 0.0
    %1726 = vmatpush1.xpose.msra.mxu0 0.0
    %1727 = vmatprep.subr.mxu0 0.0
    %1728 = vmatpush1.xpose.msra.mxu0 0.0
    %1729 = vmatprep.subr.mxu0 0.0
    %1730 = vmatpush1.xpose.msra.mxu0 0.0
    %1731 = vmatprep.subr.mxu0 0.0
    %1732 = vmatpush1.xpose.msra.mxu0 0.0
    %1733 = vmatprep.subr.mxu0 0.0
    %1734 = vmatpush1.xpose.msra.mxu0 0.0
    %1735 = vmatprep.subr.mxu0 0.0
    %1736 = vmatpush1.xpose.msra.mxu0 0.0
    %1737 = vmatprep.subr.mxu0 0.0
    %1738 = vmatpush1.xpose.msra.mxu0 0.0
    %1739 = vmatprep.subr.mxu0 0.0
    %1740 = vmatpush1.xpose.msra.mxu0 0.0
    %1741 = vmatprep.subr.mxu0 0.0
    %1742 = vmatpush1.xpose.msra.mxu0 0.0
    %1743 = vmatprep.subr.mxu0 0.0
    %1744 = vmatpush1.xpose.msra.mxu0 0.0
    %1745 = vmatprep.subr.mxu0 0.0
    %1746 = vmatpush1.xpose.msra.mxu0 0.0
    %1747 = vmatprep.subr.mxu0 0.0
    %1748 = vmatpush1.xpose.msra.mxu0 0.0
    %1749 = vmatprep.subr.mxu0 0.0
    %1750 = vmatpush1.xpose.msra.mxu0 0.0
    %1751 = vmatprep.subr.mxu0 0.0
    %1752 = vmatpush1.xpose.msra.mxu0 0.0
    %1753 = vmatprep.subr.mxu0 0.0
    %1754 = vmatpush1.xpose.msra.mxu0 0.0
    %1755 = vmatprep.subr.mxu0 0.0
    %1756 = vmatpush1.xpose.msra.mxu0 0.0
    %1757 = vmatprep.subr.mxu0 0.0
    %1758 = vmatpush1.xpose.msra.mxu0 0.0
    %1759 = vmatprep.subr.mxu0 0.0
    %1760 = vmatpush1.xpose.msra.mxu0 0.0
    %1761 = vmatprep.subr.mxu0 0.0
    %1762 = vmatpush1.xpose.msra.mxu0 0.0
    %1763 = vmatprep.subr.mxu0 0.0
    %1764 = vmatpush1.xpose.msra.mxu0 0.0
    %1765 = vmatprep.subr.mxu0 0.0
    %1766 = vmatpush1.xpose.msra.mxu0 0.0
    %1767 = vmatprep.subr.mxu0 0.0
    %1768 = vmatpush1.xpose.msra.mxu0 0.0
    %1769 = vmatprep.mubr.f32.mxu0 0.0
    %1770 = vmatmul.mubr.f32.gmra.mrb[0].mxu0 %v1701
    %v1771 = vpop.f32.mrb[0].mxu0
    %v1772 = vadd.f32 0.0, %v1771
    %v1773 = vpop.f32.mrb[0].mxu0
    %1774 = vdwg.mxu0
    %1775 = vrot.lane.b32.xlu0 %v1546, 96
    %v1776 = vpop.permute.xlu0 %1775
    %v1777 = vsel %vm378, %v1546, 0
    %v1779 = vsel %vm378, %v1776, 0
    %1781 = vmatprep.subr.mxu0 0.0
    %1782 = vmatpush1.xpose.msra.mxu0 %v1779
    %1783 = vmatprep.subr.mxu0 0.0
    %1784 = vmatpush1.xpose.msra.mxu0 0.0
    %1785 = vmatprep.subr.mxu0 0.0
    %1786 = vmatpush1.xpose.msra.mxu0 0.0
    %1787 = vmatprep.subr.mxu0 0.0
    %1788 = vmatpush1.xpose.msra.mxu0 0.0
    %1789 = vmatprep.subr.mxu0 0.0
    %1790 = vmatpush1.xpose.msra.mxu0 0.0
    %1791 = vmatprep.subr.mxu0 0.0
    %1792 = vmatpush1.xpose.msra.mxu0 0.0
    %1793 = vmatprep.subr.mxu0 0.0
    %1794 = vmatpush1.xpose.msra.mxu0 0.0
    %1795 = vmatprep.subr.mxu0 0.0
    %1796 = vmatpush1.xpose.msra.mxu0 0.0
    %1797 = vmatprep.subr.mxu0 0.0
    %1798 = vmatpush1.xpose.msra.mxu0 0.0
    %1799 = vmatprep.subr.mxu0 0.0
    %1800 = vmatpush1.xpose.msra.mxu0 0.0
    %1801 = vmatprep.subr.mxu0 0.0
    %1802 = vmatpush1.xpose.msra.mxu0 0.0
    %1803 = vmatprep.subr.mxu0 0.0
    %1804 = vmatpush1.xpose.msra.mxu0 0.0
    %1805 = vmatprep.subr.mxu0 0.0
    %1806 = vmatpush1.xpose.msra.mxu0 0.0
    %1807 = vmatprep.subr.mxu0 0.0
    %1808 = vmatpush1.xpose.msra.mxu0 0.0
    %1809 = vmatprep.subr.mxu0 0.0
    %1810 = vmatpush1.xpose.msra.mxu0 0.0
    %1811 = vmatprep.subr.mxu0 0.0
    %1812 = vmatpush1.xpose.msra.mxu0 0.0
    %1813 = vmatprep.subr.mxu0 0.0
    %1814 = vmatpush1.xpose.msra.mxu0 0.0
    %1815 = vmatprep.subr.mxu0 0.0
    %1816 = vmatpush1.xpose.msra.mxu0 0.0
    %1817 = vmatprep.subr.mxu0 0.0
    %1818 = vmatpush1.xpose.msra.mxu0 0.0
    %1819 = vmatprep.subr.mxu0 0.0
    %1820 = vmatpush1.xpose.msra.mxu0 0.0
    %1821 = vmatprep.subr.mxu0 0.0
    %1822 = vmatpush1.xpose.msra.mxu0 0.0
    %1823 = vmatprep.subr.mxu0 0.0
    %1824 = vmatpush1.xpose.msra.mxu0 0.0
    %1825 = vmatprep.subr.mxu0 0.0
    %1826 = vmatpush1.xpose.msra.mxu0 0.0
    %1827 = vmatprep.subr.mxu0 0.0
    %1828 = vmatpush1.xpose.msra.mxu0 0.0
    %1829 = vmatprep.subr.mxu0 0.0
    %1830 = vmatpush1.xpose.msra.mxu0 0.0
    %1831 = vmatprep.subr.mxu0 0.0
    %1832 = vmatpush1.xpose.msra.mxu0 0.0
    %1833 = vmatprep.subr.mxu0 0.0
    %1834 = vmatpush1.xpose.msra.mxu0 0.0
    %1835 = vmatprep.subr.mxu0 0.0
    %1836 = vmatpush1.xpose.msra.mxu0 0.0
    %1837 = vmatprep.subr.mxu0 0.0
    %1838 = vmatpush1.xpose.msra.mxu0 0.0
    %1839 = vmatprep.subr.mxu0 0.0
    %1840 = vmatpush1.xpose.msra.mxu0 0.0
    %1841 = vmatprep.subr.mxu0 0.0
    %1842 = vmatpush1.xpose.msra.mxu0 0.0
    %1843 = vmatprep.subr.mxu0 0.0
    %1844 = vmatpush1.xpose.msra.mxu0 0.0
    %1845 = vmatprep.mubr.f32.mxu0 0.0
    %1846 = vmatmul.mubr.f32.gmra.mrb[0].mxu0 %v1777
    %v1847 = vpop.f32.mrb[0].mxu0
    %v1848 = vadd.f32 0.0, %v1847
    %v1849 = vpop.f32.mrb[0].mxu0
    %1850 = vdwg.mxu0
    %v1851 = vmul.f32 %v1620, 0.25
    %v1852 = vmul.f32 %v1696, 0.25
    %v1853 = vmul.f32 %v1772, 0.25
    %v1854 = vmul.f32 %v1848, 0.25
    %v1855 = vadd.f32 %v1851, %v688
    %v1856 = vadd.f32 %v1852, %v688
    %v1857 = vadd.f32 %v1853, %v692
    %v1858 = vadd.f32 %v1854, %v692
    %v1859 = vsel %vm697, %v1855, -inf
    %1860 = vmax.xlane.f32.xlu0 %v1859
    %v1861 = vpop.xlane.xlu0 %1860
    %v1862 = vsel %vm697, %v1856, -inf
    %1863 = vmax.xlane.f32.xlu0 %v1862
    %v1864 = vpop.xlane.xlu0 %1863
    %v1865 = vsel %vm697, %v1857, -inf
    %1866 = vmax.xlane.f32.xlu0 %v1865
    %v1867 = vpop.xlane.xlu0 %1866
    %v1868 = vsel %vm697, %v1858, -inf
    %1869 = vmax.xlane.f32.xlu0 %v1868
    %v1870 = vpop.xlane.xlu0 %1869
    %v1871 = vsub.f32 %v1855, %v1861
    %v1872 = vsub.f32 %v1856, %v1864
    %v1873 = vsub.f32 %v1857, %v1867
    %v1874 = vsub.f32 %v1858, %v1870
    %v1875 = vmul.f32 %v1871, 1.442695
    %v1876 = vpow.pop %v1875
    %v1877 = vmul.f32 %v1872, 1.442695
    %v1878 = vpow.pop %v1877
    %v1879 = vmul.f32 %v1873, 1.442695
    %v1880 = vpow.pop %v1879
    %v1881 = vmul.f32 %v1874, 1.442695
    %v1882 = vpow.pop %v1881
    %v1883 = vsel %vm697, %v1876, 0.0
    %1884 = vadd.xlane.f32.xlu0 %v1883
    %v1885 = vpop.xlane.xlu0 %1884
    %v1886 = vsel %vm697, %v1878, 0.0
    %1887 = vadd.xlane.f32.xlu0 %v1886
    %v1888 = vpop.xlane.xlu0 %1887
    %v1889 = vsel %vm697, %v1880, 0.0
    %1890 = vadd.xlane.f32.xlu0 %v1889
    %v1891 = vpop.xlane.xlu0 %1890
    %v1892 = vsel %vm697, %v1882, 0.0
    %1893 = vadd.xlane.f32.xlu0 %v1892
    %v1894 = vpop.xlane.xlu0 %1893
    %v1895 = vrcp.pop %v1885
    %v1896 = vmul.f32 %v1876, %v1895
    %v1897 = vrcp.pop %v1888
    %v1898 = vmul.f32 %v1878, %v1897
    %v1899 = vrcp.pop %v1891
    %v1900 = vmul.f32 %v1880, %v1899
    %v1901 = vrcp.pop %v1894
    %v1902 = vmul.f32 %v1882, %v1901
    %1903 = vrot.lane.b32.xlu0 %v1533, 64
    %v1904 = vpop.permute.xlu0 %1903
    %v1907 = vsel %vm697, %v1896, 0
    %1909 = vmatprep.subr.mxu0 0.0
    %1910 = vmatpush1.msra.mxu0 %v1904
    %1911 = vmatprep.subr.mxu0 0.0
    %1912 = vmatpush1.msra.mxu0 0.0
    %1913 = vmatprep.subr.mxu0 0.0
    %1914 = vmatpush1.msra.mxu0 0.0
    %1915 = vmatprep.subr.mxu0 0.0
    %1916 = vmatpush1.msra.mxu0 0.0
    %1917 = vmatprep.subr.mxu0 0.0
    %1918 = vmatpush1.msra.mxu0 0.0
    %1919 = vmatprep.subr.mxu0 0.0
    %1920 = vmatpush1.msra.mxu0 0.0
    %1921 = vmatprep.subr.mxu0 0.0
    %1922 = vmatpush1.msra.mxu0 0.0
    %1923 = vmatprep.subr.mxu0 0.0
    %1924 = vmatpush1.msra.mxu0 0.0
    %1925 = vmatprep.subr.mxu0 0.0
    %1926 = vmatpush1.msra.mxu0 0.0
    %1927 = vmatprep.subr.mxu0 0.0
    %1928 = vmatpush1.msra.mxu0 0.0
    %1929 = vmatprep.subr.mxu0 0.0
    %1930 = vmatpush1.msra.mxu0 0.0
    %1931 = vmatprep.subr.mxu0 0.0
    %1932 = vmatpush1.msra.mxu0 0.0
    %1933 = vmatprep.subr.mxu0 0.0
    %1934 = vmatpush1.msra.mxu0 0.0
    %1935 = vmatprep.subr.mxu0 0.0
    %1936 = vmatpush1.msra.mxu0 0.0
    %1937 = vmatprep.subr.mxu0 0.0
    %1938 = vmatpush1.msra.mxu0 0.0
    %1939 = vmatprep.subr.mxu0 0.0
    %1940 = vmatpush1.msra.mxu0 0.0
    %1941 = vmatprep.subr.mxu0 0.0
    %1942 = vmatpush1.msra.mxu0 0.0
    %1943 = vmatprep.subr.mxu0 0.0
    %1944 = vmatpush1.msra.mxu0 0.0
    %1945 = vmatprep.subr.mxu0 0.0
    %1946 = vmatpush1.msra.mxu0 0.0
    %1947 = vmatprep.subr.mxu0 0.0
    %1948 = vmatpush1.msra.mxu0 0.0
    %1949 = vmatprep.subr.mxu0 0.0
    %1950 = vmatpush1.msra.mxu0 0.0
    %1951 = vmatprep.subr.mxu0 0.0
    %1952 = vmatpush1.msra.mxu0 0.0
    %1953 = vmatprep.subr.mxu0 0.0
    %1954 = vmatpush1.msra.mxu0 0.0
    %1955 = vmatprep.subr.mxu0 0.0
    %1956 = vmatpush1.msra.mxu0 0.0
    %1957 = vmatprep.subr.mxu0 0.0
    %1958 = vmatpush1.msra.mxu0 0.0
    %1959 = vmatprep.subr.mxu0 0.0
    %1960 = vmatpush1.msra.mxu0 0.0
    %1961 = vmatprep.subr.mxu0 0.0
    %1962 = vmatpush1.msra.mxu0 0.0
    %1963 = vmatprep.subr.mxu0 0.0
    %1964 = vmatpush1.msra.mxu0 0.0
    %1965 = vmatprep.subr.mxu0 0.0
    %1966 = vmatpush1.msra.mxu0 0.0
    %1967 = vmatprep.subr.mxu0 0.0
    %1968 = vmatpush1.msra.mxu0 0.0
    %1969 = vmatprep.subr.mxu0 0.0
    %1970 = vmatpush1.msra.mxu0 0.0
    %1971 = vmatprep.subr.mxu0 0.0
    %1972 = vmatpush1.msra.mxu0 0.0
    %1973 = vmatprep.mubr.f32.mxu0 0.0
    %1974 = vmatmul.mubr.f32.gmra.mrb[0].mxu0 %v1907
    %v1975 = vpop.f32.mrb[0].mxu0
    %v1976 = vadd.f32 0.0, %v1975
    %v1977 = vpop.f32.mrb[0].mxu0
    %1978 = vdwg.mxu0
    %1979 = vrot.lane.b32.xlu0 %v1543, 64
    %v1980 = vpop.permute.xlu0 %1979
    %v1983 = vsel %vm697, %v1898, 0
    %1985 = vmatprep.subr.mxu0 0.0
    %1986 = vmatpush1.msra.mxu0 %v1980
    %1987 = vmatprep.subr.mxu0 0.0
    %1988 = vmatpush1.msra.mxu0 0.0
    %1989 = vmatprep.subr.mxu0 0.0
    %1990 = vmatpush1.msra.mxu0 0.0
    %1991 = vmatprep.subr.mxu0 0.0
    %1992 = vmatpush1.msra.mxu0 0.0
    %1993 = vmatprep.subr.mxu0 0.0
    %1994 = vmatpush1.msra.mxu0 0.0
    %1995 = vmatprep.subr.mxu0 0.0
    %1996 = vmatpush1.msra.mxu0 0.0
    %1997 = vmatprep.subr.mxu0 0.0
    %1998 = vmatpush1.msra.mxu0 0.0
    %1999 = vmatprep.subr.mxu0 0.0
    %2000 = vmatpush1.msra.mxu0 0.0
    %2001 = vmatprep.subr.mxu0 0.0
    %2002 = vmatpush1.msra.mxu0 0.0
    %2003 = vmatprep.subr.mxu0 0.0
    %2004 = vmatpush1.msra.mxu0 0.0
    %2005 = vmatprep.subr.mxu0 0.0
    %2006 = vmatpush1.msra.mxu0 0.0
    %2007 = vmatprep.subr.mxu0 0.0
    %2008 = vmatpush1.msra.mxu0 0.0
    %2009 = vmatprep.subr.mxu0 0.0
    %2010 = vmatpush1.msra.mxu0 0.0
    %2011 = vmatprep.subr.mxu0 0.0
    %2012 = vmatpush1.msra.mxu0 0.0
    %2013 = vmatprep.subr.mxu0 0.0
    %2014 = vmatpush1.msra.mxu0 0.0
    %2015 = vmatprep.subr.mxu0 0.0
    %2016 = vmatpush1.msra.mxu0 0.0
    %2017 = vmatprep.subr.mxu0 0.0
    %2018 = vmatpush1.msra.mxu0 0.0
    %2019 = vmatprep.subr.mxu0 0.0
    %2020 = vmatpush1.msra.mxu0 0.0
    %2021 = vmatprep.subr.mxu0 0.0
    %2022 = vmatpush1.msra.mxu0 0.0
    %2023 = vmatprep.subr.mxu0 0.0
    %2024 = vmatpush1.msra.mxu0 0.0
    %2025 = vmatprep.subr.mxu0 0.0
    %2026 = vmatpush1.msra.mxu0 0.0
    %2027 = vmatprep.subr.mxu0 0.0
    %2028 = vmatpush1.msra.mxu0 0.0
    %2029 = vmatprep.subr.mxu0 0.0
    %2030 = vmatpush1.msra.mxu0 0.0
    %2031 = vmatprep.subr.mxu0 0.0
    %2032 = vmatpush1.msra.mxu0 0.0
    %2033 = vmatprep.subr.mxu0 0.0
    %2034 = vmatpush1.msra.mxu0 0.0
    %2035 = vmatprep.subr.mxu0 0.0
    %2036 = vmatpush1.msra.mxu0 0.0
    %2037 = vmatprep.subr.mxu0 0.0
    %2038 = vmatpush1.msra.mxu0 0.0
    %2039 = vmatprep.subr.mxu0 0.0
    %2040 = vmatpush1.msra.mxu0 0.0
    %2041 = vmatprep.subr.mxu0 0.0
    %2042 = vmatpush1.msra.mxu0 0.0
    %2043 = vmatprep.subr.mxu0 0.0
    %2044 = vmatpush1.msra.mxu0 0.0
    %2045 = vmatprep.subr.mxu0 0.0
    %2046 = vmatpush1.msra.mxu0 0.0
    %2047 = vmatprep.subr.mxu0 0.0
    %2048 = vmatpush1.msra.mxu0 0.0
    %2049 = vmatprep.mubr.f32.mxu0 0.0
    %2050 = vmatmul.mubr.f32.gmra.mrb[0].mxu0 %v1983
    %v2051 = vpop.f32.mrb[0].mxu0
    %v2052 = vadd.f32 0.0, %v2051
    %v2053 = vpop.f32.mrb[0].mxu0
    %2054 = vdwg.mxu0
    %2055 = vrot.lane.b32.xlu0 %v1538, 64
    %v2056 = vpop.permute.xlu0 %2055
    %v2059 = vsel %vm697, %v1900, 0
    %2061 = vmatprep.subr.mxu0 0.0
    %2062 = vmatpush1.msra.mxu0 %v2056
    %2063 = vmatprep.subr.mxu0 0.0
    %2064 = vmatpush1.msra.mxu0 0.0
    %2065 = vmatprep.subr.mxu0 0.0
    %2066 = vmatpush1.msra.mxu0 0.0
    %2067 = vmatprep.subr.mxu0 0.0
    %2068 = vmatpush1.msra.mxu0 0.0
    %2069 = vmatprep.subr.mxu0 0.0
    %2070 = vmatpush1.msra.mxu0 0.0
    %2071 = vmatprep.subr.mxu0 0.0
    %2072 = vmatpush1.msra.mxu0 0.0
    %2073 = vmatprep.subr.mxu0 0.0
    %2074 = vmatpush1.msra.mxu0 0.0
    %2075 = vmatprep.subr.mxu0 0.0
    %2076 = vmatpush1.msra.mxu0 0.0
    %2077 = vmatprep.subr.mxu0 0.0
    %2078 = vmatpush1.msra.mxu0 0.0
    %2079 = vmatprep.subr.mxu0 0.0
    %2080 = vmatpush1.msra.mxu0 0.0
    %2081 = vmatprep.subr.mxu0 0.0
    %2082 = vmatpush1.msra.mxu0 0.0
    %2083 = vmatprep.subr.mxu0 0.0
    %2084 = vmatpush1.msra.mxu0 0.0
    %2085 = vmatprep.subr.mxu0 0.0
    %2086 = vmatpush1.msra.mxu0 0.0
    %2087 = vmatprep.subr.mxu0 0.0
    %2088 = vmatpush1.msra.mxu0 0.0
    %2089 = vmatprep.subr.mxu0 0.0
    %2090 = vmatpush1.msra.mxu0 0.0
    %2091 = vmatprep.subr.mxu0 0.0
    %2092 = vmatpush1.msra.mxu0 0.0
    %2093 = vmatprep.subr.mxu0 0.0
    %2094 = vmatpush1.msra.mxu0 0.0
    %2095 = vmatprep.subr.mxu0 0.0
    %2096 = vmatpush1.msra.mxu0 0.0
    %2097 = vmatprep.subr.mxu0 0.0
    %2098 = vmatpush1.msra.mxu0 0.0
    %2099 = vmatprep.subr.mxu0 0.0
    %2100 = vmatpush1.msra.mxu0 0.0
    %2101 = vmatprep.subr.mxu0 0.0
    %2102 = vmatpush1.msra.mxu0 0.0
    %2103 = vmatprep.subr.mxu0 0.0
    %2104 = vmatpush1.msra.mxu0 0.0
    %2105 = vmatprep.subr.mxu0 0.0
    %2106 = vmatpush1.msra.mxu0 0.0
    %2107 = vmatprep.subr.mxu0 0.0
    %2108 = vmatpush1.msra.mxu0 0.0
    %2109 = vmatprep.subr.mxu0 0.0
    %2110 = vmatpush1.msra.mxu0 0.0
    %2111 = vmatprep.subr.mxu0 0.0
    %2112 = vmatpush1.msra.mxu0 0.0
    %2113 = vmatprep.subr.mxu0 0.0
    %2114 = vmatpush1.msra.mxu0 0.0
    %2115 = vmatprep.subr.mxu0 0.0
    %2116 = vmatpush1.msra.mxu0 0.0
    %2117 = vmatprep.subr.mxu0 0.0
    %2118 = vmatpush1.msra.mxu0 0.0
    %2119 = vmatprep.subr.mxu0 0.0
    %2120 = vmatpush1.msra.mxu0 0.0
    %2121 = vmatprep.subr.mxu0 0.0
    %2122 = vmatpush1.msra.mxu0 0.0
    %2123 = vmatprep.subr.mxu0 0.0
    %2124 = vmatpush1.msra.mxu0 0.0
    %2125 = vmatprep.mubr.f32.mxu0 0.0
    %2126 = vmatmul.mubr.f32.gmra.mrb[0].mxu0 %v2059
    %v2127 = vpop.f32.mrb[0].mxu0
    %v2128 = vadd.f32 0.0, %v2127
    %v2129 = vpop.f32.mrb[0].mxu0
    %2130 = vdwg.mxu0
    %2131 = vrot.lane.b32.xlu0 %v1546, 64
    %v2132 = vpop.permute.xlu0 %2131
    %v2135 = vsel %vm697, %v1902, 0
    %2137 = vmatprep.subr.mxu0 0.0
    %2138 = vmatpush1.msra.mxu0 %v2132
    %2139 = vmatprep.subr.mxu0 0.0
    %2140 = vmatpush1.msra.mxu0 0.0
    %2141 = vmatprep.subr.mxu0 0.0
    %2142 = vmatpush1.msra.mxu0 0.0
    %2143 = vmatprep.subr.mxu0 0.0
    %2144 = vmatpush1.msra.mxu0 0.0
    %2145 = vmatprep.subr.mxu0 0.0
    %2146 = vmatpush1.msra.mxu0 0.0
    %2147 = vmatprep.subr.mxu0 0.0
    %2148 = vmatpush1.msra.mxu0 0.0
    %2149 = vmatprep.subr.mxu0 0.0
    %2150 = vmatpush1.msra.mxu0 0.0
    %2151 = vmatprep.subr.mxu0 0.0
    %2152 = vmatpush1.msra.mxu0 0.0
    %2153 = vmatprep.subr.mxu0 0.0
    %2154 = vmatpush1.msra.mxu0 0.0
    %2155 = vmatprep.subr.mxu0 0.0
    %2156 = vmatpush1.msra.mxu0 0.0
    %2157 = vmatprep.subr.mxu0 0.0
    %2158 = vmatpush1.msra.mxu0 0.0
    %2159 = vmatprep.subr.mxu0 0.0
    %2160 = vmatpush1.msra.mxu0 0.0
    %2161 = vmatprep.subr.mxu0 0.0
    %2162 = vmatpush1.msra.mxu0 0.0
    %2163 = vmatprep.subr.mxu0 0.0
    %2164 = vmatpush1.msra.mxu0 0.0
    %2165 = vmatprep.subr.mxu0 0.0
    %2166 = vmatpush1.msra.mxu0 0.0
    %2167 = vmatprep.subr.mxu0 0.0
    %2168 = vmatpush1.msra.mxu0 0.0
    %2169 = vmatprep.subr.mxu0 0.0
    %2170 = vmatpush1.msra.mxu0 0.0
    %2171 = vmatprep.subr.mxu0 0.0
    %2172 = vmatpush1.msra.mxu0 0.0
    %2173 = vmatprep.subr.mxu0 0.0
    %2174 = vmatpush1.msra.mxu0 0.0
    %2175 = vmatprep.subr.mxu0 0.0
    %2176 = vmatpush1.msra.mxu0 0.0
    %2177 = vmatprep.subr.mxu0 0.0
    %2178 = vmatpush1.msra.mxu0 0.0
    %2179 = vmatprep.subr.mxu0 0.0
    %2180 = vmatpush1.msra.mxu0 0.0
    %2181 = vmatprep.subr.mxu0 0.0
    %2182 = vmatpush1.msra.mxu0 0.0
    %2183 = vmatprep.subr.mxu0 0.0
    %2184 = vmatpush1.msra.mxu0 0.0
    %2185 = vmatprep.subr.mxu0 0.0
    %2186 = vmatpush1.msra.mxu0 0.0
    %2187 = vmatprep.subr.mxu0 0.0
    %2188 = vmatpush1.msra.mxu0 0.0
    %2189 = vmatprep.subr.mxu0 0.0
    %2190 = vmatpush1.msra.mxu0 0.0
    %2191 = vmatprep.subr.mxu0 0.0
    %2192 = vmatpush1.msra.mxu0 0.0
    %2193 = vmatprep.subr.mxu0 0.0
    %2194 = vmatpush1.msra.mxu0 0.0
    %2195 = vmatprep.subr.mxu0 0.0
    %2196 = vmatpush1.msra.mxu0 0.0
    %2197 = vmatprep.subr.mxu0 0.0
    %2198 = vmatpush1.msra.mxu0 0.0
    %2199 = vmatprep.subr.mxu0 0.0
    %2200 = vmatpush1.msra.mxu0 0.0
    %2201 = vmatprep.mubr.f32.mxu0 0.0
    %2202 = vmatmul.mubr.f32.gmra.mrb[0].mxu0 %v2135
    %v2203 = vpop.f32.mrb[0].mxu0
    %v2204 = vadd.f32 0.0, %v2203
    %v2205 = vpop.f32.mrb[0].mxu0
    %2206 = vdwg.mxu0
    %2208 = vrot.lane.b32.xlu0 %v2052, 16
    %v2209 = vpop.permute.xlu0 %2208
    %v2211 = vsel %vm378, %v1976, %v2209
    %2213 = vrot.lane.b32.xlu0 %v2204, 16
    %v2214 = vpop.permute.xlu0 %2213
    %v2216 = vsel %vm378, %v2128, %v2214
    %s2217 = scalar_lea.vmem %s10, 32
    %v2218 = vld [vmem:[%s2217] sm:$0xff]
    %v2219 = vld [vmem:[%s2217 + $0x8] sm:$0xff]
    %v2220 = vld [vmem:[%s2217 + $0x10] sm:$0xff]
    %v2221 = vld [vmem:[%s2217 + $0x18] sm:$0xff]
    %s2222 = scalar_lea.vmem %s11, 1
    %v2223 = vld [vmem:[%s2222] sm:$0x1]
    %v2225 = vlaneseq
    %v2226 = vshrl.u32 %v2225, 7
    %v2227 = vsub.s32 0, %v2226
    %v2228 = vrot.slane %v2223, %v2227
    %v2231 = vsel %vm227, %v2211, 0
    %v2234 = vsel %vm227, %v2216, 0
    %2236 = vmatprep.subr.mxu0 0.0
    %2237 = vmatpush1.msra.mxu0 %v2218
    %2238 = vmatprep.subr.mxu0 0.0
    %2239 = vmatpush1.msra.mxu0 %v2219
    %2240 = vmatprep.subr.mxu0 0.0
    %2241 = vmatpush1.msra.mxu0 %v2220
    %2242 = vmatprep.subr.mxu0 0.0
    %2243 = vmatpush1.msra.mxu0 %v2221
    %2244 = vmatprep.subr.mxu0 0.0
    %2245 = vmatpush1.msra.mxu0 0.0
    %2246 = vmatprep.subr.mxu0 0.0
    %2247 = vmatpush1.msra.mxu0 0.0
    %2248 = vmatprep.subr.mxu0 0.0
    %2249 = vmatpush1.msra.mxu0 0.0
    %2250 = vmatprep.subr.mxu0 0.0
    %2251 = vmatpush1.msra.mxu0 0.0
    %2252 = vmatprep.subr.mxu0 0.0
    %2253 = vmatpush1.msra.mxu0 0.0
    %2254 = vmatprep.subr.mxu0 0.0
    %2255 = vmatpush1.msra.mxu0 0.0
    %2256 = vmatprep.subr.mxu0 0.0
    %2257 = vmatpush1.msra.mxu0 0.0
    %2258 = vmatprep.subr.mxu0 0.0
    %2259 = vmatpush1.msra.mxu0 0.0
    %2260 = vmatprep.subr.mxu0 0.0
    %2261 = vmatpush1.msra.mxu0 0.0
    %2262 = vmatprep.subr.mxu0 0.0
    %2263 = vmatpush1.msra.mxu0 0.0
    %2264 = vmatprep.subr.mxu0 0.0
    %2265 = vmatpush1.msra.mxu0 0.0
    %2266 = vmatprep.subr.mxu0 0.0
    %2267 = vmatpush1.msra.mxu0 0.0
    %2268 = vmatprep.subr.mxu0 0.0
    %2269 = vmatpush1.msra.mxu0 0.0
    %2270 = vmatprep.subr.mxu0 0.0
    %2271 = vmatpush1.msra.mxu0 0.0
    %2272 = vmatprep.subr.mxu0 0.0
    %2273 = vmatpush1.msra.mxu0 0.0
    %2274 = vmatprep.subr.mxu0 0.0
    %2275 = vmatpush1.msra.mxu0 0.0
    %2276 = vmatprep.subr.mxu0 0.0
    %2277 = vmatpush1.msra.mxu0 0.0
    %2278 = vmatprep.subr.mxu0 0.0
    %2279 = vmatpush1.msra.mxu0 0.0
    %2280 = vmatprep.subr.mxu0 0.0
    %2281 = vmatpush1.msra.mxu0 0.0
    %2282 = vmatprep.subr.mxu0 0.0
    %2283 = vmatpush1.msra.mxu0 0.0
    %2284 = vmatprep.subr.mxu0 0.0
    %2285 = vmatpush1.msra.mxu0 0.0
    %2286 = vmatprep.subr.mxu0 0.0
    %2287 = vmatpush1.msra.mxu0 0.0
    %2288 = vmatprep.subr.mxu0 0.0
    %2289 = vmatpush1.msra.mxu0 0.0
    %2290 = vmatprep.subr.mxu0 0.0
    %2291 = vmatpush1.msra.mxu0 0.0
    %2292 = vmatprep.subr.mxu0 0.0
    %2293 = vmatpush1.msra.mxu0 0.0
    %2294 = vmatprep.subr.mxu0 0.0
    %2295 = vmatpush1.msra.mxu0 0.0
    %2296 = vmatprep.subr.mxu0 0.0
    %2297 = vmatpush1.msra.mxu0 0.0
    %2298 = vmatprep.subr.mxu0 0.0
    %2299 = vmatpush1.msra.mxu0 0.0
    %2300 = vmatprep.mubr.f32.mxu0 0.0
    %2301 = vmatmul.mubr.f32.gmra.mrb[0].mxu0 %v2231
    %v2302 = vpop.f32.mrb[0].mxu0
    %v2303 = vadd.f32 %v2228, %v2302
    %v2304 = vpop.f32.mrb[0].mxu0
    %2305 = vmatprep.mubr.f32.mxu0 0.0
    %2306 = vmatmul.mubr.f32.gmra.mrb[0].mxu0 %v2234
    %v2307 = vpop.f32.mrb[0].mxu0
    %v2308 = vadd.f32 %v2228, %v2307
    %v2309 = vpop.f32.mrb[0].mxu0
    %2310 = vdwg.mxu0
    %v2311 = vadd.f32 %v2303, %v1445
    %v2312 = vadd.f32 %v2308, %v1446
    %s2313 = scalar_lea.vmem %s12, 1
    %v2314 = vld [vmem:[%s2313] sm:$0x1]
    %s2315 = scalar_lea.vmem %s13, 1
    %v2316 = vld [vmem:[%s2315] sm:$0x1]
    %v2317 = vsel %vm227, %v2311, 0.0
    %2318 = vadd.xlane.f32.xlu0 %v2317
    %v2319 = vpop.xlane.xlu0 %2318
    %v2320 = vsel %vm227, %v2312, 0.0
    %2321 = vadd.xlane.f32.xlu0 %v2320
    %v2322 = vpop.xlane.xlu0 %2321
    %v2323 = vmul.f32 %v2319, %v234
    %v2324 = vmul.f32 %v2322, %v234
    %v2325 = vsub.f32 %v2311, %v2323
    %v2326 = vsub.f32 %v2312, %v2324
    %v2327 = vmul.f32 %v2325, %v2325
    %v2328 = vmul.f32 %v2326, %v2326
    %v2329 = vsel %vm227, %v2327, 0.0
    %2330 = vadd.xlane.f32.xlu0 %v2329
    %v2331 = vpop.xlane.xlu0 %2330
    %v2332 = vsel %vm227, %v2328, 0.0
    %2333 = vadd.xlane.f32.xlu0 %v2332
    %v2334 = vpop.xlane.xlu0 %2333
    %v2335 = vmul.f32 %v2331, %v234
    %v2336 = vmul.f32 %v2334, %v234
    %v2337 = vadd.f32 %v2335, 1e-12
    %v2338 = vadd.f32 %v2336, 1e-12
    %v2339 = vrsqrt.pop %v2337
    %v2340 = vrsqrt.pop %v2338
    %v2341 = vmul.f32 %v2325, %v2339
    %v2342 = vmul.f32 %v2326, %v2340
    %v2344 = vlaneseq
    %v2345 = vshrl.u32 %v2344, 7
    %v2346 = vsub.s32 0, %v2345
    %v2347 = vrot.slane %v2314, %v2346
    %v2349 = vmul.f32 %v2341, %v2347
    %v2350 = vmul.f32 %v2342, %v2347
    %v2352 = vlaneseq
    %v2353 = vshrl.u32 %v2352, 7
    %v2354 = vsub.s32 0, %v2353
    %v2355 = vrot.slane %v2316, %v2354
    %v2357 = vadd.f32 %v2349, %v2355
    %v2358 = vadd.f32 %v2350, %v2355
    %s2359 = scalar_lea.vmem %s14, 32
    %v2360 = vld [vmem:[%s2359] sm:$0xff]
    %v2361 = vld [vmem:[%s2359 + $0x8] sm:$0xff]
    %v2362 = vld [vmem:[%s2359 + $0x10] sm:$0xff]
    %v2363 = vld [vmem:[%s2359 + $0x18] sm:$0xff]
    %s2364 = scalar_lea.vmem %s15, 1
    %v2365 = vld [vmem:[%s2364] sm:$0x1]
    %v2367 = vlaneseq
    %v2368 = vshrl.u32 %v2367, 7
    %v2369 = vsub.s32 0, %v2368
    %v2370 = vrot.slane %v2365, %v2369
    %v2373 = vsel %vm227, %v2357, 0
    %v2376 = vsel %vm227, %v2358, 0
    %2378 = vmatprep.subr.mxu0 0.0
    %2379 = vmatpush1.msra.mxu0 %v2360
    %2380 = vmatprep.subr.mxu0 0.0
    %2381 = vmatpush1.msra.mxu0 %v2361
    %2382 = vmatprep.subr.mxu0 0.0
    %2383 = vmatpush1.msra.mxu0 %v2362
    %2384 = vmatprep.subr.mxu0 0.0
    %2385 = vmatpush1.msra.mxu0 %v2363
    %2386 = vmatprep.subr.mxu0 0.0
    %2387 = vmatpush1.msra.mxu0 0.0
    %2388 = vmatprep.subr.mxu0 0.0
    %2389 = vmatpush1.msra.mxu0 0.0
    %2390 = vmatprep.subr.mxu0 0.0
    %2391 = vmatpush1.msra.mxu0 0.0
    %2392 = vmatprep.subr.mxu0 0.0
    %2393 = vmatpush1.msra.mxu0 0.0
    %2394 = vmatprep.subr.mxu0 0.0
    %2395 = vmatpush1.msra.mxu0 0.0
    %2396 = vmatprep.subr.mxu0 0.0
    %2397 = vmatpush1.msra.mxu0 0.0
    %2398 = vmatprep.subr.mxu0 0.0
    %2399 = vmatpush1.msra.mxu0 0.0
    %2400 = vmatprep.subr.mxu0 0.0
    %2401 = vmatpush1.msra.mxu0 0.0
    %2402 = vmatprep.subr.mxu0 0.0
    %2403 = vmatpush1.msra.mxu0 0.0
    %2404 = vmatprep.subr.mxu0 0.0
    %2405 = vmatpush1.msra.mxu0 0.0
    %2406 = vmatprep.subr.mxu0 0.0
    %2407 = vmatpush1.msra.mxu0 0.0
    %2408 = vmatprep.subr.mxu0 0.0
    %2409 = vmatpush1.msra.mxu0 0.0
    %2410 = vmatprep.subr.mxu0 0.0
    %2411 = vmatpush1.msra.mxu0 0.0
    %2412 = vmatprep.subr.mxu0 0.0
    %2413 = vmatpush1.msra.mxu0 0.0
    %2414 = vmatprep.subr.mxu0 0.0
    %2415 = vmatpush1.msra.mxu0 0.0
    %2416 = vmatprep.subr.mxu0 0.0
    %2417 = vmatpush1.msra.mxu0 0.0
    %2418 = vmatprep.subr.mxu0 0.0
    %2419 = vmatpush1.msra.mxu0 0.0
    %2420 = vmatprep.subr.mxu0 0.0
    %2421 = vmatpush1.msra.mxu0 0.0
    %2422 = vmatprep.subr.mxu0 0.0
    %2423 = vmatpush1.msra.mxu0 0.0
    %2424 = vmatprep.subr.mxu0 0.0
    %2425 = vmatpush1.msra.mxu0 0.0
    %2426 = vmatprep.subr.mxu0 0.0
    %2427 = vmatpush1.msra.mxu0 0.0
    %2428 = vmatprep.subr.mxu0 0.0
    %2429 = vmatpush1.msra.mxu0 0.0
    %2430 = vmatprep.subr.mxu0 0.0
    %2431 = vmatpush1.msra.mxu0 0.0
    %2432 = vmatprep.subr.mxu0 0.0
    %2433 = vmatpush1.msra.mxu0 0.0
    %2434 = vmatprep.subr.mxu0 0.0
    %2435 = vmatpush1.msra.mxu0 0.0
    %2436 = vmatprep.subr.mxu0 0.0
    %2437 = vmatpush1.msra.mxu0 0.0
    %2438 = vmatprep.subr.mxu0 0.0
    %2439 = vmatpush1.msra.mxu0 0.0
    %2440 = vmatprep.subr.mxu0 0.0
    %2441 = vmatpush1.msra.mxu0 0.0
    %2442 = vmatprep.mubr.f32.mxu0 0.0
    %2443 = vmatmul.mubr.f32.gmra.mrb[0].mxu0 %v2373
    %v2444 = vpop.f32.mrb[0].mxu0
    %v2445 = vadd.f32 %v2370, %v2444
    %v2446 = vpop.f32.mrb[0].mxu0
    %2447 = vmatprep.mubr.f32.mxu0 0.0
    %2448 = vmatmul.mubr.f32.gmra.mrb[0].mxu0 %v2376
    %v2449 = vpop.f32.mrb[0].mxu0
    %v2450 = vadd.f32 %v2370, %v2449
    %v2451 = vpop.f32.mrb[0].mxu0
    %2452 = vdwg.mxu0
    %v2453 = vmul.f32 %v2445, 0.5
    %v2454 = vmul.f32 %v2450, 0.5
    %v2455 = vmul.f32 %v2445, 0.044715
    %v2456 = vmul.f32 %v2450, 0.044715
    %v2457 = vmul.f32 %v2455, %v2445
    %v2458 = vmul.f32 %v2456, %v2450
    %v2459 = vmul.f32 %v2457, %v2445
    %v2460 = vmul.f32 %v2458, %v2450
    %v2461 = vadd.f32 %v2445, %v2459
    %v2462 = vadd.f32 %v2450, %v2460
    %v2463 = vmul.f32 %v2461, 0.7978846
    %v2464 = vmul.f32 %v2462, 0.7978846
    %v2465 = vtanh.pop %v2463
    %v2466 = vtanh.pop %v2464
    %v2467 = vadd.f32 %v2465, 1.0
    %v2468 = vadd.f32 %v2466, 1.0
    %v2469 = vmul.f32 %v2453, %v2467
    %v2470 = vmul.f32 %v2454, %v2468
    %s2471 = scalar_lea.vmem %s16, 64
    %v2472 = vld [vmem:[%s2471] sm:$0xff]
    %v2473 = vld [vmem:[%s2471 + $0x8] sm:$0xff]
    %v2474 = vld [vmem:[%s2471 + $0x10] sm:$0xff]
    %v2475 = vld [vmem:[%s2471 + $0x18] sm:$0xff]
    %v2476 = vld [vmem:[%s2471 + $0x20] sm:$0xff]
    %v2477 = vld [vmem:[%s2471 + $0x28] sm:$0xff]
    %v2478 = vld [vmem:[%s2471 + $0x30] sm:$0xff]
    %v2479 = vld [vmem:[%s2471 + $0x38] sm:$0xff]
    %s2480 = scalar_lea.vmem %s17, 1
    %v2481 = vld [vmem:[%s2480] sm:$0x1]
    %v2483 = vlaneseq
    %v2484 = vshrl.u32 %v2483, 7
    %v2485 = vsub.s32 0, %v2484
    %v2486 = vrot.slane %v2481, %v2485
    %v2489 = vsel %vm1319, %v2469, 0
    %v2492 = vsel %vm1319, %v2470, 0
    %2494 = vmatprep.subr.mxu0 0.0
    %2495 = vmatpush1.msra.mxu0 %v2472
    %2496 = vmatprep.subr.mxu0 0.0
    %2497 = vmatpush1.msra.mxu0 %v2473
    %2498 = vmatprep.subr.mxu0 0.0
    %2499 = vmatpush1.msra.mxu0 %v2474
    %2500 = vmatprep.subr.mxu0 0.0
    %2501 = vmatpush1.msra.mxu0 %v2475
    %2502 = vmatprep.subr.mxu0 0.0
    %2503 = vmatpush1.msra.mxu0 %v2476
    %2504 = vmatprep.subr.mxu0 0.0
    %2505 = vmatpush1.msra.mxu0 %v2477
    %2506 = vmatprep.subr.mxu0 0.0
    %2507 = vmatpush1.msra.mxu0 %v2478
    %2508 = vmatprep.subr.mxu0 0.0
    %2509 = vmatpush1.msra.mxu0 %v2479
    %2510 = vmatprep.subr.mxu0 0.0
    %2511 = vmatpush1.msra.mxu0 0.0
    %2512 = vmatprep.subr.mxu0 0.0
    %2513 = vmatpush1.msra.mxu0 0.0
    %2514 = vmatprep.subr.mxu0 0.0
    %2515 = vmatpush1.msra.mxu0 0.0
    %2516 = vmatprep.subr.mxu0 0.0
    %2517 = vmatpush1.msra.mxu0 0.0
    %2518 = vmatprep.subr.mxu0 0.0
    %2519 = vmatpush1.msra.mxu0 0.0
    %2520 = vmatprep.subr.mxu0 0.0
    %2521 = vmatpush1.msra.mxu0 0.0
    %2522 = vmatprep.subr.mxu0 0.0
    %2523 = vmatpush1.msra.mxu0 0.0
    %2524 = vmatprep.subr.mxu0 0.0
    %2525 = vmatpush1.msra.mxu0 0.0
    %2526 = vmatprep.subr.mxu0 0.0
    %2527 = vmatpush1.msra.mxu0 0.0
    %2528 = vmatprep.subr.mxu0 0.0
    %2529 = vmatpush1.msra.mxu0 0.0
    %2530 = vmatprep.subr.mxu0 0.0
    %2531 = vmatpush1.msra.mxu0 0.0
    %2532 = vmatprep.subr.mxu0 0.0
    %2533 = vmatpush1.msra.mxu0 0.0
    %2534 = vmatprep.subr.mxu0 0.0
    %2535 = vmatpush1.msra.mxu0 0.0
    %2536 = vmatprep.subr.mxu0 0.0
    %2537 = vmatpush1.msra.mxu0 0.0
    %2538 = vmatprep.subr.mxu0 0.0
    %2539 = vmatpush1.msra.mxu0 0.0
    %2540 = vmatprep.subr.mxu0 0.0
    %2541 = vmatpush1.msra.mxu0 0.0
    %2542 = vmatprep.subr.mxu0 0.0
    %2543 = vmatpush1.msra.mxu0 0.0
    %2544 = vmatprep.subr.mxu0 0.0
    %2545 = vmatpush1.msra.mxu0 0.0
    %2546 = vmatprep.subr.mxu0 0.0
    %2547 = vmatpush1.msra.mxu0 0.0
    %2548 = vmatprep.subr.mxu0 0.0
    %2549 = vmatpush1.msra.mxu0 0.0
    %2550 = vmatprep.subr.mxu0 0.0
    %2551 = vmatpush1.msra.mxu0 0.0
    %2552 = vmatprep.subr.mxu0 0.0
    %2553 = vmatpush1.msra.mxu0 0.0
    %2554 = vmatprep.subr.mxu0 0.0
    %2555 = vmatpush1.msra.mxu0 0.0
    %2556 = vmatprep.subr.mxu0 0.0
    %2557 = vmatpush1.msra.mxu0 0.0
    %2558 = vmatprep.mubr.f32.mxu0 0.0
    %2559 = vmatmul.mubr.f32.gmra.mrb[0].mxu0 %v2489
    %v2560 = vpop.f32.mrb[0].mxu0
    %v2561 = vadd.f32 %v2486, %v2560
    %v2562 = vpop.f32.mrb[0].mxu0
    %2563 = vmatprep.mubr.f32.mxu0 0.0
    %2564 = vmatmul.mubr.f32.gmra.mrb[0].mxu0 %v2492
    %v2565 = vpop.f32.mrb[0].mxu0
    %v2566 = vadd.f32 %v2486, %v2565
    %v2567 = vpop.f32.mrb[0].mxu0
    %2568 = vdwg.mxu0
    %v2569 = vadd.f32 %v2561, %v2357
    %v2570 = vadd.f32 %v2566, %v2358
    %s2571 = scalar_lea.vmem %s18, 1
    %v2572 = vld [vmem:[%s2571] sm:$0x1]
    %s2573 = scalar_lea.vmem %s19, 1
    %v2574 = vld [vmem:[%s2573] sm:$0x1]
    %v2575 = vsel %vm227, %v2569, 0.0
    %2576 = vadd.xlane.f32.xlu0 %v2575
    %v2577 = vpop.xlane.xlu0 %2576
    %v2578 = vsel %vm227, %v2570, 0.0
    %2579 = vadd.xlane.f32.xlu0 %v2578
    %v2580 = vpop.xlane.xlu0 %2579
    %v2581 = vmul.f32 %v2577, %v234
    %v2582 = vmul.f32 %v2580, %v234
    %v2583 = vsub.f32 %v2569, %v2581
    %v2584 = vsub.f32 %v2570, %v2582
    %v2585 = vmul.f32 %v2583, %v2583
    %v2586 = vmul.f32 %v2584, %v2584
    %v2587 = vsel %vm227, %v2585, 0.0
    %2588 = vadd.xlane.f32.xlu0 %v2587
    %v2589 = vpop.xlane.xlu0 %2588
    %v2590 = vsel %vm227, %v2586, 0.0
    %2591 = vadd.xlane.f32.xlu0 %v2590
    %v2592 = vpop.xlane.xlu0 %2591
    %v2593 = vmul.f32 %v2589, %v234
    %v2594 = vmul.f32 %v2592, %v234
    %v2595 = vadd.f32 %v2593, 1e-12
    %v2596 = vadd.f32 %v2594, 1e-12
    %v2597 = vrsqrt.pop %v2595
    %v2598 = vrsqrt.pop %v2596
    %v2599 = vmul.f32 %v2583, %v2597
    %v2600 = vmul.f32 %v2584, %v2598
    %v2602 = vlaneseq
    %v2603 = vshrl.u32 %v2602, 7
    %v2604 = vsub.s32 0, %v2603
    %v2605 = vrot.slane %v2572, %v2604
    %v2607 = vmul.f32 %v2599, %v2605
    %v2608 = vmul.f32 %v2600, %v2605
    %v2610 = vlaneseq
    %v2611 = vshrl.u32 %v2610, 7
    %v2612 = vsub.s32 0, %v2611
    %v2613 = vrot.slane %v2574, %v2612
    %v2615 = vadd.f32 %v2607, %v2613
    %v2616 = vadd.f32 %v2608, %v2613
    %v2617 = vld [vmem:[%s20] sm:$0xff]
    %v2618 = vld [vmem:[%s20 + $0x8] sm:$0xff]
    %v2619 = vld [vmem:[%s20 + $0x10] sm:$0xff]
    %v2620 = vld [vmem:[%s20 + $0x18] sm:$0xff]
    %v2621 = vld [vmem:[%s21] sm:$0x1]
    %v2623 = vlaneseq
    %v2624 = vshrl.u32 %v2623, 7
    %v2625 = vsub.s32 0, %v2624
    %v2626 = vrot.slane %v2621, %v2625
    %v2629 = vsel %vm227, %v2615, 0
    %v2632 = vsel %vm227, %v2616, 0
    %2634 = vmatprep.subr.mxu0 0.0
    %2635 = vmatpush1.msra.mxu0 %v2617
    %2636 = vmatprep.subr.mxu0 0.0
    %2637 = vmatpush1.msra.mxu0 %v2618
    %2638 = vmatprep.subr.mxu0 0.0
    %2639 = vmatpush1.msra.mxu0 %v2619
    %2640 = vmatprep.subr.mxu0 0.0
    %2641 = vmatpush1.msra.mxu0 %v2620
    %2642 = vmatprep.subr.mxu0 0.0
    %2643 = vmatpush1.msra.mxu0 0.0
    %2644 = vmatprep.subr.mxu0 0.0
    %2645 = vmatpush1.msra.mxu0 0.0
    %2646 = vmatprep.subr.mxu0 0.0
    %2647 = vmatpush1.msra.mxu0 0.0
    %2648 = vmatprep.subr.mxu0 0.0
    %2649 = vmatpush1.msra.mxu0 0.0
    %2650 = vmatprep.subr.mxu0 0.0
    %2651 = vmatpush1.msra.mxu0 0.0
    %2652 = vmatprep.subr.mxu0 0.0
    %2653 = vmatpush1.msra.mxu0 0.0
    %2654 = vmatprep.subr.mxu0 0.0
    %2655 = vmatpush1.msra.mxu0 0.0
    %2656 = vmatprep.subr.mxu0 0.0
    %2657 = vmatpush1.msra.mxu0 0.0
    %2658 = vmatprep.subr.mxu0 0.0
    %2659 = vmatpush1.msra.mxu0 0.0
    %2660 = vmatprep.subr.mxu0 0.0
    %2661 = vmatpush1.msra.mxu0 0.0
    %2662 = vmatprep.subr.mxu0 0.0
    %2663 = vmatpush1.msra.mxu0 0.0
    %2664 = vmatprep.subr.mxu0 0.0
    %2665 = vmatpush1.msra.mxu0 0.0
    %2666 = vmatprep.subr.mxu0 0.0
    %2667 = vmatpush1.msra.mxu0 0.0
    %2668 = vmatprep.subr.mxu0 0.0
    %2669 = vmatpush1.msra.mxu0 0.0
    %2670 = vmatprep.subr.mxu0 0.0
    %2671 = vmatpush1.msra.mxu0 0.0
    %2672 = vmatprep.subr.mxu0 0.0
    %2673 = vmatpush1.msra.mxu0 0.0
    %2674 = vmatprep.subr.mxu0 0.0
    %2675 = vmatpush1.msra.mxu0 0.0
    %2676 = vmatprep.subr.mxu0 0.0
    %2677 = vmatpush1.msra.mxu0 0.0
    %2678 = vmatprep.subr.mxu0 0.0
    %2679 = vmatpush1.msra.mxu0 0.0
    %2680 = vmatprep.subr.mxu0 0.0
    %2681 = vmatpush1.msra.mxu0 0.0
    %2682 = vmatprep.subr.mxu0 0.0
    %2683 = vmatpush1.msra.mxu0 0.0
    %2684 = vmatprep.subr.mxu0 0.0
    %2685 = vmatpush1.msra.mxu0 0.0
    %2686 = vmatprep.subr.mxu0 0.0
    %2687 = vmatpush1.msra.mxu0 0.0
    %2688 = vmatprep.subr.mxu0 0.0
    %2689 = vmatpush1.msra.mxu0 0.0
    %2690 = vmatprep.subr.mxu0 0.0
    %2691 = vmatpush1.msra.mxu0 0.0
    %2692 = vmatprep.subr.mxu0 0.0
    %2693 = vmatpush1.msra.mxu0 0.0
    %2694 = vmatprep.subr.mxu0 0.0
    %2695 = vmatpush1.msra.mxu0 0.0
    %2696 = vmatprep.subr.mxu0 0.0
    %2697 = vmatpush1.msra.mxu0 0.0
    %2698 = vmatprep.mubr.f32.mxu0 0.0
    %2699 = vmatmul.mubr.f32.gmra.mrb[0].mxu0 %v2629
    %v2700 = vpop.f32.mrb[0].mxu0
    %v2701 = vadd.f32 %v2626, %v2700
    %v2702 = vpop.f32.mrb[0].mxu0
    %2703 = vmatprep.mubr.f32.mxu0 0.0
    %2704 = vmatmul.mubr.f32.gmra.mrb[0].mxu0 %v2632
    %v2705 = vpop.f32.mrb[0].mxu0
    %v2706 = vadd.f32 %v2626, %v2705
    %v2707 = vpop.f32.mrb[0].mxu0
    %2708 = vdwg.mxu0
    %v2709 = vld [vmem:[%s24] sm:$0xff]
    %v2710 = vld [vmem:[%s24 + $0x8] sm:$0x7f]
    %v2711 = vcvt.s32.f32 %v86
    %v2712 = vld [vmem:[%s22] sm:$0x1]
    %v2714 = vrot.slane %v2706, 7
    %vm2716 = vcmask 1040384
    %v2717 = vsel %vm2716, %v2701, %v2714
    %v2719 = vlaneseq
    %v2720 = vshrl.u32 %v2719, 7
    %v2721 = vsub.s32 0, %v2720
    %v2722 = vrot.slane %v2712, %v2721
    %v2724 = vadd.f32 %v2722, %v2717
    %v2727 = vunpack.c.l.s4 1966171168
    %v2728 = vunpack.c.0.s8 %v2727
    %v2729 = vlaneseq
    %v2730 = vshrl.u32 %v2729, 7
    %v2731 = vsub.s32 %v2728, %v2730
    %v2732 = vrot.slane %v2724, %v2731
    %v2733 = vcombine.high %v2732, %v2732
    %v2735 = vunpack.c.l.s4 1966171168
    %v2736 = vunpack.c.0.s8 %v2735
    %v2737 = vlaneseq
    %v2738 = vshrl.u32 %v2737, 7
    %v2739 = vsub.s32 %v2736, %v2738
    %v2740 = vrot.slane %v2732, %v2739
    %v2742 = vunpack.c.l.s4 1966171168
    %v2743 = vunpack.c.0.s8 %v2742
    %v2744 = vlaneseq
    %v2745 = vshrl.u32 %v2744, 7
    %v2746 = vsub.s32 %v2743, %v2745
    %v2747 = vrot.slane %v2733, %v2746
    %v2748 = vlaneseq
    %v2749 = vshrl.u32 %v2748, 7
    %v2750 = vsub.s32 0, %v2749
    %v2751 = vrot.slane %v2740, %v2750
    %v2752 = vlaneseq
    %v2753 = vshrl.u32 %v2752, 7
    %v2754 = vsub.s32 0, %v2753
    %v2755 = vrot.slane %v2747, %v2754
    %v2758 = vadd.f32 %v2751, %v2709
    %v2759 = vadd.f32 %v2751, %v2710
    %v2760 = vadd.f32 %v2755, %v2709
    %v2761 = vadd.f32 %v2755, %v2710
    %vm2762 = vcmask 121856
    %v2763 = vsel %vm2762, %v2758, -inf
    %2764 = vmax.xlane.f32.xlu0 %v2763
    %v2765 = vpop.xlane.xlu0 %2764
    %vm2766 = vcmask 120832
    %v2767 = vsel %vm2766, %v2759, -inf
    %2768 = vmax.xlane.f32.xlu0 %v2767
    %v2769 = vpop.xlane.xlu0 %2768
    %v2770 = vsel %vm2762, %v2760, -inf
    %2771 = vmax.xlane.f32.xlu0 %v2770
    %v2772 = vpop.xlane.xlu0 %2771
    %v2773 = vsel %vm2766, %v2761, -inf
    %2774 = vmax.xlane.f32.xlu0 %v2773
    %v2775 = vpop.xlane.xlu0 %2774
    %vm2776 = vcmp.eq.f32.partialorder %v2758, %v2765
    %vm2777 = vcmp.eq.f32.partialorder %v2759, %v2769
    %vm2778 = vcmp.eq.f32.partialorder %v2760, %v2772
    %vm2779 = vcmp.eq.f32.partialorder %v2761, %v2775
    %v2780 = vsel %vm2776, %v2711, 15.0
    %v2781 = vsel %vm2777, %v2711, 15.0
    %v2782 = vsel %vm2778, %v2711, 15.0
    %v2783 = vsel %vm2779, %v2711, 15.0
    %v2784 = vsel %vm2762, %v2780, inf
    %2785 = vmin.xlane.f32.xlu0 %v2784
    %v2786 = vpop.xlane.xlu0 %2785
    %v2787 = vsel %vm2766, %v2781, inf
    %2788 = vmin.xlane.f32.xlu0 %v2787
    %v2789 = vpop.xlane.xlu0 %2788
    %v2790 = vsel %vm2762, %v2782, inf
    %2791 = vmin.xlane.f32.xlu0 %v2790
    %v2792 = vpop.xlane.xlu0 %2791
    %v2793 = vsel %vm2766, %v2783, inf
    %2794 = vmin.xlane.f32.xlu0 %v2793
    %v2795 = vpop.xlane.xlu0 %2794
    %vm2796 = vcmp.gt.s32.totalorder %v271, 0
    %v2798 = vrot.slane %v2701, 1
    %v2800 = vsel %vm2716, %v2798, %v2706
    %v2802 = vlaneseq
    %v2803 = vshrl.u32 %v2802, 7
    %v2804 = vsub.s32 0, %v2803
    %v2805 = vrot.slane %v2800, %v2804
    %2807 = vbcast.lane.b32.xlu0 %v2805, 256
    %v2808 = vpop.permute.xlu0 %2807
    %s2810 = sor.u32 256, 8
    %2811 = vbcast.lane.b32.xlu0 %v2805, %s2810
    %v2812 = vpop.permute.xlu0 %2811
    %v2813 = vlaneseq
    %v2814 = vshrl.u32 %v2813, 7
    %v2815 = vsub.s32 1, %v2814
    %v2816 = vrot.slane %v2800, %v2815
    %2818 = vbcast.lane.b32.xlu0 %v2816, 256
    %v2819 = vpop.permute.xlu0 %2818
    %s2821 = sor.u32 256, 8
    %2822 = vbcast.lane.b32.xlu0 %v2816, %s2821
    %v2823 = vpop.permute.xlu0 %2822
    %v2828 = vadd.f32 %v2765, %v2808
    %v2829 = vadd.f32 %v2769, %v2812
    %v2830 = vadd.f32 %v2772, %v2819
    %v2831 = vadd.f32 %v2775, %v2823
    %v2832 = vsel %vm2796, 1, 0
    %2833 = vset.pattern.permute.xlu0 1
    %2834 = vperm.xlu0 %2833, %v2832
    %v2835 = vpop.permute.xlu0 %2834
    %vm2836 = vcmp.eq.s32.totalorder %v2835, 1
    %2841 = vset.pattern.permute.xlu0 0
    %2842 = vperm.xlu0 %2841, %v2828
    %v2843 = vpop.permute.xlu0 %2842
    %2844 = vset.pattern.permute.xlu0 0
    %2845 = vperm.xlu0 %2844, %v2829
    %v2846 = vpop.permute.xlu0 %2845
    %2847 = vset.pattern.permute.xlu0 0
    %2848 = vperm.xlu0 %2847, %v2830
    %v2849 = vpop.permute.xlu0 %2848
    %2850 = vset.pattern.permute.xlu0 0
    %2851 = vperm.xlu0 %2850, %v2831
    %v2852 = vpop.permute.xlu0 %2851
    %v2853 = vlaneseq
    %v2854 = vshrl.u32 %v2853, 7
    %v2855 = vsub.s32 %v86, %v2854
    %v2856 = vrot.slane %v2843, %v2855
    %v2857 = vadd.s32 %v86, 4294967288
    %v2858 = vlaneseq
    %v2859 = vshrl.u32 %v2858, 7
    %v2860 = vsub.s32 %v2857, %v2859
    %v2861 = vrot.slane %v2846, %v2860
    %vm2862 = vcmask 130112
    %v2863 = vsel %vm2862, %v2861, %v2856
    %v2864 = vlaneseq
    %v2865 = vshrl.u32 %v2864, 7
    %v2866 = vsub.s32 %v86, %v2865
    %v2867 = vrot.slane %v2849, %v2866
    %v2868 = vlaneseq
    %v2869 = vshrl.u32 %v2868, 7
    %v2870 = vsub.s32 %v2857, %v2869
    %v2871 = vrot.slane %v2852, %v2870
    %v2872 = vsel %vm2862, %v2871, %v2867
    %vm2873 = vcmask 1041409
    %v2874 = vsel %vm2873, %v2872, %v2863
    %v2876 = vsel %vm2836, %v2874, %v2724
    %v2879 = vunpack.c.l.s4 1966171168
    %v2880 = vunpack.c.0.s8 %v2879
    %v2881 = vlaneseq
    %v2882 = vshrl.u32 %v2881, 7
    %v2883 = vsub.s32 %v2880, %v2882
    %v2884 = vrot.slane %v2876, %v2883
    %v2885 = vcombine.high %v2884, %v2884
    %v2887 = vunpack.c.l.s4 1966171168
    %v2888 = vunpack.c.0.s8 %v2887
    %v2889 = vlaneseq
    %v2890 = vshrl.u32 %v2889, 7
    %v2891 = vsub.s32 %v2888, %v2890
    %v2892 = vrot.slane %v2884, %v2891
    %v2894 = vunpack.c.l.s4 1966171168
    %v2895 = vunpack.c.0.s8 %v2894
    %v2896 = vlaneseq
    %v2897 = vshrl.u32 %v2896, 7
    %v2898 = vsub.s32 %v2895, %v2897
    %v2899 = vrot.slane %v2885, %v2898
    %v2900 = vlaneseq
    %v2901 = vshrl.u32 %v2900, 7
    %v2902 = vsub.s32 0, %v2901
    %v2903 = vrot.slane %v2892, %v2902
    %v2904 = vlaneseq
    %v2905 = vshrl.u32 %v2904, 7
    %v2906 = vsub.s32 0, %v2905
    %v2907 = vrot.slane %v2899, %v2906
    %v2910 = vadd.f32 %v2903, %v2709
    %v2911 = vadd.f32 %v2903, %v2710
    %v2912 = vadd.f32 %v2907, %v2709
    %v2913 = vadd.f32 %v2907, %v2710
    %v2914 = vsel %vm2762, %v2910, -inf
    %2915 = vmax.xlane.f32.xlu0 %v2914
    %v2916 = vpop.xlane.xlu0 %2915
    %v2917 = vsel %vm2766, %v2911, -inf
    %2918 = vmax.xlane.f32.xlu0 %v2917
    %v2919 = vpop.xlane.xlu0 %2918
    %v2920 = vsel %vm2762, %v2912, -inf
    %2921 = vmax.xlane.f32.xlu0 %v2920
    %v2922 = vpop.xlane.xlu0 %2921
    %v2923 = vsel %vm2766, %v2913, -inf
    %2924 = vmax.xlane.f32.xlu0 %v2923
    %v2925 = vpop.xlane.xlu0 %2924
    %vm2926 = vcmp.eq.f32.partialorder %v2910, %v2916
    %vm2927 = vcmp.eq.f32.partialorder %v2911, %v2919
    %vm2928 = vcmp.eq.f32.partialorder %v2912, %v2922
    %vm2929 = vcmp.eq.f32.partialorder %v2913, %v2925
    %v2930 = vsel %vm2926, %v2711, 15.0
    %v2931 = vsel %vm2927, %v2711, 15.0
    %v2932 = vsel %vm2928, %v2711, 15.0
    %v2933 = vsel %vm2929, %v2711, 15.0
    %v2934 = vsel %vm2762, %v2930, inf
    %2935 = vmin.xlane.f32.xlu0 %v2934
    %v2936 = vpop.xlane.xlu0 %2935
    %v2937 = vsel %vm2766, %v2931, inf
    %2938 = vmin.xlane.f32.xlu0 %v2937
    %v2939 = vpop.xlane.xlu0 %2938
    %v2940 = vsel %vm2762, %v2932, inf
    %2941 = vmin.xlane.f32.xlu0 %v2940
    %v2942 = vpop.xlane.xlu0 %2941
    %v2943 = vsel %vm2766, %v2933, inf
    %2944 = vmin.xlane.f32.xlu0 %v2943
    %v2945 = vpop.xlane.xlu0 %2944
    %v2946 = vrot.slane %v2701, 2
    %v2948 = vrot.slane %v2706, 1
    %v2950 = vsel %vm2716, %v2946, %v2948
    %v2952 = vlaneseq
    %v2953 = vshrl.u32 %v2952, 7
    %v2954 = vsub.s32 0, %v2953
    %v2955 = vrot.slane %v2950, %v2954
    %2957 = vbcast.lane.b32.xlu0 %v2955, 256
    %v2958 = vpop.permute.xlu0 %2957
    %s2960 = sor.u32 256, 8
    %2961 = vbcast.lane.b32.xlu0 %v2955, %s2960
    %v2962 = vpop.permute.xlu0 %2961
    %v2963 = vlaneseq
    %v2964 = vshrl.u32 %v2963, 7
    %v2965 = vsub.s32 1, %v2964
    %v2966 = vrot.slane %v2950, %v2965
    %2968 = vbcast.lane.b32.xlu0 %v2966, 256
    %v2969 = vpop.permute.xlu0 %2968
    %s2971 = sor.u32 256, 8
    %2972 = vbcast.lane.b32.xlu0 %v2966, %s2971
    %v2973 = vpop.permute.xlu0 %2972
    %v2978 = vadd.f32 %v2916, %v2958
    %v2979 = vadd.f32 %v2919, %v2962
    %v2980 = vadd.f32 %v2922, %v2969
    %v2981 = vadd.f32 %v2925, %v2973
    %2982 = vset.pattern.permute.xlu0 2
    %2983 = vperm.xlu0 %2982, %v2832
    %v2984 = vpop.permute.xlu0 %2983
    %vm2985 = vcmp.eq.s32.totalorder %v2984, 1
    %2990 = vset.pattern.permute.xlu0 0
    %2991 = vperm.xlu0 %2990, %v2978
    %v2992 = vpop.permute.xlu0 %2991
    %2993 = vset.pattern.permute.xlu0 0
    %2994 = vperm.xlu0 %2993, %v2979
    %v2995 = vpop.permute.xlu0 %2994
    %2996 = vset.pattern.permute.xlu0 0
    %2997 = vperm.xlu0 %2996, %v2980
    %v2998 = vpop.permute.xlu0 %2997
    %2999 = vset.pattern.permute.xlu0 0
    %3000 = vperm.xlu0 %2999, %v2981
    %v3001 = vpop.permute.xlu0 %3000
    %v3002 = vlaneseq
    %v3003 = vshrl.u32 %v3002, 7
    %v3004 = vsub.s32 %v86, %v3003
    %v3005 = vrot.slane %v2992, %v3004
    %v3006 = vlaneseq
    %v3007 = vshrl.u32 %v3006, 7
    %v3008 = vsub.s32 %v2857, %v3007
    %v3009 = vrot.slane %v2995, %v3008
    %v3010 = vsel %vm2862, %v3009, %v3005
    %v3011 = vlaneseq
    %v3012 = vshrl.u32 %v3011, 7
    %v3013 = vsub.s32 %v86, %v3012
    %v3014 = vrot.slane %v2998, %v3013
    %v3015 = vlaneseq
    %v3016 = vshrl.u32 %v3015, 7
    %v3017 = vsub.s32 %v2857, %v3016
    %v3018 = vrot.slane %v3001, %v3017
    %v3019 = vsel %vm2862, %v3018, %v3014
    %v3020 = vsel %vm2873, %v3019, %v3010
    %v3022 = vsel %vm2985, %v3020, %v2876
    %v3025 = vunpack.c.l.s4 1966171168
    %v3026 = vunpack.c.0.s8 %v3025
    %v3027 = vlaneseq
    %v3028 = vshrl.u32 %v3027, 7
    %v3029 = vsub.s32 %v3026, %v3028
    %v3030 = vrot.slane %v3022, %v3029
    %v3031 = vcombine.high %v3030, %v3030
    %v3033 = vunpack.c.l.s4 1966171168
    %v3034 = vunpack.c.0.s8 %v3033
    %v3035 = vlaneseq
    %v3036 = vshrl.u32 %v3035, 7
    %v3037 = vsub.s32 %v3034, %v3036
    %v3038 = vrot.slane %v3030, %v3037
    %v3040 = vunpack.c.l.s4 1966171168
    %v3041 = vunpack.c.0.s8 %v3040
    %v3042 = vlaneseq
    %v3043 = vshrl.u32 %v3042, 7
    %v3044 = vsub.s32 %v3041, %v3043
    %v3045 = vrot.slane %v3031, %v3044
    %v3046 = vlaneseq
    %v3047 = vshrl.u32 %v3046, 7
    %v3048 = vsub.s32 0, %v3047
    %v3049 = vrot.slane %v3038, %v3048
    %v3050 = vlaneseq
    %v3051 = vshrl.u32 %v3050, 7
    %v3052 = vsub.s32 0, %v3051
    %v3053 = vrot.slane %v3045, %v3052
    %v3056 = vadd.f32 %v3049, %v2709
    %v3057 = vadd.f32 %v3049, %v2710
    %v3058 = vadd.f32 %v3053, %v2709
    %v3059 = vadd.f32 %v3053, %v2710
    %v3060 = vsel %vm2762, %v3056, -inf
    %3061 = vmax.xlane.f32.xlu0 %v3060
    %v3062 = vpop.xlane.xlu0 %3061
    %v3063 = vsel %vm2766, %v3057, -inf
    %3064 = vmax.xlane.f32.xlu0 %v3063
    %v3065 = vpop.xlane.xlu0 %3064
    %v3066 = vsel %vm2762, %v3058, -inf
    %3067 = vmax.xlane.f32.xlu0 %v3066
    %v3068 = vpop.xlane.xlu0 %3067
    %v3069 = vsel %vm2766, %v3059, -inf
    %3070 = vmax.xlane.f32.xlu0 %v3069
    %v3071 = vpop.xlane.xlu0 %3070
    %vm3072 = vcmp.eq.f32.partialorder %v3056, %v3062
    %vm3073 = vcmp.eq.f32.partialorder %v3057, %v3065
    %vm3074 = vcmp.eq.f32.partialorder %v3058, %v3068
    %vm3075 = vcmp.eq.f32.partialorder %v3059, %v3071
    %v3076 = vsel %vm3072, %v2711, 15.0
    %v3077 = vsel %vm3073, %v2711, 15.0
    %v3078 = vsel %vm3074, %v2711, 15.0
    %v3079 = vsel %vm3075, %v2711, 15.0
    %v3080 = vsel %vm2762, %v3076, inf
    %3081 = vmin.xlane.f32.xlu0 %v3080
    %v3082 = vpop.xlane.xlu0 %3081
    %v3083 = vsel %vm2766, %v3077, inf
    %3084 = vmin.xlane.f32.xlu0 %v3083
    %v3085 = vpop.xlane.xlu0 %3084
    %v3086 = vsel %vm2762, %v3078, inf
    %3087 = vmin.xlane.f32.xlu0 %v3086
    %v3088 = vpop.xlane.xlu0 %3087
    %v3089 = vsel %vm2766, %v3079, inf
    %3090 = vmin.xlane.f32.xlu0 %v3089
    %v3091 = vpop.xlane.xlu0 %3090
    %v3092 = vrot.slane %v2701, 3
    %v3094 = vrot.slane %v2706, 2
    %v3096 = vsel %vm2716, %v3092, %v3094
    %v3098 = vlaneseq
    %v3099 = vshrl.u32 %v3098, 7
    %v3100 = vsub.s32 0, %v3099
    %v3101 = vrot.slane %v3096, %v3100
    %3103 = vbcast.lane.b32.xlu0 %v3101, 256
    %v3104 = vpop.permute.xlu0 %3103
    %s3106 = sor.u32 256, 8
    %3107 = vbcast.lane.b32.xlu0 %v3101, %s3106
    %v3108 = vpop.permute.xlu0 %3107
    %v3109 = vlaneseq
    %v3110 = vshrl.u32 %v3109, 7
    %v3111 = vsub.s32 1, %v3110
    %v3112 = vrot.slane %v3096, %v3111
    %3114 = vbcast.lane.b32.xlu0 %v3112, 256
    %v3115 = vpop.permute.xlu0 %3114
    %s3117 = sor.u32 256, 8
    %3118 = vbcast.lane.b32.xlu0 %v3112, %s3117
    %v3119 = vpop.permute.xlu0 %3118
    %v3124 = vadd.f32 %v3062, %v3104
    %v3125 = vadd.f32 %v3065, %v3108
    %v3126 = vadd.f32 %v3068, %v3115
    %v3127 = vadd.f32 %v3071, %v3119
    %3128 = vset.pattern.permute.xlu0 3
    %3129 = vperm.xlu0 %3128, %v2832
    %v3130 = vpop.permute.xlu0 %3129
    %vm3131 = vcmp.eq.s32.totalorder %v3130, 1
    %3136 = vset.pattern.permute.xlu0 0
    %3137 = vperm.xlu0 %3136, %v3124
    %v3138 = vpop.permute.xlu0 %3137
    %3139 = vset.pattern.permute.xlu0 0
    %3140 = vperm.xlu0 %3139, %v3125
    %v3141 = vpop.permute.xlu0 %3140
    %3142 = vset.pattern.permute.xlu0 0
    %3143 = vperm.xlu0 %3142, %v3126
    %v3144 = vpop.permute.xlu0 %3143
    %3145 = vset.pattern.permute.xlu0 0
    %3146 = vperm.xlu0 %3145, %v3127
    %v3147 = vpop.permute.xlu0 %3146
    %v3148 = vlaneseq
    %v3149 = vshrl.u32 %v3148, 7
    %v3150 = vsub.s32 %v86, %v3149
    %v3151 = vrot.slane %v3138, %v3150
    %v3152 = vlaneseq
    %v3153 = vshrl.u32 %v3152, 7
    %v3154 = vsub.s32 %v2857, %v3153
    %v3155 = vrot.slane %v3141, %v3154
    %v3156 = vsel %vm2862, %v3155, %v3151
    %v3157 = vlaneseq
    %v3158 = vshrl.u32 %v3157, 7
    %v3159 = vsub.s32 %v86, %v3158
    %v3160 = vrot.slane %v3144, %v3159
    %v3161 = vlaneseq
    %v3162 = vshrl.u32 %v3161, 7
    %v3163 = vsub.s32 %v2857, %v3162
    %v3164 = vrot.slane %v3147, %v3163
    %v3165 = vsel %vm2862, %v3164, %v3160
    %v3166 = vsel %vm2873, %v3165, %v3156
    %v3168 = vsel %vm3131, %v3166, %v3022
    %v3171 = vunpack.c.l.s4 1966171168
    %v3172 = vunpack.c.0.s8 %v3171
    %v3173 = vlaneseq
    %v3174 = vshrl.u32 %v3173, 7
    %v3175 = vsub.s32 %v3172, %v3174
    %v3176 = vrot.slane %v3168, %v3175
    %v3177 = vcombine.high %v3176, %v3176
    %v3179 = vunpack.c.l.s4 1966171168
    %v3180 = vunpack.c.0.s8 %v3179
    %v3181 = vlaneseq
    %v3182 = vshrl.u32 %v3181, 7
    %v3183 = vsub.s32 %v3180, %v3182
    %v3184 = vrot.slane %v3176, %v3183
    %v3186 = vunpack.c.l.s4 1966171168
    %v3187 = vunpack.c.0.s8 %v3186
    %v3188 = vlaneseq
    %v3189 = vshrl.u32 %v3188, 7
    %v3190 = vsub.s32 %v3187, %v3189
    %v3191 = vrot.slane %v3177, %v3190
    %v3192 = vlaneseq
    %v3193 = vshrl.u32 %v3192, 7
    %v3194 = vsub.s32 0, %v3193
    %v3195 = vrot.slane %v3184, %v3194
    %v3196 = vlaneseq
    %v3197 = vshrl.u32 %v3196, 7
    %v3198 = vsub.s32 0, %v3197
    %v3199 = vrot.slane %v3191, %v3198
    %v3202 = vadd.f32 %v3195, %v2709
    %v3203 = vadd.f32 %v3195, %v2710
    %v3204 = vadd.f32 %v3199, %v2709
    %v3205 = vadd.f32 %v3199, %v2710
    %v3206 = vsel %vm2762, %v3202, -inf
    %3207 = vmax.xlane.f32.xlu0 %v3206
    %v3208 = vpop.xlane.xlu0 %3207
    %v3209 = vsel %vm2766, %v3203, -inf
    %3210 = vmax.xlane.f32.xlu0 %v3209
    %v3211 = vpop.xlane.xlu0 %3210
    %v3212 = vsel %vm2762, %v3204, -inf
    %3213 = vmax.xlane.f32.xlu0 %v3212
    %v3214 = vpop.xlane.xlu0 %3213
    %v3215 = vsel %vm2766, %v3205, -inf
    %3216 = vmax.xlane.f32.xlu0 %v3215
    %v3217 = vpop.xlane.xlu0 %3216
    %vm3218 = vcmp.eq.f32.partialorder %v3202, %v3208
    %vm3219 = vcmp.eq.f32.partialorder %v3203, %v3211
    %vm3220 = vcmp.eq.f32.partialorder %v3204, %v3214
    %vm3221 = vcmp.eq.f32.partialorder %v3205, %v3217
    %v3222 = vsel %vm3218, %v2711, 15.0
    %v3223 = vsel %vm3219, %v2711, 15.0
    %v3224 = vsel %vm3220, %v2711, 15.0
    %v3225 = vsel %vm3221, %v2711, 15.0
    %v3226 = vsel %vm2762, %v3222, inf
    %3227 = vmin.xlane.f32.xlu0 %v3226
    %v3228 = vpop.xlane.xlu0 %3227
    %v3229 = vsel %vm2766, %v3223, inf
    %3230 = vmin.xlane.f32.xlu0 %v3229
    %v3231 = vpop.xlane.xlu0 %3230
    %v3232 = vsel %vm2762, %v3224, inf
    %3233 = vmin.xlane.f32.xlu0 %v3232
    %v3234 = vpop.xlane.xlu0 %3233
    %v3235 = vsel %vm2766, %v3225, inf
    %3236 = vmin.xlane.f32.xlu0 %v3235
    %v3237 = vpop.xlane.xlu0 %3236
    %v3238 = vrot.slane %v2701, 4
    %v3240 = vrot.slane %v2706, 3
    %v3242 = vsel %vm2716, %v3238, %v3240
    %v3244 = vlaneseq
    %v3245 = vshrl.u32 %v3244, 7
    %v3246 = vsub.s32 0, %v3245
    %v3247 = vrot.slane %v3242, %v3246
    %3249 = vbcast.lane.b32.xlu0 %v3247, 256
    %v3250 = vpop.permute.xlu0 %3249
    %s3252 = sor.u32 256, 8
    %3253 = vbcast.lane.b32.xlu0 %v3247, %s3252
    %v3254 = vpop.permute.xlu0 %3253
    %v3255 = vlaneseq
    %v3256 = vshrl.u32 %v3255, 7
    %v3257 = vsub.s32 1, %v3256
    %v3258 = vrot.slane %v3242, %v3257
    %3260 = vbcast.lane.b32.xlu0 %v3258, 256
    %v3261 = vpop.permute.xlu0 %3260
    %s3263 = sor.u32 256, 8
    %3264 = vbcast.lane.b32.xlu0 %v3258, %s3263
    %v3265 = vpop.permute.xlu0 %3264
    %v3270 = vadd.f32 %v3208, %v3250
    %v3271 = vadd.f32 %v3211, %v3254
    %v3272 = vadd.f32 %v3214, %v3261
    %v3273 = vadd.f32 %v3217, %v3265
    %3274 = vset.pattern.permute.xlu0 4
    %3275 = vperm.xlu0 %3274, %v2832
    %v3276 = vpop.permute.xlu0 %3275
    %vm3277 = vcmp.eq.s32.totalorder %v3276, 1
    %3282 = vset.pattern.permute.xlu0 0
    %3283 = vperm.xlu0 %3282, %v3270
    %v3284 = vpop.permute.xlu0 %3283
    %3285 = vset.pattern.permute.xlu0 0
    %3286 = vperm.xlu0 %3285, %v3271
    %v3287 = vpop.permute.xlu0 %3286
    %3288 = vset.pattern.permute.xlu0 0
    %3289 = vperm.xlu0 %3288, %v3272
    %v3290 = vpop.permute.xlu0 %3289
    %3291 = vset.pattern.permute.xlu0 0
    %3292 = vperm.xlu0 %3291, %v3273
    %v3293 = vpop.permute.xlu0 %3292
    %v3294 = vlaneseq
    %v3295 = vshrl.u32 %v3294, 7
    %v3296 = vsub.s32 %v86, %v3295
    %v3297 = vrot.slane %v3284, %v3296
    %v3298 = vlaneseq
    %v3299 = vshrl.u32 %v3298, 7
    %v3300 = vsub.s32 %v2857, %v3299
    %v3301 = vrot.slane %v3287, %v3300
    %v3302 = vsel %vm2862, %v3301, %v3297
    %v3303 = vlaneseq
    %v3304 = vshrl.u32 %v3303, 7
    %v3305 = vsub.s32 %v86, %v3304
    %v3306 = vrot.slane %v3290, %v3305
    %v3307 = vlaneseq
    %v3308 = vshrl.u32 %v3307, 7
    %v3309 = vsub.s32 %v2857, %v3308
    %v3310 = vrot.slane %v3293, %v3309
    %v3311 = vsel %vm2862, %v3310, %v3306
    %v3312 = vsel %vm2873, %v3311, %v3302
    %v3314 = vsel %vm3277, %v3312, %v3168
    %v3317 = vunpack.c.l.s4 1966171168
    %v3318 = vunpack.c.0.s8 %v3317
    %v3319 = vlaneseq
    %v3320 = vshrl.u32 %v3319, 7
    %v3321 = vsub.s32 %v3318, %v3320
    %v3322 = vrot.slane %v3314, %v3321
    %v3323 = vcombine.high %v3322, %v3322
    %v3325 = vunpack.c.l.s4 1966171168
    %v3326 = vunpack.c.0.s8 %v3325
    %v3327 = vlaneseq
    %v3328 = vshrl.u32 %v3327, 7
    %v3329 = vsub.s32 %v3326, %v3328
    %v3330 = vrot.slane %v3322, %v3329
    %v3332 = vunpack.c.l.s4 1966171168
    %v3333 = vunpack.c.0.s8 %v3332
    %v3334 = vlaneseq
    %v3335 = vshrl.u32 %v3334, 7
    %v3336 = vsub.s32 %v3333, %v3335
    %v3337 = vrot.slane %v3323, %v3336
    %v3338 = vlaneseq
    %v3339 = vshrl.u32 %v3338, 7
    %v3340 = vsub.s32 0, %v3339
    %v3341 = vrot.slane %v3330, %v3340
    %v3342 = vlaneseq
    %v3343 = vshrl.u32 %v3342, 7
    %v3344 = vsub.s32 0, %v3343
    %v3345 = vrot.slane %v3337, %v3344
    %v3348 = vadd.f32 %v3341, %v2709
    %v3349 = vadd.f32 %v3341, %v2710
    %v3350 = vadd.f32 %v3345, %v2709
    %v3351 = vadd.f32 %v3345, %v2710
    %v3352 = vsel %vm2762, %v3348, -inf
    %3353 = vmax.xlane.f32.xlu0 %v3352
    %v3354 = vpop.xlane.xlu0 %3353
    %v3355 = vsel %vm2766, %v3349, -inf
    %3356 = vmax.xlane.f32.xlu0 %v3355
    %v3357 = vpop.xlane.xlu0 %3356
    %v3358 = vsel %vm2762, %v3350, -inf
    %3359 = vmax.xlane.f32.xlu0 %v3358
    %v3360 = vpop.xlane.xlu0 %3359
    %v3361 = vsel %vm2766, %v3351, -inf
    %3362 = vmax.xlane.f32.xlu0 %v3361
    %v3363 = vpop.xlane.xlu0 %3362
    %vm3364 = vcmp.eq.f32.partialorder %v3348, %v3354
    %vm3365 = vcmp.eq.f32.partialorder %v3349, %v3357
    %vm3366 = vcmp.eq.f32.partialorder %v3350, %v3360
    %vm3367 = vcmp.eq.f32.partialorder %v3351, %v3363
    %v3368 = vsel %vm3364, %v2711, 15.0
    %v3369 = vsel %vm3365, %v2711, 15.0
    %v3370 = vsel %vm3366, %v2711, 15.0
    %v3371 = vsel %vm3367, %v2711, 15.0
    %v3372 = vsel %vm2762, %v3368, inf
    %3373 = vmin.xlane.f32.xlu0 %v3372
    %v3374 = vpop.xlane.xlu0 %3373
    %v3375 = vsel %vm2766, %v3369, inf
    %3376 = vmin.xlane.f32.xlu0 %v3375
    %v3377 = vpop.xlane.xlu0 %3376
    %v3378 = vsel %vm2762, %v3370, inf
    %3379 = vmin.xlane.f32.xlu0 %v3378
    %v3380 = vpop.xlane.xlu0 %3379
    %v3381 = vsel %vm2766, %v3371, inf
    %3382 = vmin.xlane.f32.xlu0 %v3381
    %v3383 = vpop.xlane.xlu0 %3382
    %v3384 = vrot.slane %v2701, 5
    %v3386 = vrot.slane %v2706, 4
    %v3388 = vsel %vm2716, %v3384, %v3386
    %v3390 = vlaneseq
    %v3391 = vshrl.u32 %v3390, 7
    %v3392 = vsub.s32 0, %v3391
    %v3393 = vrot.slane %v3388, %v3392
    %3395 = vbcast.lane.b32.xlu0 %v3393, 256
    %v3396 = vpop.permute.xlu0 %3395
    %s3398 = sor.u32 256, 8
    %3399 = vbcast.lane.b32.xlu0 %v3393, %s3398
    %v3400 = vpop.permute.xlu0 %3399
    %v3401 = vlaneseq
    %v3402 = vshrl.u32 %v3401, 7
    %v3403 = vsub.s32 1, %v3402
    %v3404 = vrot.slane %v3388, %v3403
    %3406 = vbcast.lane.b32.xlu0 %v3404, 256
    %v3407 = vpop.permute.xlu0 %3406
    %s3409 = sor.u32 256, 8
    %3410 = vbcast.lane.b32.xlu0 %v3404, %s3409
    %v3411 = vpop.permute.xlu0 %3410
    %v3416 = vadd.f32 %v3354, %v3396
    %v3417 = vadd.f32 %v3357, %v3400
    %v3418 = vadd.f32 %v3360, %v3407
    %v3419 = vadd.f32 %v3363, %v3411
    %3420 = vset.pattern.permute.xlu0 5
    %3421 = vperm.xlu0 %3420, %v2832
    %v3422 = vpop.permute.xlu0 %3421
    %vm3423 = vcmp.eq.s32.totalorder %v3422, 1
    %3428 = vset.pattern.permute.xlu0 0
    %3429 = vperm.xlu0 %3428, %v3416
    %v3430 = vpop.permute.xlu0 %3429
    %3431 = vset.pattern.permute.xlu0 0
    %3432 = vperm.xlu0 %3431, %v3417
    %v3433 = vpop.permute.xlu0 %3432
    %3434 = vset.pattern.permute.xlu0 0
    %3435 = vperm.xlu0 %3434, %v3418
    %v3436 = vpop.permute.xlu0 %3435
    %3437 = vset.pattern.permute.xlu0 0
    %3438 = vperm.xlu0 %3437, %v3419
    %v3439 = vpop.permute.xlu0 %3438
    %v3440 = vlaneseq
    %v3441 = vshrl.u32 %v3440, 7
    %v3442 = vsub.s32 %v86, %v3441
    %v3443 = vrot.slane %v3430, %v3442
    %v3444 = vlaneseq
    %v3445 = vshrl.u32 %v3444, 7
    %v3446 = vsub.s32 %v2857, %v3445
    %v3447 = vrot.slane %v3433, %v3446
    %v3448 = vsel %vm2862, %v3447, %v3443
    %v3449 = vlaneseq
    %v3450 = vshrl.u32 %v3449, 7
    %v3451 = vsub.s32 %v86, %v3450
    %v3452 = vrot.slane %v3436, %v3451
    %v3453 = vlaneseq
    %v3454 = vshrl.u32 %v3453, 7
    %v3455 = vsub.s32 %v2857, %v3454
    %v3456 = vrot.slane %v3439, %v3455
    %v3457 = vsel %vm2862, %v3456, %v3452
    %v3458 = vsel %vm2873, %v3457, %v3448
    %v3460 = vsel %vm3423, %v3458, %v3314
    %v3463 = vunpack.c.l.s4 1966171168
    %v3464 = vunpack.c.0.s8 %v3463
    %v3465 = vlaneseq
    %v3466 = vshrl.u32 %v3465, 7
    %v3467 = vsub.s32 %v3464, %v3466
    %v3468 = vrot.slane %v3460, %v3467
    %v3469 = vcombine.high %v3468, %v3468
    %v3471 = vunpack.c.l.s4 1966171168
    %v3472 = vunpack.c.0.s8 %v3471
    %v3473 = vlaneseq
    %v3474 = vshrl.u32 %v3473, 7
    %v3475 = vsub.s32 %v3472, %v3474
    %v3476 = vrot.slane %v3468, %v3475
    %v3478 = vunpack.c.l.s4 1966171168
    %v3479 = vunpack.c.0.s8 %v3478
    %v3480 = vlaneseq
    %v3481 = vshrl.u32 %v3480, 7
    %v3482 = vsub.s32 %v3479, %v3481
    %v3483 = vrot.slane %v3469, %v3482
    %v3484 = vlaneseq
    %v3485 = vshrl.u32 %v3484, 7
    %v3486 = vsub.s32 0, %v3485
    %v3487 = vrot.slane %v3476, %v3486
    %v3488 = vlaneseq
    %v3489 = vshrl.u32 %v3488, 7
    %v3490 = vsub.s32 0, %v3489
    %v3491 = vrot.slane %v3483, %v3490
    %v3494 = vadd.f32 %v3487, %v2709
    %v3495 = vadd.f32 %v3487, %v2710
    %v3496 = vadd.f32 %v3491, %v2709
    %v3497 = vadd.f32 %v3491, %v2710
    %v3498 = vsel %vm2762, %v3494, -inf
    %3499 = vmax.xlane.f32.xlu0 %v3498
    %v3500 = vpop.xlane.xlu0 %3499
    %v3501 = vsel %vm2766, %v3495, -inf
    %3502 = vmax.xlane.f32.xlu0 %v3501
    %v3503 = vpop.xlane.xlu0 %3502
    %v3504 = vsel %vm2762, %v3496, -inf
    %3505 = vmax.xlane.f32.xlu0 %v3504
    %v3506 = vpop.xlane.xlu0 %3505
    %v3507 = vsel %vm2766, %v3497, -inf
    %3508 = vmax.xlane.f32.xlu0 %v3507
    %v3509 = vpop.xlane.xlu0 %3508
    %vm3510 = vcmp.eq.f32.partialorder %v3494, %v3500
    %vm3511 = vcmp.eq.f32.partialorder %v3495, %v3503
    %vm3512 = vcmp.eq.f32.partialorder %v3496, %v3506
    %vm3513 = vcmp.eq.f32.partialorder %v3497, %v3509
    %v3514 = vsel %vm3510, %v2711, 15.0
    %v3515 = vsel %vm3511, %v2711, 15.0
    %v3516 = vsel %vm3512, %v2711, 15.0
    %v3517 = vsel %vm3513, %v2711, 15.0
    %v3518 = vsel %vm2762, %v3514, inf
    %3519 = vmin.xlane.f32.xlu0 %v3518
    %v3520 = vpop.xlane.xlu0 %3519
    %v3521 = vsel %vm2766, %v3515, inf
    %3522 = vmin.xlane.f32.xlu0 %v3521
    %v3523 = vpop.xlane.xlu0 %3522
    %v3524 = vsel %vm2762, %v3516, inf
    %3525 = vmin.xlane.f32.xlu0 %v3524
    %v3526 = vpop.xlane.xlu0 %3525
    %v3527 = vsel %vm2766, %v3517, inf
    %3528 = vmin.xlane.f32.xlu0 %v3527
    %v3529 = vpop.xlane.xlu0 %3528
    %v3530 = vrot.slane %v2701, 6
    %v3532 = vrot.slane %v2706, 5
    %v3534 = vsel %vm2716, %v3530, %v3532
    %v3536 = vlaneseq
    %v3537 = vshrl.u32 %v3536, 7
    %v3538 = vsub.s32 0, %v3537
    %v3539 = vrot.slane %v3534, %v3538
    %3541 = vbcast.lane.b32.xlu0 %v3539, 256
    %v3542 = vpop.permute.xlu0 %3541
    %s3544 = sor.u32 256, 8
    %3545 = vbcast.lane.b32.xlu0 %v3539, %s3544
    %v3546 = vpop.permute.xlu0 %3545
    %v3547 = vlaneseq
    %v3548 = vshrl.u32 %v3547, 7
    %v3549 = vsub.s32 1, %v3548
    %v3550 = vrot.slane %v3534, %v3549
    %3552 = vbcast.lane.b32.xlu0 %v3550, 256
    %v3553 = vpop.permute.xlu0 %3552
    %s3555 = sor.u32 256, 8
    %3556 = vbcast.lane.b32.xlu0 %v3550, %s3555
    %v3557 = vpop.permute.xlu0 %3556
    %v3562 = vadd.f32 %v3500, %v3542
    %v3563 = vadd.f32 %v3503, %v3546
    %v3564 = vadd.f32 %v3506, %v3553
    %v3565 = vadd.f32 %v3509, %v3557
    %3566 = vset.pattern.permute.xlu0 6
    %3567 = vperm.xlu0 %3566, %v2832
    %v3568 = vpop.permute.xlu0 %3567
    %vm3569 = vcmp.eq.s32.totalorder %v3568, 1
    %3574 = vset.pattern.permute.xlu0 0
    %3575 = vperm.xlu0 %3574, %v3562
    %v3576 = vpop.permute.xlu0 %3575
    %3577 = vset.pattern.permute.xlu0 0
    %3578 = vperm.xlu0 %3577, %v3563
    %v3579 = vpop.permute.xlu0 %3578
    %3580 = vset.pattern.permute.xlu0 0
    %3581 = vperm.xlu0 %3580, %v3564
    %v3582 = vpop.permute.xlu0 %3581
    %3583 = vset.pattern.permute.xlu0 0
    %3584 = vperm.xlu0 %3583, %v3565
    %v3585 = vpop.permute.xlu0 %3584
    %v3586 = vlaneseq
    %v3587 = vshrl.u32 %v3586, 7
    %v3588 = vsub.s32 %v86, %v3587
    %v3589 = vrot.slane %v3576, %v3588
    %v3590 = vlaneseq
    %v3591 = vshrl.u32 %v3590, 7
    %v3592 = vsub.s32 %v2857, %v3591
    %v3593 = vrot.slane %v3579, %v3592
    %v3594 = vsel %vm2862, %v3593, %v3589
    %v3595 = vlaneseq
    %v3596 = vshrl.u32 %v3595, 7
    %v3597 = vsub.s32 %v86, %v3596
    %v3598 = vrot.slane %v3582, %v3597
    %v3599 = vlaneseq
    %v3600 = vshrl.u32 %v3599, 7
    %v3601 = vsub.s32 %v2857, %v3600
    %v3602 = vrot.slane %v3585, %v3601
    %v3603 = vsel %vm2862, %v3602, %v3598
    %v3604 = vsel %vm2873, %v3603, %v3594
    %v3606 = vsel %vm3569, %v3604, %v3460
    %v3609 = vunpack.c.l.s4 1966171168
    %v3610 = vunpack.c.0.s8 %v3609
    %v3611 = vlaneseq
    %v3612 = vshrl.u32 %v3611, 7
    %v3613 = vsub.s32 %v3610, %v3612
    %v3614 = vrot.slane %v3606, %v3613
    %v3615 = vcombine.high %v3614, %v3614
    %v3617 = vunpack.c.l.s4 1966171168
    %v3618 = vunpack.c.0.s8 %v3617
    %v3619 = vlaneseq
    %v3620 = vshrl.u32 %v3619, 7
    %v3621 = vsub.s32 %v3618, %v3620
    %v3622 = vrot.slane %v3614, %v3621
    %v3624 = vunpack.c.l.s4 1966171168
    %v3625 = vunpack.c.0.s8 %v3624
    %v3626 = vlaneseq
    %v3627 = vshrl.u32 %v3626, 7
    %v3628 = vsub.s32 %v3625, %v3627
    %v3629 = vrot.slane %v3615, %v3628
    %v3630 = vlaneseq
    %v3631 = vshrl.u32 %v3630, 7
    %v3632 = vsub.s32 0, %v3631
    %v3633 = vrot.slane %v3622, %v3632
    %v3634 = vlaneseq
    %v3635 = vshrl.u32 %v3634, 7
    %v3636 = vsub.s32 0, %v3635
    %v3637 = vrot.slane %v3629, %v3636
    %v3640 = vadd.f32 %v3633, %v2709
    %v3641 = vadd.f32 %v3633, %v2710
    %v3642 = vadd.f32 %v3637, %v2709
    %v3643 = vadd.f32 %v3637, %v2710
    %v3644 = vsel %vm2762, %v3640, -inf
    %3645 = vmax.xlane.f32.xlu0 %v3644
    %v3646 = vpop.xlane.xlu0 %3645
    %v3647 = vsel %vm2766, %v3641, -inf
    %3648 = vmax.xlane.f32.xlu0 %v3647
    %v3649 = vpop.xlane.xlu0 %3648
    %v3650 = vsel %vm2762, %v3642, -inf
    %3651 = vmax.xlane.f32.xlu0 %v3650
    %v3652 = vpop.xlane.xlu0 %3651
    %v3653 = vsel %vm2766, %v3643, -inf
    %3654 = vmax.xlane.f32.xlu0 %v3653
    %v3655 = vpop.xlane.xlu0 %3654
    %vm3656 = vcmp.eq.f32.partialorder %v3640, %v3646
    %vm3657 = vcmp.eq.f32.partialorder %v3641, %v3649
    %vm3658 = vcmp.eq.f32.partialorder %v3642, %v3652
    %vm3659 = vcmp.eq.f32.partialorder %v3643, %v3655
    %v3660 = vsel %vm3656, %v2711, 15.0
    %v3661 = vsel %vm3657, %v2711, 15.0
    %v3662 = vsel %vm3658, %v2711, 15.0
    %v3663 = vsel %vm3659, %v2711, 15.0
    %v3664 = vsel %vm2762, %v3660, inf
    %3665 = vmin.xlane.f32.xlu0 %v3664
    %v3666 = vpop.xlane.xlu0 %3665
    %v3667 = vsel %vm2766, %v3661, inf
    %3668 = vmin.xlane.f32.xlu0 %v3667
    %v3669 = vpop.xlane.xlu0 %3668
    %v3670 = vsel %vm2762, %v3662, inf
    %3671 = vmin.xlane.f32.xlu0 %v3670
    %v3672 = vpop.xlane.xlu0 %3671
    %v3673 = vsel %vm2766, %v3663, inf
    %3674 = vmin.xlane.f32.xlu0 %v3673
    %v3675 = vpop.xlane.xlu0 %3674
    %v3676 = vrot.slane %v2701, 7
    %v3678 = vrot.slane %v2706, 6
    %v3680 = vsel %vm2716, %v3676, %v3678
    %v3682 = vlaneseq
    %v3683 = vshrl.u32 %v3682, 7
    %v3684 = vsub.s32 0, %v3683
    %v3685 = vrot.slane %v3680, %v3684
    %3687 = vbcast.lane.b32.xlu0 %v3685, 256
    %v3688 = vpop.permute.xlu0 %3687
    %s3690 = sor.u32 256, 8
    %3691 = vbcast.lane.b32.xlu0 %v3685, %s3690
    %v3692 = vpop.permute.xlu0 %3691
    %v3693 = vlaneseq
    %v3694 = vshrl.u32 %v3693, 7
    %v3695 = vsub.s32 1, %v3694
    %v3696 = vrot.slane %v3680, %v3695
    %3698 = vbcast.lane.b32.xlu0 %v3696, 256
    %v3699 = vpop.permute.xlu0 %3698
    %s3701 = sor.u32 256, 8
    %3702 = vbcast.lane.b32.xlu0 %v3696, %s3701
    %v3703 = vpop.permute.xlu0 %3702
    %v3708 = vadd.f32 %v3646, %v3688
    %v3709 = vadd.f32 %v3649, %v3692
    %v3710 = vadd.f32 %v3652, %v3699
    %v3711 = vadd.f32 %v3655, %v3703
    %3712 = vset.pattern.permute.xlu0 7
    %3713 = vperm.xlu0 %3712, %v2832
    %v3714 = vpop.permute.xlu0 %3713
    %vm3715 = vcmp.eq.s32.totalorder %v3714, 1
    %3720 = vset.pattern.permute.xlu0 0
    %3721 = vperm.xlu0 %3720, %v3708
    %v3722 = vpop.permute.xlu0 %3721
    %3723 = vset.pattern.permute.xlu0 0
    %3724 = vperm.xlu0 %3723, %v3709
    %v3725 = vpop.permute.xlu0 %3724
    %3726 = vset.pattern.permute.xlu0 0
    %3727 = vperm.xlu0 %3726, %v3710
    %v3728 = vpop.permute.xlu0 %3727
    %3729 = vset.pattern.permute.xlu0 0
    %3730 = vperm.xlu0 %3729, %v3711
    %v3731 = vpop.permute.xlu0 %3730
    %v3732 = vlaneseq
    %v3733 = vshrl.u32 %v3732, 7
    %v3734 = vsub.s32 %v86, %v3733
    %v3735 = vrot.slane %v3722, %v3734
    %v3736 = vlaneseq
    %v3737 = vshrl.u32 %v3736, 7
    %v3738 = vsub.s32 %v2857, %v3737
    %v3739 = vrot.slane %v3725, %v3738
    %v3740 = vsel %vm2862, %v3739, %v3735
    %v3741 = vlaneseq
    %v3742 = vshrl.u32 %v3741, 7
    %v3743 = vsub.s32 %v86, %v3742
    %v3744 = vrot.slane %v3728, %v3743
    %v3745 = vlaneseq
    %v3746 = vshrl.u32 %v3745, 7
    %v3747 = vsub.s32 %v2857, %v3746
    %v3748 = vrot.slane %v3731, %v3747
    %v3749 = vsel %vm2862, %v3748, %v3744
    %v3750 = vsel %vm2873, %v3749, %v3740
    %v3752 = vsel %vm3715, %v3750, %v3606
    %v3753 = vld [vmem:[%s23] sm:$0x1]
    %v3755 = vlaneseq
    %v3756 = vshrl.u32 %v3755, 7
    %v3757 = vsub.s32 0, %v3756
    %v3758 = vrot.slane %v3753, %v3757
    %v3760 = vadd.f32 %v3752, %v3758
    %vm3761 = vcmask 115712
    %v3762 = vsel %vm3761, %v3760, -inf
    %3763 = vmax.xlane.f32.xlu0 %v3762
    %v3764 = vpop.xlane.xlu0 %3763
    %vm3765 = vcmp.eq.f32.partialorder %v3760, %v3764
    %v3766 = vsel %vm3765, %v2711, 15.0
    %v3767 = vsel %vm3761, %v3766, inf
    %3768 = vmin.xlane.f32.xlu0 %v3767
    %v3769 = vpop.xlane.xlu0 %3768
    %v3770 = vsel %vm2796, %v3769, 0.0
    %vm3771 = vcmp.eq.f32.partialorder %v2711, %v3769
    %v3776 = vlaneseq
    %v3777 = vshrl.u32 %v3776, 7
    %v3778 = vsub.s32 %v86, %v3777
    %v3779 = vrot.slane %v3666, %v3778
    %v3780 = vlaneseq
    %v3781 = vshrl.u32 %v3780, 7
    %v3782 = vsub.s32 %v2857, %v3781
    %v3783 = vrot.slane %v3669, %v3782
    %v3784 = vsel %vm2862, %v3783, %v3779
    %v3785 = vlaneseq
    %v3786 = vshrl.u32 %v3785, 7
    %v3787 = vsub.s32 %v86, %v3786
    %v3788 = vrot.slane %v3672, %v3787
    %v3789 = vlaneseq
    %v3790 = vshrl.u32 %v3789, 7
    %v3791 = vsub.s32 %v2857, %v3790
    %v3792 = vrot.slane %v3675, %v3791
    %v3793 = vsel %vm2862, %v3792, %v3788
    %v3794 = vsel %vm2873, %v3793, %v3784
    %v3796 = vsel %vm3771, %v3794, 0.0
    %v3797 = vsel %vm3761, %v3796, 0.0
    %3798 = vadd.xlane.f32.xlu0 %v3797
    %v3799 = vpop.xlane.xlu0 %3798
    %v3800 = vsel %vm2796, %v3799, %v3769
    %3802 = vrot.lane.b32.xlu0 %v3800, 127
    %v3803 = vpop.permute.xlu0 %3802
    %v3805 = vsel %vm2796, %v3803, 0.0
    %3806 = vset.pattern.permute.xlu0 7
    %3807 = vperm.xlu0 %3806, %v3800
    %v3808 = vpop.permute.xlu0 %3807
    %vm3810 = vcmp.eq.f32.partialorder %v2711, %v3808
    %v3815 = vlaneseq
    %v3816 = vshrl.u32 %v3815, 7
    %v3817 = vsub.s32 %v86, %v3816
    %v3818 = vrot.slane %v3520, %v3817
    %v3819 = vlaneseq
    %v3820 = vshrl.u32 %v3819, 7
    %v3821 = vsub.s32 %v2857, %v3820
    %v3822 = vrot.slane %v3523, %v3821
    %v3823 = vsel %vm2862, %v3822, %v3818
    %v3824 = vlaneseq
    %v3825 = vshrl.u32 %v3824, 7
    %v3826 = vsub.s32 %v86, %v3825
    %v3827 = vrot.slane %v3526, %v3826
    %v3828 = vlaneseq
    %v3829 = vshrl.u32 %v3828, 7
    %v3830 = vsub.s32 %v2857, %v3829
    %v3831 = vrot.slane %v3529, %v3830
    %v3832 = vsel %vm2862, %v3831, %v3827
    %v3833 = vsel %vm2873, %v3832, %v3823
    %v3835 = vsel %vm3810, %v3833, 0.0
    %v3836 = vsel %vm3761, %v3835, 0.0
    %3837 = vadd.xlane.f32.xlu0 %v3836
    %v3838 = vpop.xlane.xlu0 %3837
    %v3839 = vsel %vm2796, %v3838, %v3803
    %3841 = vrot.lane.b32.xlu0 %v3839, 127
    %v3842 = vpop.permute.xlu0 %3841
    %v3844 = vsel %vm2796, %v3842, 0.0
    %3845 = vset.pattern.permute.xlu0 6
    %3846 = vperm.xlu0 %3845, %v3839
    %v3847 = vpop.permute.xlu0 %3846
    %vm3849 = vcmp.eq.f32.partialorder %v2711, %v3847
    %v3854 = vlaneseq
    %v3855 = vshrl.u32 %v3854, 7
    %v3856 = vsub.s32 %v86, %v3855
    %v3857 = vrot.slane %v3374, %v3856
    %v3858 = vlaneseq
    %v3859 = vshrl.u32 %v3858, 7
    %v3860 = vsub.s32 %v2857, %v3859
    %v3861 = vrot.slane %v3377, %v3860
    %v3862 = vsel %vm2862, %v3861, %v3857
    %v3863 = vlaneseq
    %v3864 = vshrl.u32 %v3863, 7
    %v3865 = vsub.s32 %v86, %v3864
    %v3866 = vrot.slane %v3380, %v3865
    %v3867 = vlaneseq
    %v3868 = vshrl.u32 %v3867, 7
    %v3869 = vsub.s32 %v2857, %v3868
    %v3870 = vrot.slane %v3383, %v3869
    %v3871 = vsel %vm2862, %v3870, %v3866
    %v3872 = vsel %vm2873, %v3871, %v3862
    %v3874 = vsel %vm3849, %v3872, 0.0
    %v3875 = vsel %vm3761, %v3874, 0.0
    %3876 = vadd.xlane.f32.xlu0 %v3875
    %v3877 = vpop.xlane.xlu0 %3876
    %v3878 = vsel %vm2796, %v3877, %v3842
    %3880 = vrot.lane.b32.xlu0 %v3878, 127
    %v3881 = vpop.permute.xlu0 %3880
    %v3883 = vsel %vm2796, %v3881, 0.0
    %3884 = vset.pattern.permute.xlu0 5
    %3885 = vperm.xlu0 %3884, %v3878
    %v3886 = vpop.permute.xlu0 %3885
    %vm3888 = vcmp.eq.f32.partialorder %v2711, %v3886
    %v3893 = vlaneseq
    %v3894 = vshrl.u32 %v3893, 7
    %v3895 = vsub.s32 %v86, %v3894
    %v3896 = vrot.slane %v3228, %v3895
    %v3897 = vlaneseq
    %v3898 = vshrl.u32 %v3897, 7
    %v3899 = vsub.s32 %v2857, %v3898
    %v3900 = vrot.slane %v3231, %v3899
    %v3901 = vsel %vm2862, %v3900, %v3896
    %v3902 = vlaneseq
    %v3903 = vshrl.u32 %v3902, 7
    %v3904 = vsub.s32 %v86, %v3903
    %v3905 = vrot.slane %v3234, %v3904
    %v3906 = vlaneseq
    %v3907 = vshrl.u32 %v3906, 7
    %v3908 = vsub.s32 %v2857, %v3907
    %v3909 = vrot.slane %v3237, %v3908
    %v3910 = vsel %vm2862, %v3909, %v3905
    %v3911 = vsel %vm2873, %v3910, %v3901
    %v3913 = vsel %vm3888, %v3911, 0.0
    %v3914 = vsel %vm3761, %v3913, 0.0
    %3915 = vadd.xlane.f32.xlu0 %v3914
    %v3916 = vpop.xlane.xlu0 %3915
    %v3917 = vsel %vm2796, %v3916, %v3881
    %3919 = vrot.lane.b32.xlu0 %v3917, 127
    %v3920 = vpop.permute.xlu0 %3919
    %v3922 = vsel %vm2796, %v3920, 0.0
    %3923 = vset.pattern.permute.xlu0 4
    %3924 = vperm.xlu0 %3923, %v3917
    %v3925 = vpop.permute.xlu0 %3924
    %vm3927 = vcmp.eq.f32.partialorder %v2711, %v3925
    %v3932 = vlaneseq
    %v3933 = vshrl.u32 %v3932, 7
    %v3934 = vsub.s32 %v86, %v3933
    %v3935 = vrot.slane %v3082, %v3934
    %v3936 = vlaneseq
    %v3937 = vshrl.u32 %v3936, 7
    %v3938 = vsub.s32 %v2857, %v3937
    %v3939 = vrot.slane %v3085, %v3938
    %v3940 = vsel %vm2862, %v3939, %v3935
    %v3941 = vlaneseq
    %v3942 = vshrl.u32 %v3941, 7
    %v3943 = vsub.s32 %v86, %v3942
    %v3944 = vrot.slane %v3088, %v3943
    %v3945 = vlaneseq
    %v3946 = vshrl.u32 %v3945, 7
    %v3947 = vsub.s32 %v2857, %v3946
    %v3948 = vrot.slane %v3091, %v3947
    %v3949 = vsel %vm2862, %v3948, %v3944
    %v3950 = vsel %vm2873, %v3949, %v3940
    %v3952 = vsel %vm3927, %v3950, 0.0
    %v3953 = vsel %vm3761, %v3952, 0.0
    %3954 = vadd.xlane.f32.xlu0 %v3953
    %v3955 = vpop.xlane.xlu0 %3954
    %v3956 = vsel %vm2796, %v3955, %v3920
    %3958 = vrot.lane.b32.xlu0 %v3956, 127
    %v3959 = vpop.permute.xlu0 %3958
    %v3961 = vsel %vm2796, %v3959, 0.0
    %3962 = vset.pattern.permute.xlu0 3
    %3963 = vperm.xlu0 %3962, %v3956
    %v3964 = vpop.permute.xlu0 %3963
    %vm3966 = vcmp.eq.f32.partialorder %v2711, %v3964
    %v3971 = vlaneseq
    %v3972 = vshrl.u32 %v3971, 7
    %v3973 = vsub.s32 %v86, %v3972
    %v3974 = vrot.slane %v2936, %v3973
    %v3975 = vlaneseq
    %v3976 = vshrl.u32 %v3975, 7
    %v3977 = vsub.s32 %v2857, %v3976
    %v3978 = vrot.slane %v2939, %v3977
    %v3979 = vsel %vm2862, %v3978, %v3974
    %v3980 = vlaneseq
    %v3981 = vshrl.u32 %v3980, 7
    %v3982 = vsub.s32 %v86, %v3981
    %v3983 = vrot.slane %v2942, %v3982
    %v3984 = vlaneseq
    %v3985 = vshrl.u32 %v3984, 7
    %v3986 = vsub.s32 %v2857, %v3985
    %v3987 = vrot.slane %v2945, %v3986
    %v3988 = vsel %vm2862, %v3987, %v3983
    %v3989 = vsel %vm2873, %v3988, %v3979
    %v3991 = vsel %vm3966, %v3989, 0.0
    %v3992 = vsel %vm3761, %v3991, 0.0
    %3993 = vadd.xlane.f32.xlu0 %v3992
    %v3994 = vpop.xlane.xlu0 %3993
    %v3995 = vsel %vm2796, %v3994, %v3959
    %3997 = vrot.lane.b32.xlu0 %v3995, 127
    %v3998 = vpop.permute.xlu0 %3997
    %v4000 = vsel %vm2796, %v3998, 0.0
    %4001 = vset.pattern.permute.xlu0 2
    %4002 = vperm.xlu0 %4001, %v3995
    %v4003 = vpop.permute.xlu0 %4002
    %vm4005 = vcmp.eq.f32.partialorder %v2711, %v4003
    %v4010 = vlaneseq
    %v4011 = vshrl.u32 %v4010, 7
    %v4012 = vsub.s32 %v86, %v4011
    %v4013 = vrot.slane %v2786, %v4012
    %v4014 = vlaneseq
    %v4015 = vshrl.u32 %v4014, 7
    %v4016 = vsub.s32 %v2857, %v4015
    %v4017 = vrot.slane %v2789, %v4016
    %v4018 = vsel %vm2862, %v4017, %v4013
    %v4019 = vlaneseq
    %v4020 = vshrl.u32 %v4019, 7
    %v4021 = vsub.s32 %v86, %v4020
    %v4022 = vrot.slane %v2792, %v4021
    %v4023 = vlaneseq
    %v4024 = vshrl.u32 %v4023, 7
    %v4025 = vsub.s32 %v2857, %v4024
    %v4026 = vrot.slane %v2795, %v4025
    %v4027 = vsel %vm2862, %v4026, %v4022
    %v4028 = vsel %vm2873, %v4027, %v4018
    %v4030 = vsel %vm4005, %v4028, 0.0
    %v4031 = vsel %vm3761, %v4030, 0.0
    %4032 = vadd.xlane.f32.xlu0 %v4031
    %v4033 = vpop.xlane.xlu0 %4032
    %v4034 = vsel %vm2796, %v4033, %v3998
    %4036 = vrot.lane.b32.xlu0 %v4034, 127
    %v4037 = vpop.permute.xlu0 %4036
    %v4039 = vsel %vm2796, %v4037, 0.0
    %vm4040 = vcmask 7168
    %v4041 = vsel %vm4040, %v4039, %v4000
    %vm4042 = vcmask 15360
    %v4043 = vsel %vm4042, %v4041, %v3961
    %vm4044 = vcmask 23552
    %v4045 = vsel %vm4044, %v4043, %v3922
    %vm4046 = vcmask 31744
    %v4047 = vsel %vm4046, %v4045, %v3883
    %vm4048 = vcmask 39936
    %v4049 = vsel %vm4048, %v4047, %v3844
    %vm4050 = vcmask 48128
    %v4051 = vsel %vm4050, %v4049, %v3805
    %vm4052 = vcmask 56320
    %v4053 = vsel %vm4052, %v4051, %v3770
    %v4054 = vcvt.f32.s32.to.zero.pseudo %v4053
    %vm4055 = vcmask 58368
    %4056 = vst.msk [vmem:[#allocation2] sm:$0x3] %vm4055, %v4054
    // Predicated region
    $region102: #{bert_crf_forward.1} parent=1 // pred_check
      _
    $region103: #{bert_crf_forward.1} parent=1 // pred_check_branch
      %4058 = sbr.rel (0) target = $region105
    $region104: #{bert_crf_forward.1} parent=1 // pred_region
      %s4060 = ssub.s32 32, 32
      %4061 = vsyncadd [#allocation3], %s4060
      %s4063 = sshll.u32 [#allocation2], 4
      %s4064 = int_to_ptr.vmem [resolvable:$true] %s4063
      %4066 = dma.vmem_to_hbm [thread:$0]  %s4064, 32, %s25, [#allocation3]
    $region105: #{bert_crf_forward.1} parent=1 // pred_fallthru
      _
    // Predicated region
    $region106: #{bert_crf_forward.1} parent=1 // pred_check
      _
    $region107: #{bert_crf_forward.1} parent=1 // pred_check_branch
      %4068 = sbr.rel (0) target = $region109
    $region108: #{bert_crf_forward.1} parent=1 // pred_region
      %4069 = dma.done [#allocation3], 32
    $region109: #{bert_crf_forward.1} parent=1 // pred_fallthru
      _
    %4070 = vsyncpa [#allocation3], 1

</llo_original>
